<compile_context>
chip_gen: v7x
topology: tpu7x:2x2x1
jax: 0.10.0
libtpu: 0.0.40
codegen_flags: <defaults>
</compile_context>

<pallas_src>
import functools

import jax
import jax.numpy as jnp
from jax import lax
from jax.experimental import pallas as pl
from jax.experimental.pallas import tpu as pltpu

EPS = 1e-5
LANE = 128
VMEM_LIMIT = 48 * 1024 * 1024  # > default 32 MiB, still inside v7x's 64 MiB.


def _pad128(c):
    return ((c + LANE - 1) // LANE) * LANE


def _pick_tile_m(m):
    """Row tile for conv1: largest divisor (mult of 8, <=1024); else pad M up."""
    for t in (1024, 512, 256, 128, 64, 32, 16, 8):
        if m % t == 0:
            return t, m
    t = min(512, ((m + 7) // 8) * 8)
    m_pad = ((m + t - 1) // t) * t
    return t, m_pad


def _row_tile(hw):
    """Row tile for the conv3/tail stages (divisor of HW, multiple of 8)."""
    for t in (1024, 512, 448, 384, 256, 224, 128, 112, 64, 56, 32, 16, 8):
        if hw % t == 0:
            return t
    return hw  # full-extent block; satisfies the (8,128) rule as "full dim".


def _cparams(semantics):
    return pltpu.CompilerParams(
        dimension_semantics=semantics,
        vmem_limit_bytes=VMEM_LIMIT,
    )


def _fold_bn(sums, m, gamma, beta):
    """Fold training-mode BatchNorm (batch stats over M rows) into scale/bias."""
    mu = sums[0:1, :] / m
    var = jnp.maximum(sums[1:2, :] / m - mu * mu, 0.0)
    scale = gamma * lax.rsqrt(var + EPS)
    bias = beta - mu * scale
    return scale, bias  # each (1, C)


# ----------------------------- Pallas kernels ------------------------------
def _conv1_kernel(x_ref, w1_ref, y1_ref, st_ref):
    """conv1 (1x1) on an M-row tile + per-channel partial batch statistics."""
    y = jnp.dot(x_ref[...], w1_ref[...], preferred_element_type=jnp.float32)
    y1_ref[...] = y.astype(jnp.bfloat16)
    st_ref[0:1, :] = jnp.sum(y, axis=0, keepdims=True)
    st_ref[1:2, :] = jnp.sum(y * y, axis=0, keepdims=True)


def _conv2_kernel(y1_ref, s1_ref, b1_ref, w2_ref, y2_ref, st_ref,
                  halo_ref, acc_ref, *, H, W):
    """bn1(folded)+relu1 -> 3x3 conv for one sample.

    The halo (conv2's padding=1 over the relu1 output) lives in a VMEM scratch:
    zero the buffer, store the interior, then do 3 K-merged (K=3*C) matmuls of
    row-shifted slices, accumulating into a VMEM accumulator.
    """
    Cw = y1_ref.shape[-1]

    # Zero every step (megacore-safe: each core has its own scratch copy).
    halo_ref[...] = jnp.zeros_like(halo_ref)

    s1 = s1_ref[...].reshape(1, 1, Cw)
    b1 = b1_ref[...].reshape(1, 1, Cw)
    a = jnp.maximum(y1_ref[...].astype(jnp.float32) * s1 + b1, 0.0)
    halo_ref[1:H + 1, 1:W + 1, :] = a

    acc_ref[...] = jnp.zeros_like(acc_ref)
    for ky in range(3):
        rows = halo_ref[ky:ky + H, :, :]                  # (H, W+2, Cw) f32
        patch = jnp.concatenate(
            [rows[:, 0:W, :], rows[:, 1:W + 1, :], rows[:, 2:W + 2, :]],
            axis=-1).astype(jnp.bfloat16).reshape(H * W, 3 * Cw)
        acc_ref[...] += jnp.dot(patch, w2_ref[ky],
                                preferred_element_type=jnp.float32)

    acc = acc_ref[...]
    y2_ref[...] = acc.astype(jnp.bfloat16)
    st_ref[0:1, :] = jnp.sum(acc, axis=0, keepdims=True)
    st_ref[1:2, :] = jnp.sum(acc * acc, axis=0, keepdims=True)


def _conv3_stats_kernel(y2_ref, s2_ref, b2_ref, w3_ref, st_ref, pool_ref):
    """bn2(folded)+relu2 -> conv3 on a row tile; accumulate bn3 stats + SE pool."""
    a2 = jnp.maximum(y2_ref[...].astype(jnp.float32) * s2_ref[...] + b2_ref[...],
                     0.0)
    y3 = jnp.dot(a2.astype(jnp.bfloat16), w3_ref[...],
                 preferred_element_type=jnp.float32)
    s = jnp.sum(y3, axis=0, keepdims=True)
    ss = jnp.sum(y3 * y3, axis=0, keepdims=True)

    @pl.when(pl.program_id(1) == 0)
    def _():
        st_ref[0:1, :] = s
        st_ref[1:2, :] = ss
        pool_ref[...] = s

    @pl.when(pl.program_id(1) != 0)
    def _():
        st_ref[0:1, :] += s
        st_ref[1:2, :] += ss
        pool_ref[...] += s


def _tail_kernel(y2_ref, x_ref, se_ref, s2_ref, b2_ref, w3_ref,
                 s3_ref, b3_ref, o_ref):
    """bn2+relu2 -> conv3 -> bn3 -> SE scale -> +identity -> relu3 (row tile)."""
    a2 = jnp.maximum(y2_ref[...].astype(jnp.float32) * s2_ref[...] + b2_ref[...],
                     0.0)
    y3 = jnp.dot(a2.astype(jnp.bfloat16), w3_ref[...],
                 preferred_element_type=jnp.float32)
    y3 = y3 * s3_ref[...] + b3_ref[...]
    o_ref[...] = jnp.maximum(y3 * se_ref[...] + x_ref[...].astype(jnp.float32),
                             0.0)


# ----------------------------- pallas_call glue -----------------------------
def _conv1(x_flat, w1, tm):
    M, Cip = x_flat.shape
    Cwp = w1.shape[1]
    g = M // tm
    y1, part = pl.pallas_call(
        _conv1_kernel,
        grid=(g,),
        in_specs=[pl.BlockSpec((tm, Cip), lambda i: (i, 0)),
                  pl.BlockSpec((Cip, Cwp), lambda i: (0, 0))],
        out_specs=(pl.BlockSpec((tm, Cwp), lambda i: (i, 0)),
                   pl.BlockSpec((None, 2, Cwp), lambda i: (i, 0, 0))),
        out_shape=(jax.ShapeDtypeStruct((M, Cwp), jnp.bfloat16),
                   jax.ShapeDtypeStruct((g, 2, Cwp), jnp.float32)),
        compiler_params=_cparams(("parallel",)),
    )(x_flat, w1)
    return y1, jnp.sum(part, axis=0)


def _conv2(y1, scale1, bias1, w2m, N, H, W):
    Cw = y1.shape[-1]
    HW = H * W
    kernel = functools.partial(_conv2_kernel, H=H, W=W)
    y2, part = pl.pallas_call(
        kernel,
        grid=(N,),
        in_specs=[pl.BlockSpec((None, H, W, Cw), lambda n: (n, 0, 0, 0)),
                  pl.BlockSpec((1, Cw), lambda n: (0, 0)),
                  pl.BlockSpec((1, Cw), lambda n: (0, 0)),
                  pl.BlockSpec((3, 3 * Cw, Cw), lambda n: (0, 0, 0))],
        out_specs=(pl.BlockSpec((None, HW, Cw), lambda n: (n, 0, 0)),
                   pl.BlockSpec((None, 2, Cw), lambda n: (n, 0, 0))),
        out_shape=(jax.ShapeDtypeStruct((N, HW, Cw), jnp.bfloat16),
                   jax.ShapeDtypeStruct((N, 2, Cw), jnp.float32)),
        scratch_shapes=[pltpu.VMEM((H + 2, W + 2, Cw), jnp.float32),
                        pltpu.VMEM((HW, Cw), jnp.float32)],
        compiler_params=_cparams(("parallel",)),
    )(y1, scale1, bias1, w2m)
    return y2, jnp.sum(part, axis=0)


def _conv3_stats(y2, scale2, bias2, w3, N, HW, TR):
    Cw = y2.shape[-1]
    Ce = w3.shape[1]
    nrt = HW // TR
    st, pool = pl.pallas_call(
        _conv3_stats_kernel,
        grid=(N, nrt),
        in_specs=[pl.BlockSpec((None, TR, Cw), lambda n, r: (n, r, 0)),
                  pl.BlockSpec((1, Cw), lambda n, r: (0, 0)),
                  pl.BlockSpec((1, Cw), lambda n, r: (0, 0)),
                  pl.BlockSpec((Cw, Ce), lambda n, r: (0, 0))],
        out_specs=(pl.BlockSpec((None, 2, Ce), lambda n, r: (n, 0, 0)),
                   pl.BlockSpec((None, 1, Ce), lambda n, r: (n, 0, 0))),
        out_shape=(jax.ShapeDtypeStruct((N, 2, Ce), jnp.float32),
                   jax.ShapeDtypeStruct((N, 1, Ce), jnp.float32)),
        compiler_params=_cparams(("parallel", "arbitrary")),
    )(y2, scale2, bias2, w3)
    return jnp.sum(st, axis=0), pool.reshape(N, Ce)


def _tail(y2, x_res, se, scale2, bias2, w3, scale3, bias3, N, HW, TR):
    Cw = y2.shape[-1]
    Ce = w3.shape[1]
    nrt = HW // TR
    return pl.pallas_call(
        _tail_kernel,
        grid=(N, nrt),
        in_specs=[pl.BlockSpec((None, TR, Cw), lambda n, r: (n, r, 0)),
                  pl.BlockSpec((None, TR, Ce), lambda n, r: (n, r, 0)),
                  pl.BlockSpec((None, 1, Ce), lambda n, r: (n, 0, 0)),
                  pl.BlockSpec((1, Cw), lambda n, r: (0, 0)),
                  pl.BlockSpec((1, Cw), lambda n, r: (0, 0)),
                  pl.BlockSpec((Cw, Ce), lambda n, r: (0, 0)),
                  pl.BlockSpec((1, Ce), lambda n, r: (0, 0)),
                  pl.BlockSpec((1, Ce), lambda n, r: (0, 0))],
        out_specs=pl.BlockSpec((None, TR, Ce), lambda n, r: (n, r, 0)),
        out_shape=jax.ShapeDtypeStruct((N, HW, Ce), jnp.float32),
        compiler_params=_cparams(("parallel", "parallel")),
    )(y2, x_res, se, scale2, bias2, w3, scale3, bias3)


# ------------------------------- forward -----------------------------------
def bottleneck_se_forward(x_nchw, params):
    N, Cin, H, W = x_nchw.shape
    width = params["w1"].shape[1]
    Cexp = params["w3"].shape[1]
    assert Cin == Cexp, "downsample is None => inplanes must equal planes * expansion"
    HW = H * W
    M = N * HW

    Cip, Cwp, Cep, Crp = (_pad128(Cin), _pad128(width), _pad128(Cexp),
                          _pad128(params["fc1"].shape[1]))
    bf16, f32 = jnp.bfloat16, jnp.float32

    def padw(w, r, c):
        return jnp.pad(w, ((0, r - w.shape[0]), (0, c - w.shape[1]))).astype(bf16)

    def padv(v, c):
        return jnp.pad(v, ((0, 0), (0, c - v.shape[1]))).astype(f32)

    w1 = padw(params["w1"], Cip, Cwp)
    w2 = jnp.pad(params["w2"],
                 ((0, 0), (0, Cwp - width), (0, Cwp - width))).astype(bf16)
    w2m = w2.reshape(3, 3 * Cwp, Cwp)           # kx taps merged along K
    w3 = padw(params["w3"], Cwp, Cep)
    fc1 = padw(params["fc1"], Cep, Crp)
    fc2 = padw(params["fc2"], Crp, Cep)
    g1, b1 = padv(params["g1"], Cwp), padv(params["b1"], Cwp)
    g2, b2 = padv(params["g2"], Cwp), padv(params["b2"], Cwp)
    g3, b3 = padv(params["g3"], Cep), padv(params["b3"], Cep)

    # NCHW -> NHWC once; channels zero-padded to a lane-dense multiple of 128.
    # The single padded bf16 copy is reused as conv1 input AND the residual.
    x_nhwc = jnp.transpose(x_nchw, (0, 2, 3, 1))
    x_p = jnp.pad(x_nhwc, ((0, 0), (0, 0), (0, 0), (0, Cip - Cin))).astype(bf16)
    x_res = x_p.reshape(N, HW, Cep)             # Cip == Cep here

    # stage 1: conv1 (1x1), tiled over M rows, + bn1 partial stats.
    tm, M_pad = _pick_tile_m(M)
    x_flat = x_p.reshape(M, Cip)
    if M_pad != M:                              # zero rows contribute 0 to stats
        x_flat = jnp.pad(x_flat, ((0, M_pad - M), (0, 0)))
    y1_flat, sums1 = _conv1(x_flat, w1, tm)
    if M_pad != M:
        y1_flat = y1_flat[:M]
    scale1, bias1 = _fold_bn(sums1, M, g1, b1)
    y1 = y1_flat.reshape(N, H, W, Cwp)

    # stage 2: bn1+relu1 (folded) + 3x3 conv via in-VMEM halo + shift-matmuls.
    y2, sums2 = _conv2(y1, scale1, bias1, w2m, N, H, W)
    scale2, bias2 = _fold_bn(sums2, M, g2, b2)

    # stage 3: bn2+relu2 (folded) + conv3 stats + SE global average pool.
    TR = _row_tile(HW)
    sums3, pool_raw = _conv3_stats(y2, scale2, bias2, w3, N, HW, TR)
    scale3, bias3 = _fold_bn(sums3, M, g3, b3)

    # SE excitation hoisted to XLA: two tiny (N, C) matmuls + sigmoid.
    pooled_bn = pool_raw * (1.0 / HW) * scale3 + bias3          # (N, Cep)
    z = jnp.maximum(jnp.dot(pooled_bn.astype(bf16), fc1,
                            preferred_element_type=f32), 0.0)
    se = jax.nn.sigmoid(jnp.dot(z.astype(bf16), fc2,
                                preferred_element_type=f32))
    se = se.reshape(N, 1, Cep).astype(f32)

    # stage 4: conv3 (recomputed) + bn3 + SE scale + residual + relu3.
    out_flat = _tail(y2, x_res, se, scale2, bias2, w3, scale3, bias3, N, HW, TR)

    out = out_flat.reshape(N, H, W, Cep)[..., :Cexp]   # drop channel padding
    return jnp.transpose(out, (0, 3, 1, 2))            # NHWC -> NCHW


def init_params(key, inplanes, planes, reduction, base_width=64, groups=1):
    width = int(planes * (base_width / 64.0)) * groups
    Cexp = planes * 4  # expansion = 4
    Cr = Cexp // reduction
    ks = jax.random.split(key, 11)

    def nrm(k, shape, scale=0.1):
        return scale * jax.random.normal(k, shape, jnp.float32)

    w1 = nrm(ks[0], (inplanes, width))                         # conv1x1: (Cin, Cout)
    w2_oihw = nrm(ks[1], (width, width, 3, 3))                 # torch OIHW
    w2 = jnp.transpose(w2_oihw, (2, 3, 1, 0)).reshape(9, width, width)  # (tap,Ci,Co)
    w3 = nrm(ks[2], (width, Cexp))                             # conv1x1: (Cin, Cout)
    fc1 = nrm(ks[3], (Cexp, Cr))                               # Linear1.weight.T
    fc2 = nrm(ks[4], (Cr, Cexp))                               # Linear2.weight.T
    g1 = 1.0 + nrm(ks[5], (1, width), 0.05)
    b1 = nrm(ks[6], (1, width), 0.05)
    g2 = 1.0 + nrm(ks[7], (1, width), 0.05)
    b2 = nrm(ks[8], (1, width), 0.05)
    g3 = 1.0 + nrm(ks[9], (1, Cexp), 0.05)
    b3 = nrm(ks[10], (1, Cexp), 0.05)
    return dict(w1=w1, w2=w2, w3=w3, fc1=fc1, fc2=fc2,
                g1=g1, b1=b1, g2=g2, b2=b2, g3=g3, b3=b3)


if __name__ == "__main__":
    key = jax.random.PRNGKey(0)
    kx, kp = jax.random.split(key)

    # inplanes == planes * expansion and stride == 1, so downsample is None.
    N, inplanes, H, W = 2, 16, 8, 8
    planes, reduction = 4, 4

    x = jax.random.normal(kx, (N, inplanes, H, W), jnp.float32)
    params = init_params(kp, inplanes, planes, reduction)

    fwd = jax.jit(bottleneck_se_forward)
    out = jax.block_until_ready(fwd(x, params))
    assert out.shape == (N, planes * 4, H, W)
    assert bool(jnp.all(jnp.isfinite(out)))
    print("KERNEL_OK")
</pallas_src>

<mosaic_0001>
module attributes {stable_mosaic.version = 11 : i64} {
  func.func @_conv1_kernel(%arg0: i32, %arg1: memref<128x128xbf16, #tpu.memory_space<vmem>>, %arg2: memref<128x128xbf16, #tpu.memory_space<vmem>>, %arg3: memref<128x128xbf16, #tpu.memory_space<vmem>>, %arg4: memref<1x2x128xf32, #tpu.memory_space<vmem>>) attributes {dimension_semantics = [#tpu.dimension_semantics<parallel>], iteration_bounds = array<i64: 1>, scalar_prefetch = 0 : i64, scratch_operands = 0 : i64, tpu.core_type = #tpu.core_type<tc>, window_params = [{transform_indices = @transform_0, window_bounds = array<i64: 128, 128>}, {pipeline_mode = #tpu.pipeline_mode<synchronous>, transform_indices = @transform_1, window_bounds = array<i64: 128, 128>}, {transform_indices = @transform_2, window_bounds = array<i64: 128, 128>}, {transform_indices = @transform_3, window_bounds = array<i64: 1, 2, 128>}]} {
    %c0 = arith.constant 0 : index
    %c0_0 = arith.constant 0 : index
    %0 = vector.load %arg1[%c0, %c0_0] : memref<128x128xbf16, #tpu.memory_space<vmem>>, vector<128x128xbf16>
    %c0_1 = arith.constant 0 : index
    %c0_2 = arith.constant 0 : index
    %1 = vector.load %arg2[%c0_1, %c0_2] : memref<128x128xbf16, #tpu.memory_space<vmem>>, vector<128x128xbf16>
    %cst = arith.constant dense<0.000000e+00> : vector<128x128xf32>
    %2 = tpu.matmul %0, %1, %cst {dimension_numbers = #tpu.dot_dimension_numbers<[1], [0], [0], [1], [0, 0, 1, 1], [], []>} : vector<128x128xbf16>, vector<128x128xbf16>, vector<128x128xf32> -> vector<128x128xf32>
    %3 = arith.truncf %2 : vector<128x128xf32> to vector<128x128xbf16>
    %c0_3 = arith.constant 0 : index
    %c0_4 = arith.constant 0 : index
    %4 = vector.load %arg3[%c0_3, %c0_4] : memref<128x128xbf16, #tpu.memory_space<vmem>>, vector<128x128xbf16>
    tpu.vector_store %arg3[%c0_3, %c0_4], %3 {strides = array<i32>} : memref<128x128xbf16, #tpu.memory_space<vmem>>, vector<128x128xbf16>,
    %cst_5 = arith.constant dense<0.000000e+00> : vector<128xf32>
    %5 = vector.multi_reduction <add>, %2, %cst_5 [0] : vector<128x128xf32> to vector<128xf32>
    %6 = vector.shape_cast %5 : vector<128xf32> to vector<1x128xf32>
    %c0_6 = arith.constant 0 : index
    %c0_7 = arith.constant 0 : index
    %c0_8 = arith.constant 0 : index
    %7 = vector.load %arg4[%c0_6, %c0_7, %c0_8] : memref<1x2x128xf32, #tpu.memory_space<vmem>>, vector<1x1x128xf32>
    %8 = vector.shape_cast %7 : vector<1x1x128xf32> to vector<1x128xf32>
    %9 = vector.shape_cast %6 : vector<1x128xf32> to vector<1x1x128xf32>
    tpu.vector_store %arg4[%c0_6, %c0_7, %c0_8], %9 {strides = array<i32>} : memref<1x2x128xf32, #tpu.memory_space<vmem>>, vector<1x1x128xf32>,
    %10 = arith.mulf %2, %2 : vector<128x128xf32>
    %cst_9 = arith.constant dense<0.000000e+00> : vector<128xf32>
    %11 = vector.multi_reduction <add>, %10, %cst_9 [0] : vector<128x128xf32> to vector<128xf32>
    %12 = vector.shape_cast %11 : vector<128xf32> to vector<1x128xf32>
    %c0_10 = arith.constant 0 : index
    %c1 = arith.constant 1 : index
    %c0_11 = arith.constant 0 : index
    %13 = vector.load %arg4[%c0_10, %c1, %c0_11] : memref<1x2x128xf32, #tpu.memory_space<vmem>>, vector<1x1x128xf32>
    %14 = vector.shape_cast %13 : vector<1x1x128xf32> to vector<1x128xf32>
    %15 = vector.shape_cast %12 : vector<1x128xf32> to vector<1x1x128xf32>
    tpu.vector_store %arg4[%c0_10, %c1, %c0_11], %15 {strides = array<i32>} : memref<1x2x128xf32, #tpu.memory_space<vmem>>, vector<1x1x128xf32>,
    return
  }
  func.func @transform_0(%arg0: i32) -> (i32, i32) {
    %c0_i32 = arith.constant 0 : i32
    %c0_i32_0 = arith.constant 0 : i32
    return %arg0, %c0_i32 : i32, i32
  }
  func.func @transform_1(%arg0: i32) -> (i32, i32) {
    %c0_i32 = arith.constant 0 : i32
    %c0_i32_0 = arith.constant 0 : i32
    %c0_i32_1 = arith.constant 0 : i32
    return %c0_i32, %c0_i32_0 : i32, i32
  }
  func.func @transform_2(%arg0: i32) -> (i32, i32) {
    %c0_i32 = arith.constant 0 : i32
    %c0_i32_0 = arith.constant 0 : i32
    return %arg0, %c0_i32 : i32, i32
  }
  func.func @transform_3(%arg0: i32) -> (i32, i32, i32) {
    %c0_i32 = arith.constant 0 : i32
    %c0_i32_0 = arith.constant 0 : i32
    %c0_i32_1 = arith.constant 0 : i32
    return %arg0, %c0_i32, %c0_i32_0 : i32, i32, i32
  }
}

module attributes {stable_mosaic.version = 11 : i64} {
  func.func @_conv2_kernel(%arg0: i32, %arg1: memref<1x8x8x128xbf16, #tpu.memory_space<vmem>>, %arg2: memref<1x128xf32, #tpu.memory_space<vmem>>, %arg3: memref<1x128xf32, #tpu.memory_space<vmem>>, %arg4: memref<3x384x128xbf16, #tpu.memory_space<vmem>>, %arg5: memref<1x64x128xbf16, #tpu.memory_space<vmem>>, %arg6: memref<1x2x128xf32, #tpu.memory_space<vmem>>, %arg7: memref<10x10x128xf32, #tpu.memory_space<vmem>>, %arg8: memref<64x128xf32, #tpu.memory_space<vmem>>) attributes {dimension_semantics = [#tpu.dimension_semantics<parallel>], iteration_bounds = array<i64: 2>, scalar_prefetch = 0 : i64, scratch_operands = 2 : i64, tpu.core_type = #tpu.core_type<tc>, window_params = [{transform_indices = @transform_0, window_bounds = array<i64: 1, 8, 8, 128>}, {pipeline_mode = #tpu.pipeline_mode<synchronous>, transform_indices = @transform_1, window_bounds = array<i64: 1, 128>}, {pipeline_mode = #tpu.pipeline_mode<synchronous>, transform_indices = @transform_2, window_bounds = array<i64: 1, 128>}, {pipeline_mode = #tpu.pipeline_mode<synchronous>, transform_indices = @transform_3, window_bounds = array<i64: 3, 384, 128>}, {transform_indices = @transform_4, window_bounds = array<i64: 1, 64, 128>}, {transform_indices = @transform_5, window_bounds = array<i64: 1, 2, 128>}]} {
    %cst = arith.constant 0.000000e+00 : f32
    %0 = vector.broadcast %cst : f32 to vector<10x10x128xf32>
    %c0 = arith.constant 0 : index
    %c0_0 = arith.constant 0 : index
    %c0_1 = arith.constant 0 : index
    %1 = vector.load %arg7[%c0, %c0_0, %c0_1] : memref<10x10x128xf32, #tpu.memory_space<vmem>>, vector<10x10x128xf32>
    tpu.vector_store %arg7[%c0, %c0_0, %c0_1], %0 {strides = array<i32>} : memref<10x10x128xf32, #tpu.memory_space<vmem>>, vector<10x10x128xf32>,
    %c0_2 = arith.constant 0 : index
    %c0_3 = arith.constant 0 : index
    %2 = vector.load %arg2[%c0_2, %c0_3] : memref<1x128xf32, #tpu.memory_space<vmem>>, vector<1x128xf32>
    %3 = vector.shape_cast %2 : vector<1x128xf32> to vector<1x1x128xf32>
    %c0_4 = arith.constant 0 : index
    %c0_5 = arith.constant 0 : index
    %4 = vector.load %arg3[%c0_4, %c0_5] : memref<1x128xf32, #tpu.memory_space<vmem>>, vector<1x128xf32>
    %5 = vector.shape_cast %4 : vector<1x128xf32> to vector<1x1x128xf32>
    %c0_6 = arith.constant 0 : index
    %c0_7 = arith.constant 0 : index
    %c0_8 = arith.constant 0 : index
    %c0_9 = arith.constant 0 : index
    %6 = vector.load %arg1[%c0_6, %c0_7, %c0_8, %c0_9] : memref<1x8x8x128xbf16, #tpu.memory_space<vmem>>, vector<1x8x8x128xbf16>
    %7 = vector.shape_cast %6 : vector<1x8x8x128xbf16> to vector<8x8x128xbf16>
    %8 = arith.extf %7 : vector<8x8x128xbf16> to vector<8x8x128xf32>
    %9 = vector.broadcast %3 : vector<1x1x128xf32> to vector<8x8x128xf32>
    %10 = arith.mulf %8, %9 : vector<8x8x128xf32>
    %11 = vector.broadcast %5 : vector<1x1x128xf32> to vector<8x8x128xf32>
    %12 = arith.addf %10, %11 : vector<8x8x128xf32>
    %cst_10 = arith.constant 0.000000e+00 : f32
    %13 = vector.broadcast %cst_10 : f32 to vector<8x8x128xf32>
    %14 = arith.maximumf %12, %13 : vector<8x8x128xf32>
    %c1 = arith.constant 1 : index
    %c1_11 = arith.constant 1 : index
    %c0_12 = arith.constant 0 : index
    %15 = vector.load %arg7[%c1, %c1_11, %c0_12] : memref<10x10x128xf32, #tpu.memory_space<vmem>>, vector<8x8x128xf32>
    tpu.vector_store %arg7[%c1, %c1_11, %c0_12], %14 {strides = array<i32>} : memref<10x10x128xf32, #tpu.memory_space<vmem>>, vector<8x8x128xf32>,
    %cst_13 = arith.constant 0.000000e+00 : f32
    %16 = vector.broadcast %cst_13 : f32 to vector<64x128xf32>
    %c0_14 = arith.constant 0 : index
    %c0_15 = arith.constant 0 : index
    %17 = vector.load %arg8[%c0_14, %c0_15] : memref<64x128xf32, #tpu.memory_space<vmem>>, vector<64x128xf32>
    tpu.vector_store %arg8[%c0_14, %c0_15], %16 {strides = array<i32>} : memref<64x128xf32, #tpu.memory_space<vmem>>, vector<64x128xf32>,
    %c0_16 = arith.constant 0 : index
    %c0_17 = arith.constant 0 : index
    %c0_18 = arith.constant 0 : index
    %18 = vector.load %arg7[%c0_16, %c0_17, %c0_18] : memref<10x10x128xf32, #tpu.memory_space<vmem>>, vector<8x10x128xf32>
    %19 = vector.extract_strided_slice %18 {offsets = [0, 0, 0], sizes = [8, 8, 128], strides = [1, 1, 1]} : vector<8x10x128xf32> to vector<8x8x128xf32>
    %20 = vector.extract_strided_slice %18 {offsets = [0, 1, 0], sizes = [8, 8, 128], strides = [1, 1, 1]} : vector<8x10x128xf32> to vector<8x8x128xf32>
    %21 = vector.extract_strided_slice %18 {offsets = [0, 2, 0], sizes = [8, 8, 128], strides = [1, 1, 1]} : vector<8x10x128xf32> to vector<8x8x128xf32>
    %22 = tpu.concatenate %19, %20, %21 in 2 : vector<8x8x128xf32>, vector<8x8x128xf32>, vector<8x8x128xf32> -> vector<8x8x384xf32>
    %23 = arith.truncf %22 : vector<8x8x384xf32> to vector<8x8x384xbf16>
    %24 = vector.shape_cast %23 : vector<8x8x384xbf16> to vector<64x384xbf16>
    %c0_19 = arith.constant 0 : index
    %c0_20 = arith.constant 0 : index
    %25 = vector.load %arg8[%c0_19, %c0_20] : memref<64x128xf32, #tpu.memory_space<vmem>>, vector<64x128xf32>
    %c0_21 = arith.constant 0 : index
    %c0_22 = arith.constant 0 : index
    %c0_23 = arith.constant 0 : index
    %26 = vector.load %arg4[%c0_21, %c0_22, %c0_23] : memref<3x384x128xbf16, #tpu.memory_space<vmem>>, vector<1x384x128xbf16>
    %27 = vector.shape_cast %26 : vector<1x384x128xbf16> to vector<384x128xbf16>
    %cst_24 = arith.constant dense<0.000000e+00> : vector<64x128xf32>
    %28 = tpu.matmul %24, %27, %cst_24 {dimension_numbers = #tpu.dot_dimension_numbers<[1], [0], [0], [1], [0, 0, 1, 1], [], []>} : vector<64x384xbf16>, vector<384x128xbf16>, vector<64x128xf32> -> vector<64x128xf32>
    %29 = arith.addf %25, %28 : vector<64x128xf32>
    %c0_25 = arith.constant 0 : index
    %c0_26 = arith.constant 0 : index
    %30 = vector.load %arg8[%c0_25, %c0_26] : memref<64x128xf32, #tpu.memory_space<vmem>>, vector<64x128xf32>
    tpu.vector_store %arg8[%c0_25, %c0_26], %29 {strides = array<i32>} : memref<64x128xf32, #tpu.memory_space<vmem>>, vector<64x128xf32>,
    %c1_27 = arith.constant 1 : index
    %c0_28 = arith.constant 0 : index
    %c0_29 = arith.constant 0 : index
    %31 = vector.load %arg7[%c1_27, %c0_28, %c0_29] : memref<10x10x128xf32, #tpu.memory_space<vmem>>, vector<8x10x128xf32>
    %32 = vector.extract_strided_slice %31 {offsets = [0, 0, 0], sizes = [8, 8, 128], strides = [1, 1, 1]} : vector<8x10x128xf32> to vector<8x8x128xf32>
    %33 = vector.extract_strided_slice %31 {offsets = [0, 1, 0], sizes = [8, 8, 128], strides = [1, 1, 1]} : vector<8x10x128xf32> to vector<8x8x128xf32>
    %34 = vector.extract_strided_slice %31 {offsets = [0, 2, 0], sizes = [8, 8, 128], strides = [1, 1, 1]} : vector<8x10x128xf32> to vector<8x8x128xf32>
    %35 = tpu.concatenate %32, %33, %34 in 2 : vector<8x8x128xf32>, vector<8x8x128xf32>, vector<8x8x128xf32> -> vector<8x8x384xf32>
    %36 = arith.truncf %35 : vector<8x8x384xf32> to vector<8x8x384xbf16>
    %37 = vector.shape_cast %36 : vector<8x8x384xbf16> to vector<64x384xbf16>
    %c0_30 = arith.constant 0 : index
    %c0_31 = arith.constant 0 : index
    %38 = vector.load %arg8[%c0_30, %c0_31] : memref<64x128xf32, #tpu.memory_space<vmem>>, vector<64x128xf32>
    %c1_32 = arith.constant 1 : index
    %c0_33 = arith.constant 0 : index
    %c0_34 = arith.constant 0 : index
    %39 = vector.load %arg4[%c1_32, %c0_33, %c0_34] : memref<3x384x128xbf16, #tpu.memory_space<vmem>>, vector<1x384x128xbf16>
    %40 = vector.shape_cast %39 : vector<1x384x128xbf16> to vector<384x128xbf16>
    %cst_35 = arith.constant dense<0.000000e+00> : vector<64x128xf32>
    %41 = tpu.matmul %37, %40, %cst_35 {dimension_numbers = #tpu.dot_dimension_numbers<[1], [0], [0], [1], [0, 0, 1, 1], [], []>} : vector<64x384xbf16>, vector<384x128xbf16>, vector<64x128xf32> -> vector<64x128xf32>
    %42 = arith.addf %38, %41 : vector<64x128xf32>
    %c0_36 = arith.constant 0 : index
    %c0_37 = arith.constant 0 : index
    %43 = vector.load %arg8[%c0_36, %c0_37] : memref<64x128xf32, #tpu.memory_space<vmem>>, vector<64x128xf32>
    tpu.vector_store %arg8[%c0_36, %c0_37], %42 {strides = array<i32>} : memref<64x128xf32, #tpu.memory_space<vmem>>, vector<64x128xf32>,
    %c2 = arith.constant 2 : index
    %c0_38 = arith.constant 0 : index
    %c0_39 = arith.constant 0 : index
    %44 = vector.load %arg7[%c2, %c0_38, %c0_39] : memref<10x10x128xf32, #tpu.memory_space<vmem>>, vector<8x10x128xf32>
    %45 = vector.extract_strided_slice %44 {offsets = [0, 0, 0], sizes = [8, 8, 128], strides = [1, 1, 1]} : vector<8x10x128xf32> to vector<8x8x128xf32>
    %46 = vector.extract_strided_slice %44 {offsets = [0, 1, 0], sizes = [8, 8, 128], strides = [1, 1, 1]} : vector<8x10x128xf32> to vector<8x8x128xf32>
    %47 = vector.extract_strided_slice %44 {offsets = [0, 2, 0], sizes = [8, 8, 128], strides = [1, 1, 1]} : vector<8x10x128xf32> to vector<8x8x128xf32>
    %48 = tpu.concatenate %45, %46, %47 in 2 : vector<8x8x128xf32>, vector<8x8x128xf32>, vector<8x8x128xf32> -> vector<8x8x384xf32>
    %49 = arith.truncf %48 : vector<8x8x384xf32> to vector<8x8x384xbf16>
    %50 = vector.shape_cast %49 : vector<8x8x384xbf16> to vector<64x384xbf16>
    %c0_40 = arith.constant 0 : index
    %c0_41 = arith.constant 0 : index
    %51 = vector.load %arg8[%c0_40, %c0_41] : memref<64x128xf32, #tpu.memory_space<vmem>>, vector<64x128xf32>
    %c2_42 = arith.constant 2 : index
    %c0_43 = arith.constant 0 : index
    %c0_44 = arith.constant 0 : index
    %52 = vector.load %arg4[%c2_42, %c0_43, %c0_44] : memref<3x384x128xbf16, #tpu.memory_space<vmem>>, vector<1x384x128xbf16>
    %53 = vector.shape_cast %52 : vector<1x384x128xbf16> to vector<384x128xbf16>
    %cst_45 = arith.constant dense<0.000000e+00> : vector<64x128xf32>
    %54 = tpu.matmul %50, %53, %cst_45 {dimension_numbers = #tpu.dot_dimension_numbers<[1], [0], [0], [1], [0, 0, 1, 1], [], []>} : vector<64x384xbf16>, vector<384x128xbf16>, vector<64x128xf32> -> vector<64x128xf32>
    %55 = arith.addf %51, %54 : vector<64x128xf32>
    %c0_46 = arith.constant 0 : index
    %c0_47 = arith.constant 0 : index
    %56 = vector.load %arg8[%c0_46, %c0_47] : memref<64x128xf32, #tpu.memory_space<vmem>>, vector<64x128xf32>
    tpu.vector_store %arg8[%c0_46, %c0_47], %55 {strides = array<i32>} : memref<64x128xf32, #tpu.memory_space<vmem>>, vector<64x128xf32>,
    %c0_48 = arith.constant 0 : index
    %c0_49 = arith.constant 0 : index
    %57 = vector.load %arg8[%c0_48, %c0_49] : memref<64x128xf32, #tpu.memory_space<vmem>>, vector<64x128xf32>
    %58 = arith.truncf %57 : vector<64x128xf32> to vector<64x128xbf16>
    %c0_50 = arith.constant 0 : index
    %c0_51 = arith.constant 0 : index
    %c0_52 = arith.constant 0 : index
    %59 = vector.load %arg5[%c0_50, %c0_51, %c0_52] : memref<1x64x128xbf16, #tpu.memory_space<vmem>>, vector<1x64x128xbf16>
    %60 = vector.shape_cast %59 : vector<1x64x128xbf16> to vector<64x128xbf16>
    %61 = vector.shape_cast %58 : vector<64x128xbf16> to vector<1x64x128xbf16>
    tpu.vector_store %arg5[%c0_50, %c0_51, %c0_52], %61 {strides = array<i32>} : memref<1x64x128xbf16, #tpu.memory_space<vmem>>, vector<1x64x128xbf16>,
    %cst_53 = arith.constant dense<0.000000e+00> : vector<128xf32>
    %62 = vector.multi_reduction <add>, %57, %cst_53 [0] : vector<64x128xf32> to vector<128xf32>
    %63 = vector.shape_cast %62 : vector<128xf32> to vector<1x128xf32>
    %c0_54 = arith.constant 0 : index
    %c0_55 = arith.constant 0 : index
    %c0_56 = arith.constant 0 : index
    %64 = vector.load %arg6[%c0_54, %c0_55, %c0_56] : memref<1x2x128xf32, #tpu.memory_space<vmem>>, vector<1x1x128xf32>
    %65 = vector.shape_cast %64 : vector<1x1x128xf32> to vector<1x128xf32>
    %66 = vector.shape_cast %63 : vector<1x128xf32> to vector<1x1x128xf32>
    tpu.vector_store %arg6[%c0_54, %c0_55, %c0_56], %66 {strides = array<i32>} : memref<1x2x128xf32, #tpu.memory_space<vmem>>, vector<1x1x128xf32>,
    %67 = arith.mulf %57, %57 : vector<64x128xf32>
    %cst_57 = arith.constant dense<0.000000e+00> : vector<128xf32>
    %68 = vector.multi_reduction <add>, %67, %cst_57 [0] : vector<64x128xf32> to vector<128xf32>
    %69 = vector.shape_cast %68 : vector<128xf32> to vector<1x128xf32>
    %c0_58 = arith.constant 0 : index
    %c1_59 = arith.constant 1 : index
    %c0_60 = arith.constant 0 : index
    %70 = vector.load %arg6[%c0_58, %c1_59, %c0_60] : memref<1x2x128xf32, #tpu.memory_space<vmem>>, vector<1x1x128xf32>
    %71 = vector.shape_cast %70 : vector<1x1x128xf32> to vector<1x128xf32>
    %72 = vector.shape_cast %69 : vector<1x128xf32> to vector<1x1x128xf32>
    tpu.vector_store %arg6[%c0_58, %c1_59, %c0_60], %72 {strides = array<i32>} : memref<1x2x128xf32, #tpu.memory_space<vmem>>, vector<1x1x128xf32>,
    return
  }
  func.func @transform_0(%arg0: i32) -> (i32, i32, i32, i32) {
    %c0_i32 = arith.constant 0 : i32
    %c0_i32_0 = arith.constant 0 : i32
    %c0_i32_1 = arith.constant 0 : i32
    %c0_i32_2 = arith.constant 0 : i32
    return %arg0, %c0_i32, %c0_i32_0, %c0_i32_1 : i32, i32, i32, i32
  }
  func.func @transform_1(%arg0: i32) -> (i32, i32) {
    %c0_i32 = arith.constant 0 : i32
    %c0_i32_0 = arith.constant 0 : i32
    %c0_i32_1 = arith.constant 0 : i32
    return %c0_i32, %c0_i32_0 : i32, i32
  }
  func.func @transform_2(%arg0: i32) -> (i32, i32) {
    %c0_i32 = arith.constant 0 : i32
    %c0_i32_0 = arith.constant 0 : i32
    %c0_i32_1 = arith.constant 0 : i32
    return %c0_i32, %c0_i32_0 : i32, i32
  }
  func.func @transform_3(%arg0: i32) -> (i32, i32, i32) {
    %c0_i32 = arith.constant 0 : i32
    %c0_i32_0 = arith.constant 0 : i32
    %c0_i32_1 = arith.constant 0 : i32
    %c0_i32_2 = arith.constant 0 : i32
    return %c0_i32, %c0_i32_0, %c0_i32_1 : i32, i32, i32
  }
  func.func @transform_4(%arg0: i32) -> (i32, i32, i32) {
    %c0_i32 = arith.constant 0 : i32
    %c0_i32_0 = arith.constant 0 : i32
    %c0_i32_1 = arith.constant 0 : i32
    return %arg0, %c0_i32, %c0_i32_0 : i32, i32, i32
  }
  func.func @transform_5(%arg0: i32) -> (i32, i32, i32) {
    %c0_i32 = arith.constant 0 : i32
    %c0_i32_0 = arith.constant 0 : i32
    %c0_i32_1 = arith.constant 0 : i32
    return %arg0, %c0_i32, %c0_i32_0 : i32, i32, i32
  }
}

module attributes {stable_mosaic.version = 11 : i64} {
  func.func @_conv3_stats_kernel(%arg0: i32, %arg1: i32, %arg2: memref<1x64x128xbf16, #tpu.memory_space<vmem>>, %arg3: memref<1x128xf32, #tpu.memory_space<vmem>>, %arg4: memref<1x128xf32, #tpu.memory_space<vmem>>, %arg5: memref<128x128xbf16, #tpu.memory_space<vmem>>, %arg6: memref<1x2x128xf32, #tpu.memory_space<vmem>>, %arg7: memref<1x1x128xf32, #tpu.memory_space<vmem>>) attributes {dimension_semantics = [#tpu.dimension_semantics<parallel>, #tpu.dimension_semantics<arbitrary>], iteration_bounds = array<i64: 2, 1>, scalar_prefetch = 0 : i64, scratch_operands = 0 : i64, tpu.core_type = #tpu.core_type<tc>, window_params = [{transform_indices = @transform_0, window_bounds = array<i64: 1, 64, 128>}, {pipeline_mode = #tpu.pipeline_mode<synchronous>, transform_indices = @transform_1, window_bounds = array<i64: 1, 128>}, {pipeline_mode = #tpu.pipeline_mode<synchronous>, transform_indices = @transform_2, window_bounds = array<i64: 1, 128>}, {pipeline_mode = #tpu.pipeline_mode<synchronous>, transform_indices = @transform_3, window_bounds = array<i64: 128, 128>}, {transform_indices = @transform_4, window_bounds = array<i64: 1, 2, 128>}, {transform_indices = @transform_5, window_bounds = array<i64: 1, 1, 128>}]} {
    %c0 = arith.constant 0 : index
    %c0_0 = arith.constant 0 : index
    %c0_1 = arith.constant 0 : index
    %0 = vector.load %arg2[%c0, %c0_0, %c0_1] : memref<1x64x128xbf16, #tpu.memory_space<vmem>>, vector<1x64x128xbf16>
    %1 = vector.shape_cast %0 : vector<1x64x128xbf16> to vector<64x128xbf16>
    %2 = arith.extf %1 : vector<64x128xbf16> to vector<64x128xf32>
    %c0_2 = arith.constant 0 : index
    %c0_3 = arith.constant 0 : index
    %3 = vector.load %arg3[%c0_2, %c0_3] : memref<1x128xf32, #tpu.memory_space<vmem>>, vector<1x128xf32>
    %4 = vector.broadcast %3 : vector<1x128xf32> to vector<64x128xf32>
    %5 = arith.mulf %2, %4 : vector<64x128xf32>
    %c0_4 = arith.constant 0 : index
    %c0_5 = arith.constant 0 : index
    %6 = vector.load %arg4[%c0_4, %c0_5] : memref<1x128xf32, #tpu.memory_space<vmem>>, vector<1x128xf32>
    %7 = vector.broadcast %6 : vector<1x128xf32> to vector<64x128xf32>
    %8 = arith.addf %5, %7 : vector<64x128xf32>
    %cst = arith.constant 0.000000e+00 : f32
    %9 = vector.broadcast %cst : f32 to vector<64x128xf32>
    %10 = arith.maximumf %8, %9 : vector<64x128xf32>
    %11 = arith.truncf %10 : vector<64x128xf32> to vector<64x128xbf16>
    %c0_6 = arith.constant 0 : index
    %c0_7 = arith.constant 0 : index
    %12 = vector.load %arg5[%c0_6, %c0_7] : memref<128x128xbf16, #tpu.memory_space<vmem>>, vector<128x128xbf16>
    %cst_8 = arith.constant dense<0.000000e+00> : vector<64x128xf32>
    %13 = tpu.matmul %11, %12, %cst_8 {dimension_numbers = #tpu.dot_dimension_numbers<[1], [0], [0], [1], [0, 0, 1, 1], [], []>} : vector<64x128xbf16>, vector<128x128xbf16>, vector<64x128xf32> -> vector<64x128xf32>
    %cst_9 = arith.constant dense<0.000000e+00> : vector<128xf32>
    %14 = vector.multi_reduction <add>, %13, %cst_9 [0] : vector<64x128xf32> to vector<128xf32>
    %15 = vector.shape_cast %14 : vector<128xf32> to vector<1x128xf32>
    %16 = arith.mulf %13, %13 : vector<64x128xf32>
    %cst_10 = arith.constant dense<0.000000e+00> : vector<128xf32>
    %17 = vector.multi_reduction <add>, %16, %cst_10 [0] : vector<64x128xf32> to vector<128xf32>
    %18 = vector.shape_cast %17 : vector<128xf32> to vector<1x128xf32>
    %c0_i32 = arith.constant 0 : i32
    %19 = arith.cmpi eq, %arg1, %c0_i32 : i32
    %20 = arith.extui %19 : i1 to i32
    %c0_i32_11 = arith.constant 0 : i32
    %21 = arith.cmpi ne, %20, %c0_i32_11 : i32
    scf.if %21 {
      %c0_14 = arith.constant 0 : index
      %c0_15 = arith.constant 0 : index
      %c0_16 = arith.constant 0 : index
      %25 = vector.load %arg6[%c0_14, %c0_15, %c0_16] : memref<1x2x128xf32, #tpu.memory_space<vmem>>, vector<1x1x128xf32>
      %26 = vector.shape_cast %25 : vector<1x1x128xf32> to vector<1x128xf32>
      %27 = vector.shape_cast %15 : vector<1x128xf32> to vector<1x1x128xf32>
      tpu.vector_store %arg6[%c0_14, %c0_15, %c0_16], %27 {strides = array<i32>} : memref<1x2x128xf32, #tpu.memory_space<vmem>>, vector<1x1x128xf32>,
      %c0_17 = arith.constant 0 : index
      %c1 = arith.constant 1 : index
      %c0_18 = arith.constant 0 : index
      %28 = vector.load %arg6[%c0_17, %c1, %c0_18] : memref<1x2x128xf32, #tpu.memory_space<vmem>>, vector<1x1x128xf32>
      %29 = vector.shape_cast %28 : vector<1x1x128xf32> to vector<1x128xf32>
      %30 = vector.shape_cast %18 : vector<1x128xf32> to vector<1x1x128xf32>
      tpu.vector_store %arg6[%c0_17, %c1, %c0_18], %30 {strides = array<i32>} : memref<1x2x128xf32, #tpu.memory_space<vmem>>, vector<1x1x128xf32>,
      %c0_19 = arith.constant 0 : index
      %c0_20 = arith.constant 0 : index
      %c0_21 = arith.constant 0 : index
      %31 = vector.load %arg7[%c0_19, %c0_20, %c0_21] : memref<1x1x128xf32, #tpu.memory_space<vmem>>, vector<1x1x128xf32>
      %32 = vector.shape_cast %31 : vector<1x1x128xf32> to vector<1x128xf32>
      %33 = vector.shape_cast %15 : vector<1x128xf32> to vector<1x1x128xf32>
      tpu.vector_store %arg7[%c0_19, %c0_20, %c0_21], %33 {strides = array<i32>} : memref<1x1x128xf32, #tpu.memory_space<vmem>>, vector<1x1x128xf32>,
    } else {
    }
    %c0_i32_12 = arith.constant 0 : i32
    %22 = arith.cmpi ne, %arg1, %c0_i32_12 : i32
    %23 = arith.extui %22 : i1 to i32
    %c0_i32_13 = arith.constant 0 : i32
    %24 = arith.cmpi ne, %23, %c0_i32_13 : i32
    scf.if %24 {
      %c0_14 = arith.constant 0 : index
      %c0_15 = arith.constant 0 : index
      %c0_16 = arith.constant 0 : index
      %25 = vector.load %arg6[%c0_14, %c0_15, %c0_16] : memref<1x2x128xf32, #tpu.memory_space<vmem>>, vector<1x1x128xf32>
      %26 = vector.shape_cast %25 : vector<1x1x128xf32> to vector<1x128xf32>
      %27 = arith.addf %26, %15 : vector<1x128xf32>
      %c0_17 = arith.constant 0 : index
      %c0_18 = arith.constant 0 : index
      %c0_19 = arith.constant 0 : index
      %28 = vector.load %arg6[%c0_17, %c0_18, %c0_19] : memref<1x2x128xf32, #tpu.memory_space<vmem>>, vector<1x1x128xf32>
      %29 = vector.shape_cast %28 : vector<1x1x128xf32> to vector<1x128xf32>
      %30 = vector.shape_cast %27 : vector<1x128xf32> to vector<1x1x128xf32>
      tpu.vector_store %arg6[%c0_17, %c0_18, %c0_19], %30 {strides = array<i32>} : memref<1x2x128xf32, #tpu.memory_space<vmem>>, vector<1x1x128xf32>,
      %c0_20 = arith.constant 0 : index
      %c1 = arith.constant 1 : index
      %c0_21 = arith.constant 0 : index
      %31 = vector.load %arg6[%c0_20, %c1, %c0_21] : memref<1x2x128xf32, #tpu.memory_space<vmem>>, vector<1x1x128xf32>
      %32 = vector.shape_cast %31 : vector<1x1x128xf32> to vector<1x128xf32>
      %33 = arith.addf %32, %18 : vector<1x128xf32>
      %c0_22 = arith.constant 0 : index
      %c1_23 = arith.constant 1 : index
      %c0_24 = arith.constant 0 : index
      %34 = vector.load %arg6[%c0_22, %c1_23, %c0_24] : memref<1x2x128xf32, #tpu.memory_space<vmem>>, vector<1x1x128xf32>
      %35 = vector.shape_cast %34 : vector<1x1x128xf32> to vector<1x128xf32>
      %36 = vector.shape_cast %33 : vector<1x128xf32> to vector<1x1x128xf32>
      tpu.vector_store %arg6[%c0_22, %c1_23, %c0_24], %36 {strides = array<i32>} : memref<1x2x128xf32, #tpu.memory_space<vmem>>, vector<1x1x128xf32>,
      %c0_25 = arith.constant 0 : index
      %c0_26 = arith.constant 0 : index
      %c0_27 = arith.constant 0 : index
      %37 = vector.load %arg7[%c0_25, %c0_26, %c0_27] : memref<1x1x128xf32, #tpu.memory_space<vmem>>, vector<1x1x128xf32>
      %38 = vector.shape_cast %37 : vector<1x1x128xf32> to vector<1x128xf32>
      %39 = arith.addf %38, %15 : vector<1x128xf32>
      %c0_28 = arith.constant 0 : index
      %c0_29 = arith.constant 0 : index
      %c0_30 = arith.constant 0 : index
      %40 = vector.load %arg7[%c0_28, %c0_29, %c0_30] : memref<1x1x128xf32, #tpu.memory_space<vmem>>, vector<1x1x128xf32>
      %41 = vector.shape_cast %40 : vector<1x1x128xf32> to vector<1x128xf32>
      %42 = vector.shape_cast %39 : vector<1x128xf32> to vector<1x1x128xf32>
      tpu.vector_store %arg7[%c0_28, %c0_29, %c0_30], %42 {strides = array<i32>} : memref<1x1x128xf32, #tpu.memory_space<vmem>>, vector<1x1x128xf32>,
    } else {
    }
    return
  }
  func.func @transform_0(%arg0: i32, %arg1: i32) -> (i32, i32, i32) {
    %c0_i32 = arith.constant 0 : i32
    %c0_i32_0 = arith.constant 0 : i32
    return %arg0, %arg1, %c0_i32 : i32, i32, i32
  }
  func.func @transform_1(%arg0: i32, %arg1: i32) -> (i32, i32) {
    %c0_i32 = arith.constant 0 : i32
    %c0_i32_0 = arith.constant 0 : i32
    %c0_i32_1 = arith.constant 0 : i32
    return %c0_i32, %c0_i32_0 : i32, i32
  }
  func.func @transform_2(%arg0: i32, %arg1: i32) -> (i32, i32) {
    %c0_i32 = arith.constant 0 : i32
    %c0_i32_0 = arith.constant 0 : i32
    %c0_i32_1 = arith.constant 0 : i32
    return %c0_i32, %c0_i32_0 : i32, i32
  }
  func.func @transform_3(%arg0: i32, %arg1: i32) -> (i32, i32) {
    %c0_i32 = arith.constant 0 : i32
    %c0_i32_0 = arith.constant 0 : i32
    %c0_i32_1 = arith.constant 0 : i32
    return %c0_i32, %c0_i32_0 : i32, i32
  }
  func.func @transform_4(%arg0: i32, %arg1: i32) -> (i32, i32, i32) {
    %c0_i32 = arith.constant 0 : i32
    %c0_i32_0 = arith.constant 0 : i32
    %c0_i32_1 = arith.constant 0 : i32
    return %arg0, %c0_i32, %c0_i32_0 : i32, i32, i32
  }
  func.func @transform_5(%arg0: i32, %arg1: i32) -> (i32, i32, i32) {
    %c0_i32 = arith.constant 0 : i32
    %c0_i32_0 = arith.constant 0 : i32
    %c0_i32_1 = arith.constant 0 : i32
    return %arg0, %c0_i32, %c0_i32_0 : i32, i32, i32
  }
}

module attributes {stable_mosaic.version = 11 : i64} {
  func.func @_tail_kernel(%arg0: i32, %arg1: i32, %arg2: memref<1x64x128xbf16, #tpu.memory_space<vmem>>, %arg3: memref<1x64x128xbf16, #tpu.memory_space<vmem>>, %arg4: memref<1x1x128xf32, #tpu.memory_space<vmem>>, %arg5: memref<1x128xf32, #tpu.memory_space<vmem>>, %arg6: memref<1x128xf32, #tpu.memory_space<vmem>>, %arg7: memref<128x128xbf16, #tpu.memory_space<vmem>>, %arg8: memref<1x128xf32, #tpu.memory_space<vmem>>, %arg9: memref<1x128xf32, #tpu.memory_space<vmem>>, %arg10: memref<1x64x128xf32, #tpu.memory_space<vmem>>) attributes {dimension_semantics = [#tpu.dimension_semantics<parallel>, #tpu.dimension_semantics<parallel>], iteration_bounds = array<i64: 2, 1>, scalar_prefetch = 0 : i64, scratch_operands = 0 : i64, tpu.core_type = #tpu.core_type<tc>, window_params = [{transform_indices = @transform_0, window_bounds = array<i64: 1, 64, 128>}, {transform_indices = @transform_1, window_bounds = array<i64: 1, 64, 128>}, {transform_indices = @transform_2, window_bounds = array<i64: 1, 1, 128>}, {pipeline_mode = #tpu.pipeline_mode<synchronous>, transform_indices = @transform_3, window_bounds = array<i64: 1, 128>}, {pipeline_mode = #tpu.pipeline_mode<synchronous>, transform_indices = @transform_4, window_bounds = array<i64: 1, 128>}, {pipeline_mode = #tpu.pipeline_mode<synchronous>, transform_indices = @transform_5, window_bounds = array<i64: 128, 128>}, {pipeline_mode = #tpu.pipeline_mode<synchronous>, transform_indices = @transform_6, window_bounds = array<i64: 1, 128>}, {pipeline_mode = #tpu.pipeline_mode<synchronous>, transform_indices = @transform_7, window_bounds = array<i64: 1, 128>}, {transform_indices = @transform_8, window_bounds = array<i64: 1, 64, 128>}]} {
    %c0 = arith.constant 0 : index
    %c0_0 = arith.constant 0 : index
    %c0_1 = arith.constant 0 : index
    %0 = vector.load %arg2[%c0, %c0_0, %c0_1] : memref<1x64x128xbf16, #tpu.memory_space<vmem>>, vector<1x64x128xbf16>
    %1 = vector.shape_cast %0 : vector<1x64x128xbf16> to vector<64x128xbf16>
    %2 = arith.extf %1 : vector<64x128xbf16> to vector<64x128xf32>
    %c0_2 = arith.constant 0 : index
    %c0_3 = arith.constant 0 : index
    %3 = vector.load %arg5[%c0_2, %c0_3] : memref<1x128xf32, #tpu.memory_space<vmem>>, vector<1x128xf32>
    %4 = vector.broadcast %3 : vector<1x128xf32> to vector<64x128xf32>
    %5 = arith.mulf %2, %4 : vector<64x128xf32>
    %c0_4 = arith.constant 0 : index
    %c0_5 = arith.constant 0 : index
    %6 = vector.load %arg6[%c0_4, %c0_5] : memref<1x128xf32, #tpu.memory_space<vmem>>, vector<1x128xf32>
    %7 = vector.broadcast %6 : vector<1x128xf32> to vector<64x128xf32>
    %8 = arith.addf %5, %7 : vector<64x128xf32>
    %cst = arith.constant 0.000000e+00 : f32
    %9 = vector.broadcast %cst : f32 to vector<64x128xf32>
    %10 = arith.maximumf %8, %9 : vector<64x128xf32>
    %11 = arith.truncf %10 : vector<64x128xf32> to vector<64x128xbf16>
    %c0_6 = arith.constant 0 : index
    %c0_7 = arith.constant 0 : index
    %12 = vector.load %arg7[%c0_6, %c0_7] : memref<128x128xbf16, #tpu.memory_space<vmem>>, vector<128x128xbf16>
    %cst_8 = arith.constant dense<0.000000e+00> : vector<64x128xf32>
    %13 = tpu.matmul %11, %12, %cst_8 {dimension_numbers = #tpu.dot_dimension_numbers<[1], [0], [0], [1], [0, 0, 1, 1], [], []>} : vector<64x128xbf16>, vector<128x128xbf16>, vector<64x128xf32> -> vector<64x128xf32>
    %c0_9 = arith.constant 0 : index
    %c0_10 = arith.constant 0 : index
    %14 = vector.load %arg8[%c0_9, %c0_10] : memref<1x128xf32, #tpu.memory_space<vmem>>, vector<1x128xf32>
    %15 = vector.broadcast %14 : vector<1x128xf32> to vector<64x128xf32>
    %16 = arith.mulf %13, %15 : vector<64x128xf32>
    %c0_11 = arith.constant 0 : index
    %c0_12 = arith.constant 0 : index
    %17 = vector.load %arg9[%c0_11, %c0_12] : memref<1x128xf32, #tpu.memory_space<vmem>>, vector<1x128xf32>
    %18 = vector.broadcast %17 : vector<1x128xf32> to vector<64x128xf32>
    %19 = arith.addf %16, %18 : vector<64x128xf32>
    %c0_13 = arith.constant 0 : index
    %c0_14 = arith.constant 0 : index
    %c0_15 = arith.constant 0 : index
    %20 = vector.load %arg4[%c0_13, %c0_14, %c0_15] : memref<1x1x128xf32, #tpu.memory_space<vmem>>, vector<1x1x128xf32>
    %21 = vector.shape_cast %20 : vector<1x1x128xf32> to vector<1x128xf32>
    %22 = vector.broadcast %21 : vector<1x128xf32> to vector<64x128xf32>
    %23 = arith.mulf %19, %22 : vector<64x128xf32>
    %c0_16 = arith.constant 0 : index
    %c0_17 = arith.constant 0 : index
    %c0_18 = arith.constant 0 : index
    %24 = vector.load %arg3[%c0_16, %c0_17, %c0_18] : memref<1x64x128xbf16, #tpu.memory_space<vmem>>, vector<1x64x128xbf16>
    %25 = vector.shape_cast %24 : vector<1x64x128xbf16> to vector<64x128xbf16>
    %26 = arith.extf %25 : vector<64x128xbf16> to vector<64x128xf32>
    %27 = arith.addf %23, %26 : vector<64x128xf32>
    %cst_19 = arith.constant 0.000000e+00 : f32
    %28 = vector.broadcast %cst_19 : f32 to vector<64x128xf32>
    %29 = arith.maximumf %27, %28 : vector<64x128xf32>
    %c0_20 = arith.constant 0 : index
    %c0_21 = arith.constant 0 : index
    %c0_22 = arith.constant 0 : index
    %30 = vector.load %arg10[%c0_20, %c0_21, %c0_22] : memref<1x64x128xf32, #tpu.memory_space<vmem>>, vector<1x64x128xf32>
    %31 = vector.shape_cast %30 : vector<1x64x128xf32> to vector<64x128xf32>
    %32 = vector.shape_cast %29 : vector<64x128xf32> to vector<1x64x128xf32>
    tpu.vector_store %arg10[%c0_20, %c0_21, %c0_22], %32 {strides = array<i32>} : memref<1x64x128xf32, #tpu.memory_space<vmem>>, vector<1x64x128xf32>,
    return
  }
  func.func @transform_0(%arg0: i32, %arg1: i32) -> (i32, i32, i32) {
    %c0_i32 = arith.constant 0 : i32
    %c0_i32_0 = arith.constant 0 : i32
    return %arg0, %arg1, %c0_i32 : i32, i32, i32
  }
  func.func @transform_1(%arg0: i32, %arg1: i32) -> (i32, i32, i32) {
    %c0_i32 = arith.constant 0 : i32
    %c0_i32_0 = arith.constant 0 : i32
    return %arg0, %arg1, %c0_i32 : i32, i32, i32
  }
  func.func @transform_2(%arg0: i32, %arg1: i32) -> (i32, i32, i32) {
    %c0_i32 = arith.constant 0 : i32
    %c0_i32_0 = arith.constant 0 : i32
    %c0_i32_1 = arith.constant 0 : i32
    return %arg0, %c0_i32, %c0_i32_0 : i32, i32, i32
  }
  func.func @transform_3(%arg0: i32, %arg1: i32) -> (i32, i32) {
    %c0_i32 = arith.constant 0 : i32
    %c0_i32_0 = arith.constant 0 : i32
    %c0_i32_1 = arith.constant 0 : i32
    return %c0_i32, %c0_i32_0 : i32, i32
  }
  func.func @transform_4(%arg0: i32, %arg1: i32) -> (i32, i32) {
    %c0_i32 = arith.constant 0 : i32
    %c0_i32_0 = arith.constant 0 : i32
    %c0_i32_1 = arith.constant 0 : i32
    return %c0_i32, %c0_i32_0 : i32, i32
  }
  func.func @transform_5(%arg0: i32, %arg1: i32) -> (i32, i32) {
    %c0_i32 = arith.constant 0 : i32
    %c0_i32_0 = arith.constant 0 : i32
    %c0_i32_1 = arith.constant 0 : i32
    return %c0_i32, %c0_i32_0 : i32, i32
  }
  func.func @transform_6(%arg0: i32, %arg1: i32) -> (i32, i32) {
    %c0_i32 = arith.constant 0 : i32
    %c0_i32_0 = arith.constant 0 : i32
    %c0_i32_1 = arith.constant 0 : i32
    return %c0_i32, %c0_i32_0 : i32, i32
  }
  func.func @transform_7(%arg0: i32, %arg1: i32) -> (i32, i32) {
    %c0_i32 = arith.constant 0 : i32
    %c0_i32_0 = arith.constant 0 : i32
    %c0_i32_1 = arith.constant 0 : i32
    return %c0_i32, %c0_i32_0 : i32, i32
  }
  func.func @transform_8(%arg0: i32, %arg1: i32) -> (i32, i32, i32) {
    %c0_i32 = arith.constant 0 : i32
    %c0_i32_0 = arith.constant 0 : i32
    return %arg0, %arg1, %c0_i32 : i32, i32, i32
  }
}

</mosaic_0001>

<llo_original>
// kernel: bottleneck_se_forward.6
$region0: #{bottleneck_se_forward.6}
  #allocation0 [shape = 'u32[]', space=smem, size = 0x4, offset = 0x4, fixed_abs, tag = 'smem constant byte address 0x4 - core index']
  #allocation1 [shape = 'u32[144,128]{1,0:T(1,128)}', space=vmem, size = 0x12000, scoped, tag = 'internal scratch']
  %s0 = inlined_call_operand.vmem [shape: bf16[2,64,128], index: 0, kind: input, shape index: {}]
  %s1 = inlined_call_operand.vmem [shape: f32[1,128], index: 1, kind: input, shape index: {}]
  %s2 = inlined_call_operand.vmem [shape: f32[1,128], index: 2, kind: input, shape index: {}]
  %s3 = inlined_call_operand.vmem [shape: bf16[128,128], index: 3, kind: input, shape index: {}]
  %s4 = inlined_call_operand.vmem [shape: f32[2,2,128], index: 4, kind: output, shape index: {0}]
  %s5 = inlined_call_operand.vmem [shape: f32[2,1,128], index: 5, kind: output, shape index: {1}]
  %6 = xla_tuple %s4, %s5
  %s7 = sld [smem:[#allocation0]]
  $region65: #{bottleneck_se_forward.6} parent=0
    _
  %s9 = ssub.s32 1, %s7
  %s10 = scalar_select 0, %s9, %s7
  loop: start=0, step=1, limit=4
  $region2: #{bottleneck_se_forward.6} parent=0 // loop_pre_header
    _
  $region3: #{bottleneck_se_forward.6} parent=0 // loop_header
    %s12 = sphi 0, %s16
    %p13 = scmp.ge.s32.totalorder %s12, 4
    %s19 = sphi 0, %s31
    %s20 = sphi 0, %s27
    %s21 = sphi 0, %s19
    %s22 = sphi 0, %s20
    %s23 = sphi 0, %s21
    %s24 = sphi 0, %s22
    %s36 = sphi 0, %s38
    %s39 = sphi 0, %s36
    %s40 = sphi 0, %s39
    %s56 = sphi 0, %s40
    %s60 = sphi 0, %s60
    %s62 = sphi 0, %s60
    %s63 = sphi 0, %s62
    %s77 = sphi 0, %s63
    %s81 = sphi 0, %s81
    %s83 = sphi 0, %s81
    %s84 = sphi 0, %s83
    %s98 = sphi 0, %s84
    %s102 = sphi 0, %s102
    %s104 = sphi 0, %s102
    %s105 = sphi 0, %s104
    %s119 = sphi 0, %s105
    %s125 = sphi 0, %s127
    %s128 = sphi 0, %s125
    %s129 = sphi 0, %s128
    %s145 = sphi 0, %s129
    %s151 = sphi 0, %s153
    %s154 = sphi 0, %s151
    %s155 = sphi 0, %s154
    %s171 = sphi 0, %s155
  $region4: #{bottleneck_se_forward.6} parent=0 // loop_header_branch
    %15 = sbr.rel (%p13) target = $region8
  $region5: #{bottleneck_se_forward.6} parent=0 // loop_body
    %s17 = ssub.s32 %s12, 1
    %s18 = ssub.s32 %s12, 2
    %s25 = sadd.s32 1, %s20
    %p26 = scmp.ge.s32.totalorder %s25, 1
    %s27 = scalar_select %p26, 0, %s25
    %s28 = sadd.s32 1, %s19
    %s29 = scalar_select %p26, %s28, %s19
    %p30 = scmp.ge.s32.totalorder %s29, 2
    %s31 = scalar_select %p30, 0, %s29
    %s32 = ssub.s32 %s19, %s31
    %s33 = ssub.s32 %s20, %s27
    %s34 = sor.u32 %s32, %s33
    %p35 = scmp.eq.s32.totalorder %s34, 0
    %s37 = sadd.s32 %s36, 1
    %s38 = scalar_select %p35, %s36, %s37
    %p41 = pneg %p35
    %p42 = scmp.eq.s32.totalorder %s12, 1
    %p43 = por %p41, %p42
    %p44 = scmp.ne.s32.totalorder %s36, %s39
    %p45 = scmp.eq.s32.totalorder %s12, 0
    %p46 = por %p44, %p45
    %p47 = scmp.ne.s32.totalorder %s36, %s39
    %p48 = scmp.eq.s32.totalorder %s17, 1
    %p49 = por %p47, %p48
    %p50 = scmp.ne.s32.totalorder %s39, %s40
    %p51 = scmp.eq.s32.totalorder %s17, 0
    %p52 = por %p50, %p51
    %p53 = scmp.ne.s32.totalorder %s39, %s40
    %p54 = scmp.eq.s32.totalorder %s18, 1
    %p55 = por %p53, %p54
    %p57 = scmp.ne.s32.totalorder %s40, %s56
    %p58 = scmp.eq.s32.totalorder %s18, 0
    %p59 = por %p57, %p58
    %s61 = sadd.s32 %s60, 1
    %p64 = scmp.eq.s32.totalorder %s12, 1
    %p65 = scmp.ne.s32.totalorder %s60, %s62
    %p66 = scmp.eq.s32.totalorder %s12, 0
    %p67 = por %p65, %p66
    %p68 = scmp.ne.s32.totalorder %s60, %s62
    %p69 = scmp.eq.s32.totalorder %s17, 1
    %p70 = por %p68, %p69
    %p71 = scmp.ne.s32.totalorder %s62, %s63
    %p72 = scmp.eq.s32.totalorder %s17, 0
    %p73 = por %p71, %p72
    %p74 = scmp.ne.s32.totalorder %s62, %s63
    %p75 = scmp.eq.s32.totalorder %s18, 1
    %p76 = por %p74, %p75
    %p78 = scmp.ne.s32.totalorder %s63, %s77
    %p79 = scmp.eq.s32.totalorder %s18, 0
    %p80 = por %p78, %p79
    %s82 = sadd.s32 %s81, 1
    %p85 = scmp.eq.s32.totalorder %s12, 1
    %p86 = scmp.ne.s32.totalorder %s81, %s83
    %p87 = scmp.eq.s32.totalorder %s12, 0
    %p88 = por %p86, %p87
    %p89 = scmp.ne.s32.totalorder %s81, %s83
    %p90 = scmp.eq.s32.totalorder %s17, 1
    %p91 = por %p89, %p90
    %p92 = scmp.ne.s32.totalorder %s83, %s84
    %p93 = scmp.eq.s32.totalorder %s17, 0
    %p94 = por %p92, %p93
    %p95 = scmp.ne.s32.totalorder %s83, %s84
    %p96 = scmp.eq.s32.totalorder %s18, 1
    %p97 = por %p95, %p96
    %p99 = scmp.ne.s32.totalorder %s84, %s98
    %p100 = scmp.eq.s32.totalorder %s18, 0
    %p101 = por %p99, %p100
    %s103 = sadd.s32 %s102, 1
    %p106 = scmp.eq.s32.totalorder %s12, 1
    %p107 = scmp.ne.s32.totalorder %s102, %s104
    %p108 = scmp.eq.s32.totalorder %s12, 0
    %p109 = por %p107, %p108
    %p110 = scmp.ne.s32.totalorder %s102, %s104
    %p111 = scmp.eq.s32.totalorder %s17, 1
    %p112 = por %p110, %p111
    %p113 = scmp.ne.s32.totalorder %s104, %s105
    %p114 = scmp.eq.s32.totalorder %s17, 0
    %p115 = por %p113, %p114
    %p116 = scmp.ne.s32.totalorder %s104, %s105
    %p117 = scmp.eq.s32.totalorder %s18, 1
    %p118 = por %p116, %p117
    %p120 = scmp.ne.s32.totalorder %s105, %s119
    %p121 = scmp.eq.s32.totalorder %s18, 0
    %p122 = por %p120, %p121
    %s123 = ssub.s32 %s19, %s31
    %p124 = scmp.eq.s32.totalorder %s123, 0
    %s126 = sadd.s32 %s125, 1
    %s127 = scalar_select %p124, %s125, %s126
    %p130 = pneg %p124
    %p131 = scmp.eq.s32.totalorder %s12, 1
    %p132 = por %p130, %p131
    %p133 = scmp.ne.s32.totalorder %s125, %s128
    %p134 = scmp.eq.s32.totalorder %s12, 0
    %p135 = por %p133, %p134
    %p136 = scmp.ne.s32.totalorder %s125, %s128
    %p137 = scmp.eq.s32.totalorder %s17, 1
    %p138 = por %p136, %p137
    %p139 = scmp.ne.s32.totalorder %s128, %s129
    %p140 = scmp.eq.s32.totalorder %s17, 0
    %p141 = por %p139, %p140
    %p142 = scmp.ne.s32.totalorder %s128, %s129
    %p143 = scmp.eq.s32.totalorder %s18, 1
    %p144 = por %p142, %p143
    %p146 = scmp.ne.s32.totalorder %s129, %s145
    %p147 = scmp.eq.s32.totalorder %s18, 0
    %p148 = por %p146, %p147
    %s149 = ssub.s32 %s19, %s31
    %p150 = scmp.eq.s32.totalorder %s149, 0
    %s152 = sadd.s32 %s151, 1
    %s153 = scalar_select %p150, %s151, %s152
    %p156 = pneg %p150
    %p157 = scmp.eq.s32.totalorder %s12, 1
    %p158 = por %p156, %p157
    %p159 = scmp.ne.s32.totalorder %s151, %s154
    %p160 = scmp.eq.s32.totalorder %s12, 0
    %p161 = por %p159, %p160
    %p162 = scmp.ne.s32.totalorder %s151, %s154
    %p163 = scmp.eq.s32.totalorder %s17, 1
    %p164 = por %p162, %p163
    %p165 = scmp.ne.s32.totalorder %s154, %s155
    %p166 = scmp.eq.s32.totalorder %s17, 0
    %p167 = por %p165, %p166
    %p168 = scmp.ne.s32.totalorder %s154, %s155
    %p169 = scmp.eq.s32.totalorder %s18, 1
    %p170 = por %p168, %p169
    %p172 = scmp.ne.s32.totalorder %s155, %s171
    %p173 = scmp.eq.s32.totalorder %s18, 0
    %p174 = por %p172, %p173
    %p175 = scmp.le.s32.totalorder 1, %s12
    %p176 = scmp.lt.s32.totalorder %s12, 3
    %p177 = pnand %p175, %p176
    %p178 = pneg %p177
    // Predicated region
    $region9: #{bottleneck_se_forward.6} parent=5 // pred_check
      _
    $region10: #{bottleneck_se_forward.6} parent=5 // pred_check_branch
      %180 = sbr.rel (%p177) target = $region12
    $region11: #{bottleneck_se_forward.6} parent=5 // pred_region
      %s181 = ssub.s32 %s12, 1
      // Predicated region
      $region13: #{bottleneck_se_forward.6} parent=11 // pred_check
        %p182 = pneg %p73
      $region14: #{bottleneck_se_forward.6} parent=11 // pred_check_branch
        %184 = sbr.rel (%p182) target = $region16
      $region15: #{bottleneck_se_forward.6} parent=11 // pred_region
        _
      $region16: #{bottleneck_se_forward.6} parent=11 // pred_fallthru
        _
      // Predicated region
      $region17: #{bottleneck_se_forward.6} parent=11 // pred_check
        %p185 = pneg %p94
      $region18: #{bottleneck_se_forward.6} parent=11 // pred_check_branch
        %187 = sbr.rel (%p185) target = $region20
      $region19: #{bottleneck_se_forward.6} parent=11 // pred_region
        _
      $region20: #{bottleneck_se_forward.6} parent=11 // pred_fallthru
        _
      // Predicated region
      $region21: #{bottleneck_se_forward.6} parent=11 // pred_check
        %p188 = pneg %p115
      $region22: #{bottleneck_se_forward.6} parent=11 // pred_check_branch
        %190 = sbr.rel (%p188) target = $region24
      $region23: #{bottleneck_se_forward.6} parent=11 // pred_region
        _
      $region24: #{bottleneck_se_forward.6} parent=11 // pred_fallthru
        _
    $region12: #{bottleneck_se_forward.6} parent=5 // pred_fallthru
      _
    %p191 = scmp.lt.s32.totalorder %s12, 2
    // Predicated region
    $region25: #{bottleneck_se_forward.6} parent=5 // pred_check
      %p192 = pneg %p191
    $region26: #{bottleneck_se_forward.6} parent=5 // pred_check_branch
      %194 = sbr.rel (%p192) target = $region28
    $region27: #{bottleneck_se_forward.6} parent=5 // pred_region
      // Predicated region
      $region29: #{bottleneck_se_forward.6} parent=27 // pred_check
        %p195 = pneg %p46
      $region30: #{bottleneck_se_forward.6} parent=27 // pred_check_branch
        %197 = sbr.rel (%p195) target = $region32
      $region31: #{bottleneck_se_forward.6} parent=27 // pred_region
        %s198 = smul.u32 8, %s20
        %p199 = scmp.lt.s32.totalorder %s19, 1
        %s200 = scalar_select %p199, %s19, 1
        %p201 = scmp.lt.s32.totalorder %s198, 7
        %s202 = scalar_select %p201, %s198, 7
        %s203 = smul.addr %s200, 8
        %s204 = sadd.s32 %s202, %s203
        %s205 = smul.addr %s204, 4
        %s206 = scalar_lea.vmem %s0, %s205
        %s207 = smul.u32 8, %s20
      $region32: #{bottleneck_se_forward.6} parent=27 // pred_fallthru
        _
    $region28: #{bottleneck_se_forward.6} parent=5 // pred_fallthru
      _
    %p208 = scmp.le.s32.totalorder 1, %s12
    %p209 = scmp.lt.s32.totalorder %s12, 3
    %p210 = pnand %p208, %p209
    %p211 = pneg %p210
    // Predicated region
    $region33: #{bottleneck_se_forward.6} parent=5 // pred_check
      _
    $region34: #{bottleneck_se_forward.6} parent=5 // pred_check_branch
      %213 = sbr.rel (%p210) target = $region36
    $region35: #{bottleneck_se_forward.6} parent=5 // pred_region
      %s214 = ssub.s32 %s12, 1
      %s215 = smul.u32 8, %s22
      %p216 = scmp.lt.s32.totalorder %s21, 1
      %s217 = scalar_select %p216, %s21, 1
      %p218 = scmp.lt.s32.totalorder %s215, 7
      %s219 = scalar_select %p218, %s215, 7
      %s220 = smul.addr %s217, 8
      %s221 = sadd.s32 %s219, %s220
      %s222 = smul.addr %s221, 4
      %s223 = scalar_lea.vmem %s0, %s222
      %p224 = pneg %p52
      %p225 = pneg %p49
      %p226 = pneg %p73
      %p227 = pneg %p70
      %p228 = pneg %p94
      %p229 = pneg %p91
      %p230 = pneg %p115
      %p231 = pneg %p112
      %p232 = pneg %p141
      %p233 = pneg %p138
      %p234 = scmp.lt.s32.totalorder %s21, 1
      %s235 = scalar_select %p234, %s21, 1
      %s236 = smul.addr %s235, 2
      %s237 = scalar_lea.vmem %s4, %s236
      %p238 = pneg %p167
      %p239 = pneg %p164
      %p240 = scmp.lt.s32.totalorder %s21, 1
      %s241 = scalar_select %p240, %s21, 1
      %s242 = scalar_lea.vmem %s5, %s241
      %s243 = smul.u32 8, %s22
      %p244 = scmp.lt.s32.totalorder %s21, 1
      %s245 = scalar_select %p244, %s21, 1
      %p246 = scmp.lt.s32.totalorder %s243, 7
      %s247 = scalar_select %p246, %s243, 7
      %s248 = smul.addr %s245, 8
      %s249 = sadd.s32 %s247, %s248
      %s250 = smul.addr %s249, 4
      %s251 = scalar_lea.vmem %s0, %s250
      %s252 = smul.u32 8, %s22
      %p253 = scmp.lt.s32.totalorder %s21, 1
      %s254 = scalar_select %p253, %s21, 1
      %s255 = smul.addr %s254, 2
      %s256 = scalar_lea.vmem %s4, %s255
      %p257 = scmp.lt.s32.totalorder %s21, 1
      %s258 = scalar_select %p257, %s21, 1
      %s259 = scalar_lea.vmem %s5, %s258
      %v261 = vld [vmem:[%s251] sm:$0xf]
      %v262 = vld [vmem:[%s251 + $0x4] sm:$0xf]
      %v263 = vld [vmem:[%s251 + $0x8] sm:$0xf]
      %v264 = vld [vmem:[%s251 + $0xc] sm:$0xf]
      %v265 = vld [vmem:[%s251 + $0x10] sm:$0xf]
      %v266 = vld [vmem:[%s251 + $0x14] sm:$0xf]
      %v267 = vld [vmem:[%s251 + $0x18] sm:$0xf]
      %v268 = vld [vmem:[%s251 + $0x1c] sm:$0xf]
      %v269 = vunpack.c.l.bf16 %v261
      %v270 = vunpack.c.l.bf16 %v262
      %v271 = vunpack.c.l.bf16 %v263
      %v272 = vunpack.c.l.bf16 %v264
      %v273 = vunpack.c.l.bf16 %v265
      %v274 = vunpack.c.l.bf16 %v266
      %v275 = vunpack.c.l.bf16 %v267
      %v276 = vunpack.c.l.bf16 %v268
      %v277 = vld [vmem:[%s1] sm:$0x1]
      %v279 = vlaneseq
      %v280 = vshrl.u32 %v279, 7
      %v281 = vsub.s32 0, %v280
      %v282 = vrot.slane %v277, %v281
      %v284 = vmul.f32 %v269, %v282
      %v285 = vmul.f32 %v270, %v282
      %v286 = vmul.f32 %v271, %v282
      %v287 = vmul.f32 %v272, %v282
      %v288 = vmul.f32 %v273, %v282
      %v289 = vmul.f32 %v274, %v282
      %v290 = vmul.f32 %v275, %v282
      %v291 = vmul.f32 %v276, %v282
      %v292 = vld [vmem:[%s2] sm:$0x1]
      %v294 = vlaneseq
      %v295 = vshrl.u32 %v294, 7
      %v296 = vsub.s32 0, %v295
      %v297 = vrot.slane %v292, %v296
      %v299 = vadd.f32 %v284, %v297
      %v300 = vadd.f32 %v285, %v297
      %v301 = vadd.f32 %v286, %v297
      %v302 = vadd.f32 %v287, %v297
      %v303 = vadd.f32 %v288, %v297
      %v304 = vadd.f32 %v289, %v297
      %v305 = vadd.f32 %v290, %v297
      %v306 = vadd.f32 %v291, %v297
      %v307 = vmax.f32 %v299, 0.0
      %v308 = vmax.f32 %v300, 0.0
      %v309 = vmax.f32 %v301, 0.0
      %v310 = vmax.f32 %v302, 0.0
      %v311 = vmax.f32 %v303, 0.0
      %v312 = vmax.f32 %v304, 0.0
      %v313 = vmax.f32 %v305, 0.0
      %v314 = vmax.f32 %v306, 0.0
      %v315 = vpack.c.bf16 %v308, %v307
      %v316 = vpack.c.bf16 %v310, %v309
      %v317 = vpack.c.bf16 %v312, %v311
      %v318 = vpack.c.bf16 %v314, %v313
      %v319 = vld [vmem:[%s3] sm:$0xf]
      %v320 = vld [vmem:[%s3 + $0x4] sm:$0xf]
      %v321 = vld [vmem:[%s3 + $0x8] sm:$0xf]
      %v322 = vld [vmem:[%s3 + $0xc] sm:$0xf]
      %v323 = vld [vmem:[%s3 + $0x10] sm:$0xf]
      %v324 = vld [vmem:[%s3 + $0x14] sm:$0xf]
      %v325 = vld [vmem:[%s3 + $0x18] sm:$0xf]
      %v326 = vld [vmem:[%s3 + $0x1c] sm:$0xf]
      %v327 = vld [vmem:[%s3 + $0x20] sm:$0xf]
      %v328 = vld [vmem:[%s3 + $0x24] sm:$0xf]
      %v329 = vld [vmem:[%s3 + $0x28] sm:$0xf]
      %v330 = vld [vmem:[%s3 + $0x2c] sm:$0xf]
      %v331 = vld [vmem:[%s3 + $0x30] sm:$0xf]
      %v332 = vld [vmem:[%s3 + $0x34] sm:$0xf]
      %v333 = vld [vmem:[%s3 + $0x38] sm:$0xf]
      %v334 = vld [vmem:[%s3 + $0x3c] sm:$0xf]
      %v351 = vunpack.c.l.b16 %v319
      %v352 = vunpack.c.l.b16 %v320
      %v353 = vunpack.c.l.b16 %v321
      %v354 = vunpack.c.l.b16 %v322
      %v355 = vunpack.c.l.b16 %v323
      %v356 = vunpack.c.l.b16 %v324
      %v357 = vunpack.c.l.b16 %v325
      %v358 = vunpack.c.l.b16 %v326
      %v359 = vunpack.c.l.b16 %v327
      %v360 = vunpack.c.l.b16 %v328
      %v361 = vunpack.c.l.b16 %v329
      %v362 = vunpack.c.l.b16 %v330
      %v363 = vunpack.c.l.b16 %v331
      %v364 = vunpack.c.l.b16 %v332
      %v365 = vunpack.c.l.b16 %v333
      %v366 = vunpack.c.l.b16 %v334
      %v367 = vpack.c.b16 %v352, %v351
      %v368 = vpack.c.b16 %v354, %v353
      %v369 = vpack.c.b16 %v356, %v355
      %v370 = vpack.c.b16 %v358, %v357
      %v371 = vpack.c.b16 %v360, %v359
      %v372 = vpack.c.b16 %v362, %v361
      %v373 = vpack.c.b16 %v364, %v363
      %v374 = vpack.c.b16 %v366, %v365
      %383 = vmatprep.subr.bf16.mxu0 0
      %384 = vmatpush1.bf16.msra.mxu0 %v367
      %385 = vmatprep.subr.bf16.mxu0 0
      %386 = vmatpush1.bf16.msra.mxu0 %v368
      %387 = vmatprep.subr.bf16.mxu0 0
      %388 = vmatpush1.bf16.msra.mxu0 %v369
      %389 = vmatprep.subr.bf16.mxu0 0
      %390 = vmatpush1.bf16.msra.mxu0 %v370
      %391 = vmatprep.subr.bf16.mxu0 0
      %392 = vmatpush1.bf16.msra.mxu0 %v371
      %393 = vmatprep.subr.bf16.mxu0 0
      %394 = vmatpush1.bf16.msra.mxu0 %v372
      %395 = vmatprep.subr.bf16.mxu0 0
      %396 = vmatpush1.bf16.msra.mxu0 %v373
      %397 = vmatprep.subr.bf16.mxu0 0
      %398 = vmatpush1.bf16.msra.mxu0 %v374
      %399 = vmatprep.subr.bf16.mxu0 0
      %400 = vmatpush1.bf16.msra.mxu0 0
      %401 = vmatprep.subr.bf16.mxu0 0
      %402 = vmatpush1.bf16.msra.mxu0 0
      %403 = vmatprep.subr.bf16.mxu0 0
      %404 = vmatpush1.bf16.msra.mxu0 0
      %405 = vmatprep.subr.bf16.mxu0 0
      %406 = vmatpush1.bf16.msra.mxu0 0
      %407 = vmatprep.subr.bf16.mxu0 0
      %408 = vmatpush1.bf16.msra.mxu0 0
      %409 = vmatprep.subr.bf16.mxu0 0
      %410 = vmatpush1.bf16.msra.mxu0 0
      %411 = vmatprep.subr.bf16.mxu0 0
      %412 = vmatpush1.bf16.msra.mxu0 0
      %413 = vmatprep.subr.bf16.mxu0 0
      %414 = vmatpush1.bf16.msra.mxu0 0
      %415 = vmatprep.mubr.bf16.mxu0 0
      %416 = vmatmul.mubr.bf16.gmra.mrb[0].mxu0 %v315
      %v417 = vpop.f32.mrb[0].mxu0
      %v418 = vadd.f32 0.0, %v417
      %v419 = vpop.f32.mrb[0].mxu0
      %v420 = vpop.f32.mrb[0].mxu0
      %v421 = vadd.f32 0.0, %v420
      %v422 = vpop.f32.mrb[0].mxu0
      %423 = vmatprep.mubr.bf16.mxu0 0
      %424 = vmatmul.mubr.bf16.gmra.mrb[0].mxu0 %v316
      %v425 = vpop.f32.mrb[0].mxu0
      %v426 = vadd.f32 0.0, %v425
      %v427 = vpop.f32.mrb[0].mxu0
      %v428 = vpop.f32.mrb[0].mxu0
      %v429 = vadd.f32 0.0, %v428
      %v430 = vpop.f32.mrb[0].mxu0
      %431 = vmatprep.mubr.bf16.mxu0 0
      %432 = vmatmul.mubr.bf16.gmra.mrb[0].mxu0 %v317
      %v433 = vpop.f32.mrb[0].mxu0
      %v434 = vadd.f32 0.0, %v433
      %v435 = vpop.f32.mrb[0].mxu0
      %v436 = vpop.f32.mrb[0].mxu0
      %v437 = vadd.f32 0.0, %v436
      %v438 = vpop.f32.mrb[0].mxu0
      %439 = vmatprep.mubr.bf16.mxu0 0
      %440 = vmatmul.mubr.bf16.gmra.mrb[0].mxu0 %v318
      %v441 = vpop.f32.mrb[0].mxu0
      %v442 = vadd.f32 0.0, %v441
      %v443 = vpop.f32.mrb[0].mxu0
      %v444 = vpop.f32.mrb[0].mxu0
      %v445 = vadd.f32 0.0, %v444
      %v446 = vpop.f32.mrb[0].mxu0
      %447 = vdwg.mxu0
      %v448 = vadd.f32 %v418, %v421
      %v449 = vadd.f32 %v448, %v426
      %v450 = vadd.f32 %v449, %v429
      %v451 = vadd.f32 %v450, %v434
      %v452 = vadd.f32 %v451, %v437
      %v453 = vadd.f32 %v452, %v442
      %v454 = vadd.f32 %v453, %v445
      %v455 = vrot.slane %v454, 4
      %v456 = vadd.f32 %v454, %v455
      %v457 = vrot.slane %v456, 2
      %v458 = vadd.f32 %v456, %v457
      %v459 = vrot.slane %v458, 1
      %v460 = vadd.f32 %v458, %v459
      %v461 = vmul.f32 %v418, %v418
      %v462 = vmul.f32 %v421, %v421
      %v463 = vmul.f32 %v426, %v426
      %v464 = vmul.f32 %v429, %v429
      %v465 = vmul.f32 %v434, %v434
      %v466 = vmul.f32 %v437, %v437
      %v467 = vmul.f32 %v442, %v442
      %v468 = vmul.f32 %v445, %v445
      %v469 = vadd.f32 %v461, %v462
      %v470 = vadd.f32 %v469, %v463
      %v471 = vadd.f32 %v470, %v464
      %v472 = vadd.f32 %v471, %v465
      %v473 = vadd.f32 %v472, %v466
      %v474 = vadd.f32 %v473, %v467
      %v475 = vadd.f32 %v474, %v468
      %v476 = vrot.slane %v475, 4
      %v477 = vadd.f32 %v475, %v476
      %v478 = vrot.slane %v477, 2
      %v479 = vadd.f32 %v477, %v478
      %v480 = vrot.slane %v479, 1
      %v481 = vadd.f32 %v479, %v480
      %p482 = scmp.eq.s32.totalorder %s22, 0
      // Predicated region
      $region37: #{bottleneck_se_forward.6} parent=35 // pred_check
        %p483 = pneg %p482
      $region38: #{bottleneck_se_forward.6} parent=35 // pred_check_branch
        %485 = sbr.rel (%p483) target = $region40
      $region39: #{bottleneck_se_forward.6} parent=35 // pred_region
        %486 = vst [vmem:[%s256] sm:$0x1] %v460
        %487 = vst [vmem:[%s256 + $0x1] sm:$0x1] %v481
        %488 = vst [vmem:[%s259] sm:$0x1] %v460
      $region40: #{bottleneck_se_forward.6} parent=35 // pred_fallthru
        _
      %p489 = scmp.ne.s32.totalorder %s22, 0
      // Predicated region
      $region41: #{bottleneck_se_forward.6} parent=35 // pred_check
        %p490 = pneg %p489
      $region42: #{bottleneck_se_forward.6} parent=35 // pred_check_branch
        %492 = sbr.rel (%p490) target = $region44
      $region43: #{bottleneck_se_forward.6} parent=35 // pred_region
        %v493 = vld [vmem:[%s256] sm:$0x1]
        %v494 = vadd.f32 %v493, %v460
        %495 = vst [vmem:[%s256] sm:$0x1] %v494
        %v496 = vld [vmem:[%s256 + $0x1] sm:$0x1]
        %v497 = vadd.f32 %v496, %v481
        %498 = vst [vmem:[%s256 + $0x1] sm:$0x1] %v497
        %v499 = vld [vmem:[%s259] sm:$0x1]
        %v500 = vadd.f32 %v499, %v460
        %501 = vst [vmem:[%s259] sm:$0x1] %v500
      $region44: #{bottleneck_se_forward.6} parent=35 // pred_fallthru
        _
      %p502 = scmp.lt.s32.totalorder %s21, 1
      %s503 = scalar_select %p502, %s21, 1
      %s504 = smul.addr %s503, 2
      %s505 = scalar_lea.vmem %s4, %s504
      %p506 = scmp.lt.s32.totalorder %s21, 1
      %s507 = scalar_select %p506, %s21, 1
      %s508 = scalar_lea.vmem %s5, %s507
      // Predicated region
      $region45: #{bottleneck_se_forward.6} parent=35 // pred_check
        %p509 = pneg %p138
      $region46: #{bottleneck_se_forward.6} parent=35 // pred_check_branch
        %511 = sbr.rel (%p509) target = $region48
      $region47: #{bottleneck_se_forward.6} parent=35 // pred_region
        _
      $region48: #{bottleneck_se_forward.6} parent=35 // pred_fallthru
        _
      // Predicated region
      $region49: #{bottleneck_se_forward.6} parent=35 // pred_check
        %p512 = pneg %p164
      $region50: #{bottleneck_se_forward.6} parent=35 // pred_check_branch
        %514 = sbr.rel (%p512) target = $region52
      $region51: #{bottleneck_se_forward.6} parent=35 // pred_region
        _
      $region52: #{bottleneck_se_forward.6} parent=35 // pred_fallthru
        _
    $region36: #{bottleneck_se_forward.6} parent=5 // pred_fallthru
      _
    %p515 = scmp.le.s32.totalorder 2, %s12
    // Predicated region
    $region53: #{bottleneck_se_forward.6} parent=5 // pred_check
      %p516 = pneg %p515
    $region54: #{bottleneck_se_forward.6} parent=5 // pred_check_branch
      %518 = sbr.rel (%p516) target = $region56
    $region55: #{bottleneck_se_forward.6} parent=5 // pred_region
      %s519 = ssub.s32 %s12, 2
      // Predicated region
      $region57: #{bottleneck_se_forward.6} parent=55 // pred_check
        %p520 = pneg %p144
      $region58: #{bottleneck_se_forward.6} parent=55 // pred_check_branch
        %522 = sbr.rel (%p520) target = $region60
      $region59: #{bottleneck_se_forward.6} parent=55 // pred_region
        %p523 = scmp.lt.s32.totalorder %s23, 1
        %s524 = scalar_select %p523, %s23, 1
        %s525 = smul.addr %s524, 2
        %s526 = scalar_lea.vmem %s4, %s525
      $region60: #{bottleneck_se_forward.6} parent=55 // pred_fallthru
        _
      // Predicated region
      $region61: #{bottleneck_se_forward.6} parent=55 // pred_check
        %p527 = pneg %p170
      $region62: #{bottleneck_se_forward.6} parent=55 // pred_check_branch
        %529 = sbr.rel (%p527) target = $region64
      $region63: #{bottleneck_se_forward.6} parent=55 // pred_region
        %p530 = scmp.lt.s32.totalorder %s23, 1
        %s531 = scalar_select %p530, %s23, 1
        %s532 = scalar_lea.vmem %s5, %s531
      $region64: #{bottleneck_se_forward.6} parent=55 // pred_fallthru
        _
    $region56: #{bottleneck_se_forward.6} parent=5 // pred_fallthru
      _
  $region6: #{bottleneck_se_forward.6} parent=0 // loop_footer
    %s16 = sadd.s32 1, %s12
  $region7: #{bottleneck_se_forward.6} parent=0 // loop_footer_branch
    %11 = sbr.rel target = $region3
  $region8: #{bottleneck_se_forward.6} parent=0 // loop_exit
    _

// kernel: bottleneck_se_forward.4
$region0: #{bottleneck_se_forward.4}
  #allocation0 [shape = 'u32[]', space=smem, size = 0x4, offset = 0x4, fixed_abs, tag = 'smem constant byte address 0x4 - core index']
  #allocation1 [shape = 'u32[144,128]{1,0:T(1,128)}', space=vmem, size = 0x12000, scoped, tag = 'internal scratch']
  %s0 = inlined_call_operand.vmem [shape: bf16[128,128], index: 0, kind: input, shape index: {}]
  %s1 = inlined_call_operand.vmem [shape: bf16[128,128], index: 1, kind: input, shape index: {}]
  %s2 = inlined_call_operand.vmem [shape: bf16[128,128], index: 2, kind: output, shape index: {0}]
  %s3 = inlined_call_operand.vmem [shape: f32[1,2,128], index: 3, kind: output, shape index: {1}]
  %4 = xla_tuple %s2, %s3
  %s5 = sld [smem:[#allocation0]]
  $region26: #{bottleneck_se_forward.4} parent=0
    _
  %s7 = ssub.s32 1, %s5
  %s8 = scalar_select 0, %s7, %s5
  // Predicated region
  $region2: #{bottleneck_se_forward.4} parent=0 // pred_check
    _
  $region3: #{bottleneck_se_forward.4} parent=0 // pred_check_branch
    %10 = sbr.rel (0) target = $region5
  $region4: #{bottleneck_se_forward.4} parent=0 // pred_region
    _
  $region5: #{bottleneck_se_forward.4} parent=0 // pred_fallthru
    _
  // Predicated region
  $region6: #{bottleneck_se_forward.4} parent=0 // pred_check
    _
  $region7: #{bottleneck_se_forward.4} parent=0 // pred_check_branch
    %12 = sbr.rel (0) target = $region9
  $region8: #{bottleneck_se_forward.4} parent=0 // pred_region
    _
  $region9: #{bottleneck_se_forward.4} parent=0 // pred_fallthru
    _
  %v14 = vld [vmem:[%s0] sm:$0xf]
  %v15 = vld [vmem:[%s0 + $0x4] sm:$0xf]
  %v16 = vld [vmem:[%s0 + $0x8] sm:$0xf]
  %v17 = vld [vmem:[%s0 + $0xc] sm:$0xf]
  %v18 = vld [vmem:[%s0 + $0x10] sm:$0xf]
  %v19 = vld [vmem:[%s0 + $0x14] sm:$0xf]
  %v20 = vld [vmem:[%s0 + $0x18] sm:$0xf]
  %v21 = vld [vmem:[%s0 + $0x1c] sm:$0xf]
  %v22 = vld [vmem:[%s0 + $0x20] sm:$0xf]
  %v23 = vld [vmem:[%s0 + $0x24] sm:$0xf]
  %v24 = vld [vmem:[%s0 + $0x28] sm:$0xf]
  %v25 = vld [vmem:[%s0 + $0x2c] sm:$0xf]
  %v26 = vld [vmem:[%s0 + $0x30] sm:$0xf]
  %v27 = vld [vmem:[%s0 + $0x34] sm:$0xf]
  %v28 = vld [vmem:[%s0 + $0x38] sm:$0xf]
  %v29 = vld [vmem:[%s0 + $0x3c] sm:$0xf]
  %v30 = vld [vmem:[%s1] sm:$0xf]
  %v31 = vld [vmem:[%s1 + $0x4] sm:$0xf]
  %v32 = vld [vmem:[%s1 + $0x8] sm:$0xf]
  %v33 = vld [vmem:[%s1 + $0xc] sm:$0xf]
  %v34 = vld [vmem:[%s1 + $0x10] sm:$0xf]
  %v35 = vld [vmem:[%s1 + $0x14] sm:$0xf]
  %v36 = vld [vmem:[%s1 + $0x18] sm:$0xf]
  %v37 = vld [vmem:[%s1 + $0x1c] sm:$0xf]
  %v38 = vld [vmem:[%s1 + $0x20] sm:$0xf]
  %v39 = vld [vmem:[%s1 + $0x24] sm:$0xf]
  %v40 = vld [vmem:[%s1 + $0x28] sm:$0xf]
  %v41 = vld [vmem:[%s1 + $0x2c] sm:$0xf]
  %v42 = vld [vmem:[%s1 + $0x30] sm:$0xf]
  %v43 = vld [vmem:[%s1 + $0x34] sm:$0xf]
  %v44 = vld [vmem:[%s1 + $0x38] sm:$0xf]
  %v45 = vld [vmem:[%s1 + $0x3c] sm:$0xf]
  %v62 = vunpack.c.l.b16 %v14
  %v63 = vunpack.c.l.b16 %v15
  %v64 = vunpack.c.l.b16 %v16
  %v65 = vunpack.c.l.b16 %v17
  %v66 = vunpack.c.l.b16 %v18
  %v67 = vunpack.c.l.b16 %v19
  %v68 = vunpack.c.l.b16 %v20
  %v69 = vunpack.c.l.b16 %v21
  %v70 = vunpack.c.l.b16 %v22
  %v71 = vunpack.c.l.b16 %v23
  %v72 = vunpack.c.l.b16 %v24
  %v73 = vunpack.c.l.b16 %v25
  %v74 = vunpack.c.l.b16 %v26
  %v75 = vunpack.c.l.b16 %v27
  %v76 = vunpack.c.l.b16 %v28
  %v77 = vunpack.c.l.b16 %v29
  %v78 = vpack.c.b16 %v63, %v62
  %v79 = vpack.c.b16 %v65, %v64
  %v80 = vpack.c.b16 %v67, %v66
  %v81 = vpack.c.b16 %v69, %v68
  %v82 = vpack.c.b16 %v71, %v70
  %v83 = vpack.c.b16 %v73, %v72
  %v84 = vpack.c.b16 %v75, %v74
  %v85 = vpack.c.b16 %v77, %v76
  %v110 = vunpack.c.l.b16 %v30
  %v111 = vunpack.c.l.b16 %v31
  %v112 = vunpack.c.l.b16 %v32
  %v113 = vunpack.c.l.b16 %v33
  %v114 = vunpack.c.l.b16 %v34
  %v115 = vunpack.c.l.b16 %v35
  %v116 = vunpack.c.l.b16 %v36
  %v117 = vunpack.c.l.b16 %v37
  %v118 = vunpack.c.l.b16 %v38
  %v119 = vunpack.c.l.b16 %v39
  %v120 = vunpack.c.l.b16 %v40
  %v121 = vunpack.c.l.b16 %v41
  %v122 = vunpack.c.l.b16 %v42
  %v123 = vunpack.c.l.b16 %v43
  %v124 = vunpack.c.l.b16 %v44
  %v125 = vunpack.c.l.b16 %v45
  %v126 = vpack.c.b16 %v111, %v110
  %v127 = vpack.c.b16 %v113, %v112
  %v128 = vpack.c.b16 %v115, %v114
  %v129 = vpack.c.b16 %v117, %v116
  %v130 = vpack.c.b16 %v119, %v118
  %v131 = vpack.c.b16 %v121, %v120
  %v132 = vpack.c.b16 %v123, %v122
  %v133 = vpack.c.b16 %v125, %v124
  %142 = vmatprep.subr.bf16.mxu0 0
  %143 = vmatpush1.bf16.msra.mxu0 %v126
  %144 = vmatprep.subr.bf16.mxu0 0
  %145 = vmatpush1.bf16.msra.mxu0 %v127
  %146 = vmatprep.subr.bf16.mxu0 0
  %147 = vmatpush1.bf16.msra.mxu0 %v128
  %148 = vmatprep.subr.bf16.mxu0 0
  %149 = vmatpush1.bf16.msra.mxu0 %v129
  %150 = vmatprep.subr.bf16.mxu0 0
  %151 = vmatpush1.bf16.msra.mxu0 %v130
  %152 = vmatprep.subr.bf16.mxu0 0
  %153 = vmatpush1.bf16.msra.mxu0 %v131
  %154 = vmatprep.subr.bf16.mxu0 0
  %155 = vmatpush1.bf16.msra.mxu0 %v132
  %156 = vmatprep.subr.bf16.mxu0 0
  %157 = vmatpush1.bf16.msra.mxu0 %v133
  %158 = vmatprep.subr.bf16.mxu0 0
  %159 = vmatpush1.bf16.msra.mxu0 0
  %160 = vmatprep.subr.bf16.mxu0 0
  %161 = vmatpush1.bf16.msra.mxu0 0
  %162 = vmatprep.subr.bf16.mxu0 0
  %163 = vmatpush1.bf16.msra.mxu0 0
  %164 = vmatprep.subr.bf16.mxu0 0
  %165 = vmatpush1.bf16.msra.mxu0 0
  %166 = vmatprep.subr.bf16.mxu0 0
  %167 = vmatpush1.bf16.msra.mxu0 0
  %168 = vmatprep.subr.bf16.mxu0 0
  %169 = vmatpush1.bf16.msra.mxu0 0
  %170 = vmatprep.subr.bf16.mxu0 0
  %171 = vmatpush1.bf16.msra.mxu0 0
  %172 = vmatprep.subr.bf16.mxu0 0
  %173 = vmatpush1.bf16.msra.mxu0 0
  %174 = vmatprep.mubr.bf16.mxu0 0
  %175 = vmatmul.mubr.bf16.gmra.mrb[0].mxu0 %v78
  %v176 = vpop.f32.mrb[0].mxu0
  %v177 = vadd.f32 0.0, %v176
  %v178 = vpop.f32.mrb[0].mxu0
  %v179 = vpop.f32.mrb[0].mxu0
  %v180 = vadd.f32 0.0, %v179
  %v181 = vpop.f32.mrb[0].mxu0
  %182 = vmatprep.mubr.bf16.mxu0 0
  %183 = vmatmul.mubr.bf16.gmra.mrb[0].mxu0 %v79
  %v184 = vpop.f32.mrb[0].mxu0
  %v185 = vadd.f32 0.0, %v184
  %v186 = vpop.f32.mrb[0].mxu0
  %v187 = vpop.f32.mrb[0].mxu0
  %v188 = vadd.f32 0.0, %v187
  %v189 = vpop.f32.mrb[0].mxu0
  %190 = vmatprep.mubr.bf16.mxu0 0
  %191 = vmatmul.mubr.bf16.gmra.mrb[0].mxu0 %v80
  %v192 = vpop.f32.mrb[0].mxu0
  %v193 = vadd.f32 0.0, %v192
  %v194 = vpop.f32.mrb[0].mxu0
  %v195 = vpop.f32.mrb[0].mxu0
  %v196 = vadd.f32 0.0, %v195
  %v197 = vpop.f32.mrb[0].mxu0
  %198 = vmatprep.mubr.bf16.mxu0 0
  %199 = vmatmul.mubr.bf16.gmra.mrb[0].mxu0 %v81
  %v200 = vpop.f32.mrb[0].mxu0
  %v201 = vadd.f32 0.0, %v200
  %v202 = vpop.f32.mrb[0].mxu0
  %v203 = vpop.f32.mrb[0].mxu0
  %v204 = vadd.f32 0.0, %v203
  %v205 = vpop.f32.mrb[0].mxu0
  %206 = vmatprep.mubr.bf16.mxu0 0
  %207 = vmatmul.mubr.bf16.gmra.mrb[0].mxu0 %v82
  %v208 = vpop.f32.mrb[0].mxu0
  %v209 = vadd.f32 0.0, %v208
  %v210 = vpop.f32.mrb[0].mxu0
  %v211 = vpop.f32.mrb[0].mxu0
  %v212 = vadd.f32 0.0, %v211
  %v213 = vpop.f32.mrb[0].mxu0
  %214 = vmatprep.mubr.bf16.mxu0 0
  %215 = vmatmul.mubr.bf16.gmra.mrb[0].mxu0 %v83
  %v216 = vpop.f32.mrb[0].mxu0
  %v217 = vadd.f32 0.0, %v216
  %v218 = vpop.f32.mrb[0].mxu0
  %v219 = vpop.f32.mrb[0].mxu0
  %v220 = vadd.f32 0.0, %v219
  %v221 = vpop.f32.mrb[0].mxu0
  %222 = vmatprep.mubr.bf16.mxu0 0
  %223 = vmatmul.mubr.bf16.gmra.mrb[0].mxu0 %v84
  %v224 = vpop.f32.mrb[0].mxu0
  %v225 = vadd.f32 0.0, %v224
  %v226 = vpop.f32.mrb[0].mxu0
  %v227 = vpop.f32.mrb[0].mxu0
  %v228 = vadd.f32 0.0, %v227
  %v229 = vpop.f32.mrb[0].mxu0
  %230 = vmatprep.mubr.bf16.mxu0 0
  %231 = vmatmul.mubr.bf16.gmra.mrb[0].mxu0 %v85
  %v232 = vpop.f32.mrb[0].mxu0
  %v233 = vadd.f32 0.0, %v232
  %v234 = vpop.f32.mrb[0].mxu0
  %v235 = vpop.f32.mrb[0].mxu0
  %v236 = vadd.f32 0.0, %v235
  %v237 = vpop.f32.mrb[0].mxu0
  %238 = vdwg.mxu0
  %v239 = vpack.c.bf16 %v180, %v177
  %v240 = vpack.c.bf16 %v188, %v185
  %v241 = vpack.c.bf16 %v196, %v193
  %v242 = vpack.c.bf16 %v204, %v201
  %v243 = vpack.c.bf16 %v212, %v209
  %v244 = vpack.c.bf16 %v220, %v217
  %v245 = vpack.c.bf16 %v228, %v225
  %v246 = vpack.c.bf16 %v236, %v233
  %v255 = vunpack.c.l.b16 %v239
  %v256 = vunpack.c.h.b16 %v239
  %v257 = vunpack.c.l.b16 %v240
  %v258 = vunpack.c.h.b16 %v240
  %v259 = vunpack.c.l.b16 %v241
  %v260 = vunpack.c.h.b16 %v241
  %v261 = vunpack.c.l.b16 %v242
  %v262 = vunpack.c.h.b16 %v242
  %v263 = vunpack.c.l.b16 %v243
  %v264 = vunpack.c.h.b16 %v243
  %v265 = vunpack.c.l.b16 %v244
  %v266 = vunpack.c.h.b16 %v244
  %v267 = vunpack.c.l.b16 %v245
  %v268 = vunpack.c.h.b16 %v245
  %v269 = vunpack.c.l.b16 %v246
  %v270 = vunpack.c.h.b16 %v246
  %v271 = vpack.c.b16 %v255, %v255
  %v272 = vpack.c.b16 %v256, %v256
  %v273 = vpack.c.b16 %v257, %v257
  %v274 = vpack.c.b16 %v258, %v258
  %v275 = vpack.c.b16 %v259, %v259
  %v276 = vpack.c.b16 %v260, %v260
  %v277 = vpack.c.b16 %v261, %v261
  %v278 = vpack.c.b16 %v262, %v262
  %v279 = vpack.c.b16 %v263, %v263
  %v280 = vpack.c.b16 %v264, %v264
  %v281 = vpack.c.b16 %v265, %v265
  %v282 = vpack.c.b16 %v266, %v266
  %v283 = vpack.c.b16 %v267, %v267
  %v284 = vpack.c.b16 %v268, %v268
  %v285 = vpack.c.b16 %v269, %v269
  %v286 = vpack.c.b16 %v270, %v270
  %303 = vst [vmem:[%s2] sm:$0xf] %v271
  %304 = vst [vmem:[%s2 + $0x4] sm:$0xf] %v272
  %305 = vst [vmem:[%s2 + $0x8] sm:$0xf] %v273
  %306 = vst [vmem:[%s2 + $0xc] sm:$0xf] %v274
  %307 = vst [vmem:[%s2 + $0x10] sm:$0xf] %v275
  %308 = vst [vmem:[%s2 + $0x14] sm:$0xf] %v276
  %309 = vst [vmem:[%s2 + $0x18] sm:$0xf] %v277
  %310 = vst [vmem:[%s2 + $0x1c] sm:$0xf] %v278
  %311 = vst [vmem:[%s2 + $0x20] sm:$0xf] %v279
  %312 = vst [vmem:[%s2 + $0x24] sm:$0xf] %v280
  %313 = vst [vmem:[%s2 + $0x28] sm:$0xf] %v281
  %314 = vst [vmem:[%s2 + $0x2c] sm:$0xf] %v282
  %315 = vst [vmem:[%s2 + $0x30] sm:$0xf] %v283
  %316 = vst [vmem:[%s2 + $0x34] sm:$0xf] %v284
  %317 = vst [vmem:[%s2 + $0x38] sm:$0xf] %v285
  %318 = vst [vmem:[%s2 + $0x3c] sm:$0xf] %v286
  %v319 = vadd.f32 %v177, %v180
  %v320 = vadd.f32 %v319, %v185
  %v321 = vadd.f32 %v320, %v188
  %v322 = vadd.f32 %v321, %v193
  %v323 = vadd.f32 %v322, %v196
  %v324 = vadd.f32 %v323, %v201
  %v325 = vadd.f32 %v324, %v204
  %v326 = vadd.f32 %v325, %v209
  %v327 = vadd.f32 %v326, %v212
  %v328 = vadd.f32 %v327, %v217
  %v329 = vadd.f32 %v328, %v220
  %v330 = vadd.f32 %v329, %v225
  %v331 = vadd.f32 %v330, %v228
  %v332 = vadd.f32 %v331, %v233
  %v333 = vadd.f32 %v332, %v236
  %v334 = vrot.slane %v333, 4
  %v335 = vadd.f32 %v333, %v334
  %v336 = vrot.slane %v335, 2
  %v337 = vadd.f32 %v335, %v336
  %v338 = vrot.slane %v337, 1
  %v339 = vadd.f32 %v337, %v338
  %340 = vst [vmem:[%s3] sm:$0x1] %v339
  %v341 = vmul.f32 %v177, %v177
  %v342 = vmul.f32 %v180, %v180
  %v343 = vmul.f32 %v185, %v185
  %v344 = vmul.f32 %v188, %v188
  %v345 = vmul.f32 %v193, %v193
  %v346 = vmul.f32 %v196, %v196
  %v347 = vmul.f32 %v201, %v201
  %v348 = vmul.f32 %v204, %v204
  %v349 = vmul.f32 %v209, %v209
  %v350 = vmul.f32 %v212, %v212
  %v351 = vmul.f32 %v217, %v217
  %v352 = vmul.f32 %v220, %v220
  %v353 = vmul.f32 %v225, %v225
  %v354 = vmul.f32 %v228, %v228
  %v355 = vmul.f32 %v233, %v233
  %v356 = vmul.f32 %v236, %v236
  %v357 = vadd.f32 %v341, %v342
  %v358 = vadd.f32 %v357, %v343
  %v359 = vadd.f32 %v358, %v344
  %v360 = vadd.f32 %v359, %v345
  %v361 = vadd.f32 %v360, %v346
  %v362 = vadd.f32 %v361, %v347
  %v363 = vadd.f32 %v362, %v348
  %v364 = vadd.f32 %v363, %v349
  %v365 = vadd.f32 %v364, %v350
  %v366 = vadd.f32 %v365, %v351
  %v367 = vadd.f32 %v366, %v352
  %v368 = vadd.f32 %v367, %v353
  %v369 = vadd.f32 %v368, %v354
  %v370 = vadd.f32 %v369, %v355
  %v371 = vadd.f32 %v370, %v356
  %v372 = vrot.slane %v371, 4
  %v373 = vadd.f32 %v371, %v372
  %v374 = vrot.slane %v373, 2
  %v375 = vadd.f32 %v373, %v374
  %v376 = vrot.slane %v375, 1
  %v377 = vadd.f32 %v375, %v376
  %378 = vst [vmem:[%s3 + $0x1] sm:$0x1] %v377
  // Predicated region
  $region10: #{bottleneck_se_forward.4} parent=0 // pred_check
    _
  $region11: #{bottleneck_se_forward.4} parent=0 // pred_check_branch
    %380 = sbr.rel (0) target = $region13
  $region12: #{bottleneck_se_forward.4} parent=0 // pred_region
    _
  $region13: #{bottleneck_se_forward.4} parent=0 // pred_fallthru
    _
  // Predicated region
  $region14: #{bottleneck_se_forward.4} parent=0 // pred_check
    _
  $region15: #{bottleneck_se_forward.4} parent=0 // pred_check_branch
    %382 = sbr.rel (0) target = $region17
  $region16: #{bottleneck_se_forward.4} parent=0 // pred_region
    _
  $region17: #{bottleneck_se_forward.4} parent=0 // pred_fallthru
    _
  // Predicated region
  $region18: #{bottleneck_se_forward.4} parent=0 // pred_check
    _
  $region19: #{bottleneck_se_forward.4} parent=0 // pred_check_branch
    %384 = sbr.rel (0) target = $region21
  $region20: #{bottleneck_se_forward.4} parent=0 // pred_region
    _
  $region21: #{bottleneck_se_forward.4} parent=0 // pred_fallthru
    _
  // Predicated region
  $region22: #{bottleneck_se_forward.4} parent=0 // pred_check
    _
  $region23: #{bottleneck_se_forward.4} parent=0 // pred_check_branch
    %386 = sbr.rel (0) target = $region25
  $region24: #{bottleneck_se_forward.4} parent=0 // pred_region
    _
  $region25: #{bottleneck_se_forward.4} parent=0 // pred_fallthru
    _

// kernel: bottleneck_se_forward.7
$region0: #{bottleneck_se_forward.7}
  #allocation0 [shape = 'u32[]', space=smem, size = 0x4, offset = 0x4, fixed_abs, tag = 'smem constant byte address 0x4 - core index']
  #allocation1 [shape = 'u32[144,128]{1,0:T(1,128)}', space=vmem, size = 0x12000, scoped, tag = 'internal scratch']
  %s0 = inlined_call_operand.vmem [shape: bf16[2,64,128], index: 0, kind: input, shape index: {}]
  %s1 = inlined_call_operand.vmem [shape: bf16[2,64,128], index: 1, kind: input, shape index: {}]
  %s2 = inlined_call_operand.vmem [shape: f32[2,1,128], index: 2, kind: input, shape index: {}]
  %s3 = inlined_call_operand.vmem [shape: f32[1,128], index: 3, kind: input, shape index: {}]
  %s4 = inlined_call_operand.vmem [shape: f32[1,128], index: 4, kind: input, shape index: {}]
  %s5 = inlined_call_operand.vmem [shape: bf16[128,128], index: 5, kind: input, shape index: {}]
  %s6 = inlined_call_operand.vmem [shape: f32[1,128], index: 6, kind: input, shape index: {}]
  %s7 = inlined_call_operand.vmem [shape: f32[1,128], index: 7, kind: input, shape index: {}]
  %s8 = inlined_call_operand.vmem [shape: f32[2,64,128], index: 8, kind: output, shape index: {}]
  %s9 = sld [smem:[#allocation0]]
  $region65: #{bottleneck_se_forward.7} parent=0
    _
  %s11 = ssub.s32 1, %s9
  %s12 = scalar_select 0, %s11, %s9
  loop: start=0, step=1, limit=4
  $region2: #{bottleneck_se_forward.7} parent=0 // loop_pre_header
    _
  $region3: #{bottleneck_se_forward.7} parent=0 // loop_header
    %s14 = sphi 0, %s18
    %p15 = scmp.ge.s32.totalorder %s14, 4
    %s21 = sphi 0, %s33
    %s22 = sphi 0, %s29
    %s23 = sphi 0, %s21
    %s24 = sphi 0, %s22
    %s25 = sphi 0, %s23
    %s26 = sphi 0, %s24
    %s38 = sphi 0, %s40
    %s41 = sphi 0, %s38
    %s42 = sphi 0, %s41
    %s58 = sphi 0, %s42
    %s66 = sphi 0, %s68
    %s69 = sphi 0, %s66
    %s70 = sphi 0, %s69
    %s86 = sphi 0, %s70
    %s92 = sphi 0, %s94
    %s95 = sphi 0, %s92
    %s96 = sphi 0, %s95
    %s112 = sphi 0, %s96
    %s116 = sphi 0, %s116
    %s118 = sphi 0, %s116
    %s119 = sphi 0, %s118
    %s133 = sphi 0, %s119
    %s137 = sphi 0, %s137
    %s139 = sphi 0, %s137
    %s140 = sphi 0, %s139
    %s154 = sphi 0, %s140
    %s158 = sphi 0, %s158
    %s160 = sphi 0, %s158
    %s161 = sphi 0, %s160
    %s175 = sphi 0, %s161
    %s179 = sphi 0, %s179
    %s181 = sphi 0, %s179
    %s182 = sphi 0, %s181
    %s196 = sphi 0, %s182
    %s200 = sphi 0, %s200
    %s202 = sphi 0, %s200
    %s203 = sphi 0, %s202
    %s217 = sphi 0, %s203
    %s225 = sphi 0, %s227
    %s228 = sphi 0, %s225
    %s229 = sphi 0, %s228
    %s245 = sphi 0, %s229
  $region4: #{bottleneck_se_forward.7} parent=0 // loop_header_branch
    %17 = sbr.rel (%p15) target = $region8
  $region5: #{bottleneck_se_forward.7} parent=0 // loop_body
    %s19 = ssub.s32 %s14, 1
    %s20 = ssub.s32 %s14, 2
    %s27 = sadd.s32 1, %s22
    %p28 = scmp.ge.s32.totalorder %s27, 1
    %s29 = scalar_select %p28, 0, %s27
    %s30 = sadd.s32 1, %s21
    %s31 = scalar_select %p28, %s30, %s21
    %p32 = scmp.ge.s32.totalorder %s31, 2
    %s33 = scalar_select %p32, 0, %s31
    %s34 = ssub.s32 %s21, %s33
    %s35 = ssub.s32 %s22, %s29
    %s36 = sor.u32 %s34, %s35
    %p37 = scmp.eq.s32.totalorder %s36, 0
    %s39 = sadd.s32 %s38, 1
    %s40 = scalar_select %p37, %s38, %s39
    %p43 = pneg %p37
    %p44 = scmp.eq.s32.totalorder %s14, 1
    %p45 = por %p43, %p44
    %p46 = scmp.ne.s32.totalorder %s38, %s41
    %p47 = scmp.eq.s32.totalorder %s14, 0
    %p48 = por %p46, %p47
    %p49 = scmp.ne.s32.totalorder %s38, %s41
    %p50 = scmp.eq.s32.totalorder %s19, 1
    %p51 = por %p49, %p50
    %p52 = scmp.ne.s32.totalorder %s41, %s42
    %p53 = scmp.eq.s32.totalorder %s19, 0
    %p54 = por %p52, %p53
    %p55 = scmp.ne.s32.totalorder %s41, %s42
    %p56 = scmp.eq.s32.totalorder %s20, 1
    %p57 = por %p55, %p56
    %p59 = scmp.ne.s32.totalorder %s42, %s58
    %p60 = scmp.eq.s32.totalorder %s20, 0
    %p61 = por %p59, %p60
    %s62 = ssub.s32 %s21, %s33
    %s63 = ssub.s32 %s22, %s29
    %s64 = sor.u32 %s62, %s63
    %p65 = scmp.eq.s32.totalorder %s64, 0
    %s67 = sadd.s32 %s66, 1
    %s68 = scalar_select %p65, %s66, %s67
    %p71 = pneg %p65
    %p72 = scmp.eq.s32.totalorder %s14, 1
    %p73 = por %p71, %p72
    %p74 = scmp.ne.s32.totalorder %s66, %s69
    %p75 = scmp.eq.s32.totalorder %s14, 0
    %p76 = por %p74, %p75
    %p77 = scmp.ne.s32.totalorder %s66, %s69
    %p78 = scmp.eq.s32.totalorder %s19, 1
    %p79 = por %p77, %p78
    %p80 = scmp.ne.s32.totalorder %s69, %s70
    %p81 = scmp.eq.s32.totalorder %s19, 0
    %p82 = por %p80, %p81
    %p83 = scmp.ne.s32.totalorder %s69, %s70
    %p84 = scmp.eq.s32.totalorder %s20, 1
    %p85 = por %p83, %p84
    %p87 = scmp.ne.s32.totalorder %s70, %s86
    %p88 = scmp.eq.s32.totalorder %s20, 0
    %p89 = por %p87, %p88
    %s90 = ssub.s32 %s21, %s33
    %p91 = scmp.eq.s32.totalorder %s90, 0
    %s93 = sadd.s32 %s92, 1
    %s94 = scalar_select %p91, %s92, %s93
    %p97 = pneg %p91
    %p98 = scmp.eq.s32.totalorder %s14, 1
    %p99 = por %p97, %p98
    %p100 = scmp.ne.s32.totalorder %s92, %s95
    %p101 = scmp.eq.s32.totalorder %s14, 0
    %p102 = por %p100, %p101
    %p103 = scmp.ne.s32.totalorder %s92, %s95
    %p104 = scmp.eq.s32.totalorder %s19, 1
    %p105 = por %p103, %p104
    %p106 = scmp.ne.s32.totalorder %s95, %s96
    %p107 = scmp.eq.s32.totalorder %s19, 0
    %p108 = por %p106, %p107
    %p109 = scmp.ne.s32.totalorder %s95, %s96
    %p110 = scmp.eq.s32.totalorder %s20, 1
    %p111 = por %p109, %p110
    %p113 = scmp.ne.s32.totalorder %s96, %s112
    %p114 = scmp.eq.s32.totalorder %s20, 0
    %p115 = por %p113, %p114
    %s117 = sadd.s32 %s116, 1
    %p120 = scmp.eq.s32.totalorder %s14, 1
    %p121 = scmp.ne.s32.totalorder %s116, %s118
    %p122 = scmp.eq.s32.totalorder %s14, 0
    %p123 = por %p121, %p122
    %p124 = scmp.ne.s32.totalorder %s116, %s118
    %p125 = scmp.eq.s32.totalorder %s19, 1
    %p126 = por %p124, %p125
    %p127 = scmp.ne.s32.totalorder %s118, %s119
    %p128 = scmp.eq.s32.totalorder %s19, 0
    %p129 = por %p127, %p128
    %p130 = scmp.ne.s32.totalorder %s118, %s119
    %p131 = scmp.eq.s32.totalorder %s20, 1
    %p132 = por %p130, %p131
    %p134 = scmp.ne.s32.totalorder %s119, %s133
    %p135 = scmp.eq.s32.totalorder %s20, 0
    %p136 = por %p134, %p135
    %s138 = sadd.s32 %s137, 1
    %p141 = scmp.eq.s32.totalorder %s14, 1
    %p142 = scmp.ne.s32.totalorder %s137, %s139
    %p143 = scmp.eq.s32.totalorder %s14, 0
    %p144 = por %p142, %p143
    %p145 = scmp.ne.s32.totalorder %s137, %s139
    %p146 = scmp.eq.s32.totalorder %s19, 1
    %p147 = por %p145, %p146
    %p148 = scmp.ne.s32.totalorder %s139, %s140
    %p149 = scmp.eq.s32.totalorder %s19, 0
    %p150 = por %p148, %p149
    %p151 = scmp.ne.s32.totalorder %s139, %s140
    %p152 = scmp.eq.s32.totalorder %s20, 1
    %p153 = por %p151, %p152
    %p155 = scmp.ne.s32.totalorder %s140, %s154
    %p156 = scmp.eq.s32.totalorder %s20, 0
    %p157 = por %p155, %p156
    %s159 = sadd.s32 %s158, 1
    %p162 = scmp.eq.s32.totalorder %s14, 1
    %p163 = scmp.ne.s32.totalorder %s158, %s160
    %p164 = scmp.eq.s32.totalorder %s14, 0
    %p165 = por %p163, %p164
    %p166 = scmp.ne.s32.totalorder %s158, %s160
    %p167 = scmp.eq.s32.totalorder %s19, 1
    %p168 = por %p166, %p167
    %p169 = scmp.ne.s32.totalorder %s160, %s161
    %p170 = scmp.eq.s32.totalorder %s19, 0
    %p171 = por %p169, %p170
    %p172 = scmp.ne.s32.totalorder %s160, %s161
    %p173 = scmp.eq.s32.totalorder %s20, 1
    %p174 = por %p172, %p173
    %p176 = scmp.ne.s32.totalorder %s161, %s175
    %p177 = scmp.eq.s32.totalorder %s20, 0
    %p178 = por %p176, %p177
    %s180 = sadd.s32 %s179, 1
    %p183 = scmp.eq.s32.totalorder %s14, 1
    %p184 = scmp.ne.s32.totalorder %s179, %s181
    %p185 = scmp.eq.s32.totalorder %s14, 0
    %p186 = por %p184, %p185
    %p187 = scmp.ne.s32.totalorder %s179, %s181
    %p188 = scmp.eq.s32.totalorder %s19, 1
    %p189 = por %p187, %p188
    %p190 = scmp.ne.s32.totalorder %s181, %s182
    %p191 = scmp.eq.s32.totalorder %s19, 0
    %p192 = por %p190, %p191
    %p193 = scmp.ne.s32.totalorder %s181, %s182
    %p194 = scmp.eq.s32.totalorder %s20, 1
    %p195 = por %p193, %p194
    %p197 = scmp.ne.s32.totalorder %s182, %s196
    %p198 = scmp.eq.s32.totalorder %s20, 0
    %p199 = por %p197, %p198
    %s201 = sadd.s32 %s200, 1
    %p204 = scmp.eq.s32.totalorder %s14, 1
    %p205 = scmp.ne.s32.totalorder %s200, %s202
    %p206 = scmp.eq.s32.totalorder %s14, 0
    %p207 = por %p205, %p206
    %p208 = scmp.ne.s32.totalorder %s200, %s202
    %p209 = scmp.eq.s32.totalorder %s19, 1
    %p210 = por %p208, %p209
    %p211 = scmp.ne.s32.totalorder %s202, %s203
    %p212 = scmp.eq.s32.totalorder %s19, 0
    %p213 = por %p211, %p212
    %p214 = scmp.ne.s32.totalorder %s202, %s203
    %p215 = scmp.eq.s32.totalorder %s20, 1
    %p216 = por %p214, %p215
    %p218 = scmp.ne.s32.totalorder %s203, %s217
    %p219 = scmp.eq.s32.totalorder %s20, 0
    %p220 = por %p218, %p219
    %s221 = ssub.s32 %s21, %s33
    %s222 = ssub.s32 %s22, %s29
    %s223 = sor.u32 %s221, %s222
    %p224 = scmp.eq.s32.totalorder %s223, 0
    %s226 = sadd.s32 %s225, 1
    %s227 = scalar_select %p224, %s225, %s226
    %p230 = pneg %p224
    %p231 = scmp.eq.s32.totalorder %s14, 1
    %p232 = por %p230, %p231
    %p233 = scmp.ne.s32.totalorder %s225, %s228
    %p234 = scmp.eq.s32.totalorder %s14, 0
    %p235 = por %p233, %p234
    %p236 = scmp.ne.s32.totalorder %s225, %s228
    %p237 = scmp.eq.s32.totalorder %s19, 1
    %p238 = por %p236, %p237
    %p239 = scmp.ne.s32.totalorder %s228, %s229
    %p240 = scmp.eq.s32.totalorder %s19, 0
    %p241 = por %p239, %p240
    %p242 = scmp.ne.s32.totalorder %s228, %s229
    %p243 = scmp.eq.s32.totalorder %s20, 1
    %p244 = por %p242, %p243
    %p246 = scmp.ne.s32.totalorder %s229, %s245
    %p247 = scmp.eq.s32.totalorder %s20, 0
    %p248 = por %p246, %p247
    %p249 = scmp.le.s32.totalorder 1, %s14
    %p250 = scmp.lt.s32.totalorder %s14, 3
    %p251 = pnand %p249, %p250
    %p252 = pneg %p251
    // Predicated region
    $region9: #{bottleneck_se_forward.7} parent=5 // pred_check
      _
    $region10: #{bottleneck_se_forward.7} parent=5 // pred_check_branch
      %254 = sbr.rel (%p251) target = $region12
    $region11: #{bottleneck_se_forward.7} parent=5 // pred_region
      %s255 = ssub.s32 %s14, 1
      // Predicated region
      $region13: #{bottleneck_se_forward.7} parent=11 // pred_check
        %p256 = pneg %p129
      $region14: #{bottleneck_se_forward.7} parent=11 // pred_check_branch
        %258 = sbr.rel (%p256) target = $region16
      $region15: #{bottleneck_se_forward.7} parent=11 // pred_region
        _
      $region16: #{bottleneck_se_forward.7} parent=11 // pred_fallthru
        _
      // Predicated region
      $region17: #{bottleneck_se_forward.7} parent=11 // pred_check
        %p259 = pneg %p150
      $region18: #{bottleneck_se_forward.7} parent=11 // pred_check_branch
        %261 = sbr.rel (%p259) target = $region20
      $region19: #{bottleneck_se_forward.7} parent=11 // pred_region
        _
      $region20: #{bottleneck_se_forward.7} parent=11 // pred_fallthru
        _
      // Predicated region
      $region21: #{bottleneck_se_forward.7} parent=11 // pred_check
        %p262 = pneg %p171
      $region22: #{bottleneck_se_forward.7} parent=11 // pred_check_branch
        %264 = sbr.rel (%p262) target = $region24
      $region23: #{bottleneck_se_forward.7} parent=11 // pred_region
        _
      $region24: #{bottleneck_se_forward.7} parent=11 // pred_fallthru
        _
      // Predicated region
      $region25: #{bottleneck_se_forward.7} parent=11 // pred_check
        %p265 = pneg %p192
      $region26: #{bottleneck_se_forward.7} parent=11 // pred_check_branch
        %267 = sbr.rel (%p265) target = $region28
      $region27: #{bottleneck_se_forward.7} parent=11 // pred_region
        _
      $region28: #{bottleneck_se_forward.7} parent=11 // pred_fallthru
        _
      // Predicated region
      $region29: #{bottleneck_se_forward.7} parent=11 // pred_check
        %p268 = pneg %p213
      $region30: #{bottleneck_se_forward.7} parent=11 // pred_check_branch
        %270 = sbr.rel (%p268) target = $region32
      $region31: #{bottleneck_se_forward.7} parent=11 // pred_region
        _
      $region32: #{bottleneck_se_forward.7} parent=11 // pred_fallthru
        _
    $region12: #{bottleneck_se_forward.7} parent=5 // pred_fallthru
      _
    %p271 = scmp.lt.s32.totalorder %s14, 2
    // Predicated region
    $region33: #{bottleneck_se_forward.7} parent=5 // pred_check
      %p272 = pneg %p271
    $region34: #{bottleneck_se_forward.7} parent=5 // pred_check_branch
      %274 = sbr.rel (%p272) target = $region36
    $region35: #{bottleneck_se_forward.7} parent=5 // pred_region
      // Predicated region
      $region37: #{bottleneck_se_forward.7} parent=35 // pred_check
        %p275 = pneg %p48
      $region38: #{bottleneck_se_forward.7} parent=35 // pred_check_branch
        %277 = sbr.rel (%p275) target = $region40
      $region39: #{bottleneck_se_forward.7} parent=35 // pred_region
        %s278 = smul.u32 8, %s22
        %p279 = scmp.lt.s32.totalorder %s21, 1
        %s280 = scalar_select %p279, %s21, 1
        %p281 = scmp.lt.s32.totalorder %s278, 7
        %s282 = scalar_select %p281, %s278, 7
        %s283 = smul.addr %s280, 8
        %s284 = sadd.s32 %s282, %s283
        %s285 = smul.addr %s284, 4
        %s286 = scalar_lea.vmem %s0, %s285
        %s287 = smul.u32 8, %s22
      $region40: #{bottleneck_se_forward.7} parent=35 // pred_fallthru
        _
      // Predicated region
      $region41: #{bottleneck_se_forward.7} parent=35 // pred_check
        %p288 = pneg %p76
      $region42: #{bottleneck_se_forward.7} parent=35 // pred_check_branch
        %290 = sbr.rel (%p288) target = $region44
      $region43: #{bottleneck_se_forward.7} parent=35 // pred_region
        %s291 = smul.u32 8, %s22
        %p292 = scmp.lt.s32.totalorder %s21, 1
        %s293 = scalar_select %p292, %s21, 1
        %p294 = scmp.lt.s32.totalorder %s291, 7
        %s295 = scalar_select %p294, %s291, 7
        %s296 = smul.addr %s293, 8
        %s297 = sadd.s32 %s295, %s296
        %s298 = smul.addr %s297, 4
        %s299 = scalar_lea.vmem %s1, %s298
        %s300 = smul.u32 8, %s22
      $region44: #{bottleneck_se_forward.7} parent=35 // pred_fallthru
        _
      // Predicated region
      $region45: #{bottleneck_se_forward.7} parent=35 // pred_check
        %p301 = pneg %p102
      $region46: #{bottleneck_se_forward.7} parent=35 // pred_check_branch
        %303 = sbr.rel (%p301) target = $region48
      $region47: #{bottleneck_se_forward.7} parent=35 // pred_region
        %p304 = scmp.lt.s32.totalorder %s21, 1
        %s305 = scalar_select %p304, %s21, 1
        %s306 = scalar_lea.vmem %s2, %s305
      $region48: #{bottleneck_se_forward.7} parent=35 // pred_fallthru
        _
    $region36: #{bottleneck_se_forward.7} parent=5 // pred_fallthru
      _
    %p307 = scmp.le.s32.totalorder 1, %s14
    %p308 = scmp.lt.s32.totalorder %s14, 3
    %p309 = pnand %p307, %p308
    %p310 = pneg %p309
    // Predicated region
    $region49: #{bottleneck_se_forward.7} parent=5 // pred_check
      _
    $region50: #{bottleneck_se_forward.7} parent=5 // pred_check_branch
      %312 = sbr.rel (%p309) target = $region52
    $region51: #{bottleneck_se_forward.7} parent=5 // pred_region
      %s313 = ssub.s32 %s14, 1
      %s314 = smul.u32 8, %s24
      %p315 = scmp.lt.s32.totalorder %s23, 1
      %s316 = scalar_select %p315, %s23, 1
      %p317 = scmp.lt.s32.totalorder %s314, 7
      %s318 = scalar_select %p317, %s314, 7
      %s319 = smul.addr %s316, 8
      %s320 = sadd.s32 %s318, %s319
      %s321 = smul.addr %s320, 4
      %s322 = scalar_lea.vmem %s0, %s321
      %p323 = pneg %p54
      %p324 = pneg %p51
      %s325 = smul.u32 8, %s24
      %p326 = scmp.lt.s32.totalorder %s23, 1
      %s327 = scalar_select %p326, %s23, 1
      %p328 = scmp.lt.s32.totalorder %s325, 7
      %s329 = scalar_select %p328, %s325, 7
      %s330 = smul.addr %s327, 8
      %s331 = sadd.s32 %s329, %s330
      %s332 = smul.addr %s331, 4
      %s333 = scalar_lea.vmem %s1, %s332
      %p334 = pneg %p82
      %p335 = pneg %p79
      %p336 = scmp.lt.s32.totalorder %s23, 1
      %s337 = scalar_select %p336, %s23, 1
      %s338 = scalar_lea.vmem %s2, %s337
      %p339 = pneg %p108
      %p340 = pneg %p105
      %p341 = pneg %p129
      %p342 = pneg %p126
      %p343 = pneg %p150
      %p344 = pneg %p147
      %p345 = pneg %p171
      %p346 = pneg %p168
      %p347 = pneg %p192
      %p348 = pneg %p189
      %p349 = pneg %p213
      %p350 = pneg %p210
      %p351 = pneg %p241
      %p352 = pneg %p238
      %s353 = smul.u32 8, %s24
      %p354 = scmp.lt.s32.totalorder %s23, 1
      %s355 = scalar_select %p354, %s23, 1
      %p356 = scmp.lt.s32.totalorder %s353, 7
      %s357 = scalar_select %p356, %s353, 7
      %s358 = smul.addr %s355, 8
      %s359 = sadd.s32 %s357, %s358
      %s360 = smul.addr %s359, 8
      %s361 = scalar_lea.vmem %s8, %s360
      %s362 = smul.u32 8, %s24
      %p363 = scmp.lt.s32.totalorder %s23, 1
      %s364 = scalar_select %p363, %s23, 1
      %p365 = scmp.lt.s32.totalorder %s362, 7
      %s366 = scalar_select %p365, %s362, 7
      %s367 = smul.addr %s364, 8
      %s368 = sadd.s32 %s366, %s367
      %s369 = smul.addr %s368, 4
      %s370 = scalar_lea.vmem %s0, %s369
      %s371 = smul.u32 8, %s24
      %s372 = smul.u32 8, %s24
      %p373 = scmp.lt.s32.totalorder %s23, 1
      %s374 = scalar_select %p373, %s23, 1
      %p375 = scmp.lt.s32.totalorder %s372, 7
      %s376 = scalar_select %p375, %s372, 7
      %s377 = smul.addr %s374, 8
      %s378 = sadd.s32 %s376, %s377
      %s379 = smul.addr %s378, 4
      %s380 = scalar_lea.vmem %s1, %s379
      %s381 = smul.u32 8, %s24
      %p382 = scmp.lt.s32.totalorder %s23, 1
      %s383 = scalar_select %p382, %s23, 1
      %s384 = scalar_lea.vmem %s2, %s383
      %s385 = smul.u32 8, %s24
      %p386 = scmp.lt.s32.totalorder %s23, 1
      %s387 = scalar_select %p386, %s23, 1
      %p388 = scmp.lt.s32.totalorder %s385, 7
      %s389 = scalar_select %p388, %s385, 7
      %s390 = smul.addr %s387, 8
      %s391 = sadd.s32 %s389, %s390
      %s392 = smul.addr %s391, 8
      %s393 = scalar_lea.vmem %s8, %s392
      %s394 = smul.u32 8, %s24
      %v396 = vld [vmem:[%s370] sm:$0xf]
      %v397 = vld [vmem:[%s370 + $0x4] sm:$0xf]
      %v398 = vld [vmem:[%s370 + $0x8] sm:$0xf]
      %v399 = vld [vmem:[%s370 + $0xc] sm:$0xf]
      %v400 = vld [vmem:[%s370 + $0x10] sm:$0xf]
      %v401 = vld [vmem:[%s370 + $0x14] sm:$0xf]
      %v402 = vld [vmem:[%s370 + $0x18] sm:$0xf]
      %v403 = vld [vmem:[%s370 + $0x1c] sm:$0xf]
      %v404 = vunpack.c.l.bf16 %v396
      %v405 = vunpack.c.l.bf16 %v397
      %v406 = vunpack.c.l.bf16 %v398
      %v407 = vunpack.c.l.bf16 %v399
      %v408 = vunpack.c.l.bf16 %v400
      %v409 = vunpack.c.l.bf16 %v401
      %v410 = vunpack.c.l.bf16 %v402
      %v411 = vunpack.c.l.bf16 %v403
      %v412 = vld [vmem:[%s3] sm:$0x1]
      %v414 = vlaneseq
      %v415 = vshrl.u32 %v414, 7
      %v416 = vsub.s32 0, %v415
      %v417 = vrot.slane %v412, %v416
      %v419 = vmul.f32 %v404, %v417
      %v420 = vmul.f32 %v405, %v417
      %v421 = vmul.f32 %v406, %v417
      %v422 = vmul.f32 %v407, %v417
      %v423 = vmul.f32 %v408, %v417
      %v424 = vmul.f32 %v409, %v417
      %v425 = vmul.f32 %v410, %v417
      %v426 = vmul.f32 %v411, %v417
      %v427 = vld [vmem:[%s4] sm:$0x1]
      %v429 = vlaneseq
      %v430 = vshrl.u32 %v429, 7
      %v431 = vsub.s32 0, %v430
      %v432 = vrot.slane %v427, %v431
      %v434 = vadd.f32 %v419, %v432
      %v435 = vadd.f32 %v420, %v432
      %v436 = vadd.f32 %v421, %v432
      %v437 = vadd.f32 %v422, %v432
      %v438 = vadd.f32 %v423, %v432
      %v439 = vadd.f32 %v424, %v432
      %v440 = vadd.f32 %v425, %v432
      %v441 = vadd.f32 %v426, %v432
      %v442 = vmax.f32 %v434, 0.0
      %v443 = vmax.f32 %v435, 0.0
      %v444 = vmax.f32 %v436, 0.0
      %v445 = vmax.f32 %v437, 0.0
      %v446 = vmax.f32 %v438, 0.0
      %v447 = vmax.f32 %v439, 0.0
      %v448 = vmax.f32 %v440, 0.0
      %v449 = vmax.f32 %v441, 0.0
      %v450 = vpack.c.bf16 %v443, %v442
      %v451 = vpack.c.bf16 %v445, %v444
      %v452 = vpack.c.bf16 %v447, %v446
      %v453 = vpack.c.bf16 %v449, %v448
      %v454 = vld [vmem:[%s5] sm:$0xf]
      %v455 = vld [vmem:[%s5 + $0x4] sm:$0xf]
      %v456 = vld [vmem:[%s5 + $0x8] sm:$0xf]
      %v457 = vld [vmem:[%s5 + $0xc] sm:$0xf]
      %v458 = vld [vmem:[%s5 + $0x10] sm:$0xf]
      %v459 = vld [vmem:[%s5 + $0x14] sm:$0xf]
      %v460 = vld [vmem:[%s5 + $0x18] sm:$0xf]
      %v461 = vld [vmem:[%s5 + $0x1c] sm:$0xf]
      %v462 = vld [vmem:[%s5 + $0x20] sm:$0xf]
      %v463 = vld [vmem:[%s5 + $0x24] sm:$0xf]
      %v464 = vld [vmem:[%s5 + $0x28] sm:$0xf]
      %v465 = vld [vmem:[%s5 + $0x2c] sm:$0xf]
      %v466 = vld [vmem:[%s5 + $0x30] sm:$0xf]
      %v467 = vld [vmem:[%s5 + $0x34] sm:$0xf]
      %v468 = vld [vmem:[%s5 + $0x38] sm:$0xf]
      %v469 = vld [vmem:[%s5 + $0x3c] sm:$0xf]
      %v486 = vunpack.c.l.b16 %v454
      %v487 = vunpack.c.l.b16 %v455
      %v488 = vunpack.c.l.b16 %v456
      %v489 = vunpack.c.l.b16 %v457
      %v490 = vunpack.c.l.b16 %v458
      %v491 = vunpack.c.l.b16 %v459
      %v492 = vunpack.c.l.b16 %v460
      %v493 = vunpack.c.l.b16 %v461
      %v494 = vunpack.c.l.b16 %v462
      %v495 = vunpack.c.l.b16 %v463
      %v496 = vunpack.c.l.b16 %v464
      %v497 = vunpack.c.l.b16 %v465
      %v498 = vunpack.c.l.b16 %v466
      %v499 = vunpack.c.l.b16 %v467
      %v500 = vunpack.c.l.b16 %v468
      %v501 = vunpack.c.l.b16 %v469
      %v502 = vpack.c.b16 %v487, %v486
      %v503 = vpack.c.b16 %v489, %v488
      %v504 = vpack.c.b16 %v491, %v490
      %v505 = vpack.c.b16 %v493, %v492
      %v506 = vpack.c.b16 %v495, %v494
      %v507 = vpack.c.b16 %v497, %v496
      %v508 = vpack.c.b16 %v499, %v498
      %v509 = vpack.c.b16 %v501, %v500
      %518 = vmatprep.subr.bf16.mxu0 0
      %519 = vmatpush1.bf16.msra.mxu0 %v502
      %520 = vmatprep.subr.bf16.mxu0 0
      %521 = vmatpush1.bf16.msra.mxu0 %v503
      %522 = vmatprep.subr.bf16.mxu0 0
      %523 = vmatpush1.bf16.msra.mxu0 %v504
      %524 = vmatprep.subr.bf16.mxu0 0
      %525 = vmatpush1.bf16.msra.mxu0 %v505
      %526 = vmatprep.subr.bf16.mxu0 0
      %527 = vmatpush1.bf16.msra.mxu0 %v506
      %528 = vmatprep.subr.bf16.mxu0 0
      %529 = vmatpush1.bf16.msra.mxu0 %v507
      %530 = vmatprep.subr.bf16.mxu0 0
      %531 = vmatpush1.bf16.msra.mxu0 %v508
      %532 = vmatprep.subr.bf16.mxu0 0
      %533 = vmatpush1.bf16.msra.mxu0 %v509
      %534 = vmatprep.subr.bf16.mxu0 0
      %535 = vmatpush1.bf16.msra.mxu0 0
      %536 = vmatprep.subr.bf16.mxu0 0
      %537 = vmatpush1.bf16.msra.mxu0 0
      %538 = vmatprep.subr.bf16.mxu0 0
      %539 = vmatpush1.bf16.msra.mxu0 0
      %540 = vmatprep.subr.bf16.mxu0 0
      %541 = vmatpush1.bf16.msra.mxu0 0
      %542 = vmatprep.subr.bf16.mxu0 0
      %543 = vmatpush1.bf16.msra.mxu0 0
      %544 = vmatprep.subr.bf16.mxu0 0
      %545 = vmatpush1.bf16.msra.mxu0 0
      %546 = vmatprep.subr.bf16.mxu0 0
      %547 = vmatpush1.bf16.msra.mxu0 0
      %548 = vmatprep.subr.bf16.mxu0 0
      %549 = vmatpush1.bf16.msra.mxu0 0
      %550 = vmatprep.mubr.bf16.mxu0 0
      %551 = vmatmul.mubr.bf16.gmra.mrb[0].mxu0 %v450
      %v552 = vpop.f32.mrb[0].mxu0
      %v553 = vadd.f32 0.0, %v552
      %v554 = vpop.f32.mrb[0].mxu0
      %v555 = vpop.f32.mrb[0].mxu0
      %v556 = vadd.f32 0.0, %v555
      %v557 = vpop.f32.mrb[0].mxu0
      %558 = vmatprep.mubr.bf16.mxu0 0
      %559 = vmatmul.mubr.bf16.gmra.mrb[0].mxu0 %v451
      %v560 = vpop.f32.mrb[0].mxu0
      %v561 = vadd.f32 0.0, %v560
      %v562 = vpop.f32.mrb[0].mxu0
      %v563 = vpop.f32.mrb[0].mxu0
      %v564 = vadd.f32 0.0, %v563
      %v565 = vpop.f32.mrb[0].mxu0
      %566 = vmatprep.mubr.bf16.mxu0 0
      %567 = vmatmul.mubr.bf16.gmra.mrb[0].mxu0 %v452
      %v568 = vpop.f32.mrb[0].mxu0
      %v569 = vadd.f32 0.0, %v568
      %v570 = vpop.f32.mrb[0].mxu0
      %v571 = vpop.f32.mrb[0].mxu0
      %v572 = vadd.f32 0.0, %v571
      %v573 = vpop.f32.mrb[0].mxu0
      %574 = vmatprep.mubr.bf16.mxu0 0
      %575 = vmatmul.mubr.bf16.gmra.mrb[0].mxu0 %v453
      %v576 = vpop.f32.mrb[0].mxu0
      %v577 = vadd.f32 0.0, %v576
      %v578 = vpop.f32.mrb[0].mxu0
      %v579 = vpop.f32.mrb[0].mxu0
      %v580 = vadd.f32 0.0, %v579
      %v581 = vpop.f32.mrb[0].mxu0
      %582 = vdwg.mxu0
      %v583 = vld [vmem:[%s6] sm:$0x1]
      %v585 = vlaneseq
      %v586 = vshrl.u32 %v585, 7
      %v587 = vsub.s32 0, %v586
      %v588 = vrot.slane %v583, %v587
      %v590 = vmul.f32 %v553, %v588
      %v591 = vmul.f32 %v556, %v588
      %v592 = vmul.f32 %v561, %v588
      %v593 = vmul.f32 %v564, %v588
      %v594 = vmul.f32 %v569, %v588
      %v595 = vmul.f32 %v572, %v588
      %v596 = vmul.f32 %v577, %v588
      %v597 = vmul.f32 %v580, %v588
      %v598 = vld [vmem:[%s7] sm:$0x1]
      %v600 = vlaneseq
      %v601 = vshrl.u32 %v600, 7
      %v602 = vsub.s32 0, %v601
      %v603 = vrot.slane %v598, %v602
      %v605 = vadd.f32 %v590, %v603
      %v606 = vadd.f32 %v591, %v603
      %v607 = vadd.f32 %v592, %v603
      %v608 = vadd.f32 %v593, %v603
      %v609 = vadd.f32 %v594, %v603
      %v610 = vadd.f32 %v595, %v603
      %v611 = vadd.f32 %v596, %v603
      %v612 = vadd.f32 %v597, %v603
      %v613 = vld [vmem:[%s384] sm:$0x1]
      %v615 = vlaneseq
      %v616 = vshrl.u32 %v615, 7
      %v617 = vsub.s32 0, %v616
      %v618 = vrot.slane %v613, %v617
      %v620 = vmul.f32 %v605, %v618
      %v621 = vmul.f32 %v606, %v618
      %v622 = vmul.f32 %v607, %v618
      %v623 = vmul.f32 %v608, %v618
      %v624 = vmul.f32 %v609, %v618
      %v625 = vmul.f32 %v610, %v618
      %v626 = vmul.f32 %v611, %v618
      %v627 = vmul.f32 %v612, %v618
      %v628 = vld [vmem:[%s380] sm:$0xf]
      %v629 = vld [vmem:[%s380 + $0x4] sm:$0xf]
      %v630 = vld [vmem:[%s380 + $0x8] sm:$0xf]
      %v631 = vld [vmem:[%s380 + $0xc] sm:$0xf]
      %v632 = vld [vmem:[%s380 + $0x10] sm:$0xf]
      %v633 = vld [vmem:[%s380 + $0x14] sm:$0xf]
      %v634 = vld [vmem:[%s380 + $0x18] sm:$0xf]
      %v635 = vld [vmem:[%s380 + $0x1c] sm:$0xf]
      %v636 = vunpack.c.l.bf16 %v628
      %v637 = vunpack.c.l.bf16 %v629
      %v638 = vunpack.c.l.bf16 %v630
      %v639 = vunpack.c.l.bf16 %v631
      %v640 = vunpack.c.l.bf16 %v632
      %v641 = vunpack.c.l.bf16 %v633
      %v642 = vunpack.c.l.bf16 %v634
      %v643 = vunpack.c.l.bf16 %v635
      %v644 = vadd.f32 %v620, %v636
      %v645 = vadd.f32 %v621, %v637
      %v646 = vadd.f32 %v622, %v638
      %v647 = vadd.f32 %v623, %v639
      %v648 = vadd.f32 %v624, %v640
      %v649 = vadd.f32 %v625, %v641
      %v650 = vadd.f32 %v626, %v642
      %v651 = vadd.f32 %v627, %v643
      %v652 = vmax.f32 %v644, 0.0
      %v653 = vmax.f32 %v645, 0.0
      %v654 = vmax.f32 %v646, 0.0
      %v655 = vmax.f32 %v647, 0.0
      %v656 = vmax.f32 %v648, 0.0
      %v657 = vmax.f32 %v649, 0.0
      %v658 = vmax.f32 %v650, 0.0
      %v659 = vmax.f32 %v651, 0.0
      %660 = vst [vmem:[%s393] sm:$0xff] %v652
      %661 = vst [vmem:[%s393 + $0x8] sm:$0xff] %v653
      %662 = vst [vmem:[%s393 + $0x10] sm:$0xff] %v654
      %663 = vst [vmem:[%s393 + $0x18] sm:$0xff] %v655
      %664 = vst [vmem:[%s393 + $0x20] sm:$0xff] %v656
      %665 = vst [vmem:[%s393 + $0x28] sm:$0xff] %v657
      %666 = vst [vmem:[%s393 + $0x30] sm:$0xff] %v658
      %667 = vst [vmem:[%s393 + $0x38] sm:$0xff] %v659
      %s668 = smul.u32 8, %s24
      %p669 = scmp.lt.s32.totalorder %s23, 1
      %s670 = scalar_select %p669, %s23, 1
      %p671 = scmp.lt.s32.totalorder %s668, 7
      %s672 = scalar_select %p671, %s668, 7
      %s673 = smul.addr %s670, 8
      %s674 = sadd.s32 %s672, %s673
      %s675 = smul.addr %s674, 8
      %s676 = scalar_lea.vmem %s8, %s675
      // Predicated region
      $region53: #{bottleneck_se_forward.7} parent=51 // pred_check
        %p677 = pneg %p238
      $region54: #{bottleneck_se_forward.7} parent=51 // pred_check_branch
        %679 = sbr.rel (%p677) target = $region56
      $region55: #{bottleneck_se_forward.7} parent=51 // pred_region
        %s680 = smul.u32 8, %s24
      $region56: #{bottleneck_se_forward.7} parent=51 // pred_fallthru
        _
    $region52: #{bottleneck_se_forward.7} parent=5 // pred_fallthru
      _
    %p681 = scmp.le.s32.totalorder 2, %s14
    // Predicated region
    $region57: #{bottleneck_se_forward.7} parent=5 // pred_check
      %p682 = pneg %p681
    $region58: #{bottleneck_se_forward.7} parent=5 // pred_check_branch
      %684 = sbr.rel (%p682) target = $region60
    $region59: #{bottleneck_se_forward.7} parent=5 // pred_region
      %s685 = ssub.s32 %s14, 2
      // Predicated region
      $region61: #{bottleneck_se_forward.7} parent=59 // pred_check
        %p686 = pneg %p244
      $region62: #{bottleneck_se_forward.7} parent=59 // pred_check_branch
        %688 = sbr.rel (%p686) target = $region64
      $region63: #{bottleneck_se_forward.7} parent=59 // pred_region
        %s689 = smul.u32 8, %s26
        %p690 = scmp.lt.s32.totalorder %s25, 1
        %s691 = scalar_select %p690, %s25, 1
        %p692 = scmp.lt.s32.totalorder %s689, 7
        %s693 = scalar_select %p692, %s689, 7
        %s694 = smul.addr %s691, 8
        %s695 = sadd.s32 %s693, %s694
        %s696 = smul.addr %s695, 8
        %s697 = scalar_lea.vmem %s8, %s696
      $region64: #{bottleneck_se_forward.7} parent=59 // pred_fallthru
        _
    $region60: #{bottleneck_se_forward.7} parent=5 // pred_fallthru
      _
  $region6: #{bottleneck_se_forward.7} parent=0 // loop_footer
    %s18 = sadd.s32 1, %s14
  $region7: #{bottleneck_se_forward.7} parent=0 // loop_footer_branch
    %13 = sbr.rel target = $region3
  $region8: #{bottleneck_se_forward.7} parent=0 // loop_exit
    _

// kernel: bottleneck_se_forward.5
$region0: #{bottleneck_se_forward.5}
  #allocation0 [shape = 'u32[]', space=smem, size = 0x4, offset = 0x4, fixed_abs, tag = 'smem constant byte address 0x4 - core index']
  #allocation1 [shape = 'u32[144,128]{1,0:T(1,128)}', space=vmem, size = 0x12000, scoped, tag = 'internal scratch']
  #allocation2 [shape = 'f32[10,10,128]{2,1,0:T(8,128)}', space=vmem, size = 0x14000, scoped, tag = 'scratch operand']
  #allocation3 [shape = 'f32[64,128]{1,0:T(8,128)}', space=vmem, size = 0x8000, scoped, tag = 'scratch operand']
  %s0 = inlined_call_operand.vmem [shape: bf16[2,8,8,128], index: 0, kind: input, shape index: {}]
  %s1 = inlined_call_operand.vmem [shape: f32[1,128], index: 1, kind: input, shape index: {}]
  %s2 = inlined_call_operand.vmem [shape: f32[1,128], index: 2, kind: input, shape index: {}]
  %s3 = inlined_call_operand.vmem [shape: bf16[3,384,128], index: 3, kind: input, shape index: {}]
  %s4 = inlined_call_operand.vmem [shape: bf16[2,64,128], index: 4, kind: output, shape index: {0}]
  %s5 = inlined_call_operand.vmem [shape: f32[2,2,128], index: 5, kind: output, shape index: {1}]
  %6 = xla_tuple %s4, %s5
  %s7 = sld [smem:[#allocation0]]
  $region57: #{bottleneck_se_forward.5} parent=0
    _
  %s9 = ssub.s32 1, %s7
  %s10 = scalar_select 0, %s9, %s7
  loop: start=0, step=1, limit=4
  $region2: #{bottleneck_se_forward.5} parent=0 // loop_pre_header
    _
  $region3: #{bottleneck_se_forward.5} parent=0 // loop_header
    %s12 = sphi 0, %s16
    %p13 = scmp.ge.s32.totalorder %s12, 4
    %s22 = sphi 0, %s24
    %s25 = sphi 0, %s22
    %s26 = sphi 0, %s25
    %s42 = sphi 0, %s26
    %s46 = sphi 0, %s46
    %s48 = sphi 0, %s46
    %s49 = sphi 0, %s48
    %s63 = sphi 0, %s49
    %s67 = sphi 0, %s67
    %s69 = sphi 0, %s67
    %s70 = sphi 0, %s69
    %s84 = sphi 0, %s70
    %s88 = sphi 0, %s88
    %s90 = sphi 0, %s88
    %s91 = sphi 0, %s90
    %s105 = sphi 0, %s91
    %s111 = sphi 0, %s113
    %s114 = sphi 0, %s111
    %s115 = sphi 0, %s114
    %s131 = sphi 0, %s115
    %s137 = sphi 0, %s139
    %s140 = sphi 0, %s137
    %s141 = sphi 0, %s140
    %s157 = sphi 0, %s141
  $region4: #{bottleneck_se_forward.5} parent=0 // loop_header_branch
    %15 = sbr.rel (%p13) target = $region8
  $region5: #{bottleneck_se_forward.5} parent=0 // loop_body
    %s17 = ssub.s32 %s12, 1
    %s18 = ssub.s32 %s12, 2
    %s19 = sadd.s32 %s12, 1
    %s20 = ssub.s32 %s12, %s19
    %p21 = scmp.eq.s32.totalorder %s20, 0
    %s23 = sadd.s32 %s22, 1
    %s24 = scalar_select %p21, %s22, %s23
    %p27 = pneg %p21
    %p28 = scmp.eq.s32.totalorder %s12, 1
    %p29 = por %p27, %p28
    %p30 = scmp.ne.s32.totalorder %s22, %s25
    %p31 = scmp.eq.s32.totalorder %s12, 0
    %p32 = por %p30, %p31
    %p33 = scmp.ne.s32.totalorder %s22, %s25
    %p34 = scmp.eq.s32.totalorder %s17, 1
    %p35 = por %p33, %p34
    %p36 = scmp.ne.s32.totalorder %s25, %s26
    %p37 = scmp.eq.s32.totalorder %s17, 0
    %p38 = por %p36, %p37
    %p39 = scmp.ne.s32.totalorder %s25, %s26
    %p40 = scmp.eq.s32.totalorder %s18, 1
    %p41 = por %p39, %p40
    %p43 = scmp.ne.s32.totalorder %s26, %s42
    %p44 = scmp.eq.s32.totalorder %s18, 0
    %p45 = por %p43, %p44
    %s47 = sadd.s32 %s46, 1
    %p50 = scmp.eq.s32.totalorder %s12, 1
    %p51 = scmp.ne.s32.totalorder %s46, %s48
    %p52 = scmp.eq.s32.totalorder %s12, 0
    %p53 = por %p51, %p52
    %p54 = scmp.ne.s32.totalorder %s46, %s48
    %p55 = scmp.eq.s32.totalorder %s17, 1
    %p56 = por %p54, %p55
    %p57 = scmp.ne.s32.totalorder %s48, %s49
    %p58 = scmp.eq.s32.totalorder %s17, 0
    %p59 = por %p57, %p58
    %p60 = scmp.ne.s32.totalorder %s48, %s49
    %p61 = scmp.eq.s32.totalorder %s18, 1
    %p62 = por %p60, %p61
    %p64 = scmp.ne.s32.totalorder %s49, %s63
    %p65 = scmp.eq.s32.totalorder %s18, 0
    %p66 = por %p64, %p65
    %s68 = sadd.s32 %s67, 1
    %p71 = scmp.eq.s32.totalorder %s12, 1
    %p72 = scmp.ne.s32.totalorder %s67, %s69
    %p73 = scmp.eq.s32.totalorder %s12, 0
    %p74 = por %p72, %p73
    %p75 = scmp.ne.s32.totalorder %s67, %s69
    %p76 = scmp.eq.s32.totalorder %s17, 1
    %p77 = por %p75, %p76
    %p78 = scmp.ne.s32.totalorder %s69, %s70
    %p79 = scmp.eq.s32.totalorder %s17, 0
    %p80 = por %p78, %p79
    %p81 = scmp.ne.s32.totalorder %s69, %s70
    %p82 = scmp.eq.s32.totalorder %s18, 1
    %p83 = por %p81, %p82
    %p85 = scmp.ne.s32.totalorder %s70, %s84
    %p86 = scmp.eq.s32.totalorder %s18, 0
    %p87 = por %p85, %p86
    %s89 = sadd.s32 %s88, 1
    %p92 = scmp.eq.s32.totalorder %s12, 1
    %p93 = scmp.ne.s32.totalorder %s88, %s90
    %p94 = scmp.eq.s32.totalorder %s12, 0
    %p95 = por %p93, %p94
    %p96 = scmp.ne.s32.totalorder %s88, %s90
    %p97 = scmp.eq.s32.totalorder %s17, 1
    %p98 = por %p96, %p97
    %p99 = scmp.ne.s32.totalorder %s90, %s91
    %p100 = scmp.eq.s32.totalorder %s17, 0
    %p101 = por %p99, %p100
    %p102 = scmp.ne.s32.totalorder %s90, %s91
    %p103 = scmp.eq.s32.totalorder %s18, 1
    %p104 = por %p102, %p103
    %p106 = scmp.ne.s32.totalorder %s91, %s105
    %p107 = scmp.eq.s32.totalorder %s18, 0
    %p108 = por %p106, %p107
    %s109 = ssub.s32 %s12, %s19
    %p110 = scmp.eq.s32.totalorder %s109, 0
    %s112 = sadd.s32 %s111, 1
    %s113 = scalar_select %p110, %s111, %s112
    %p116 = pneg %p110
    %p117 = scmp.eq.s32.totalorder %s12, 1
    %p118 = por %p116, %p117
    %p119 = scmp.ne.s32.totalorder %s111, %s114
    %p120 = scmp.eq.s32.totalorder %s12, 0
    %p121 = por %p119, %p120
    %p122 = scmp.ne.s32.totalorder %s111, %s114
    %p123 = scmp.eq.s32.totalorder %s17, 1
    %p124 = por %p122, %p123
    %p125 = scmp.ne.s32.totalorder %s114, %s115
    %p126 = scmp.eq.s32.totalorder %s17, 0
    %p127 = por %p125, %p126
    %p128 = scmp.ne.s32.totalorder %s114, %s115
    %p129 = scmp.eq.s32.totalorder %s18, 1
    %p130 = por %p128, %p129
    %p132 = scmp.ne.s32.totalorder %s115, %s131
    %p133 = scmp.eq.s32.totalorder %s18, 0
    %p134 = por %p132, %p133
    %s135 = ssub.s32 %s12, %s19
    %p136 = scmp.eq.s32.totalorder %s135, 0
    %s138 = sadd.s32 %s137, 1
    %s139 = scalar_select %p136, %s137, %s138
    %p142 = pneg %p136
    %p143 = scmp.eq.s32.totalorder %s12, 1
    %p144 = por %p142, %p143
    %p145 = scmp.ne.s32.totalorder %s137, %s140
    %p146 = scmp.eq.s32.totalorder %s12, 0
    %p147 = por %p145, %p146
    %p148 = scmp.ne.s32.totalorder %s137, %s140
    %p149 = scmp.eq.s32.totalorder %s17, 1
    %p150 = por %p148, %p149
    %p151 = scmp.ne.s32.totalorder %s140, %s141
    %p152 = scmp.eq.s32.totalorder %s17, 0
    %p153 = por %p151, %p152
    %p154 = scmp.ne.s32.totalorder %s140, %s141
    %p155 = scmp.eq.s32.totalorder %s18, 1
    %p156 = por %p154, %p155
    %p158 = scmp.ne.s32.totalorder %s141, %s157
    %p159 = scmp.eq.s32.totalorder %s18, 0
    %p160 = por %p158, %p159
    %p161 = scmp.le.s32.totalorder 1, %s12
    %p162 = scmp.lt.s32.totalorder %s12, 3
    %p163 = pnand %p161, %p162
    %p164 = pneg %p163
    // Predicated region
    $region9: #{bottleneck_se_forward.5} parent=5 // pred_check
      _
    $region10: #{bottleneck_se_forward.5} parent=5 // pred_check_branch
      %166 = sbr.rel (%p163) target = $region12
    $region11: #{bottleneck_se_forward.5} parent=5 // pred_region
      %s167 = ssub.s32 %s12, 1
      // Predicated region
      $region13: #{bottleneck_se_forward.5} parent=11 // pred_check
        %p168 = pneg %p59
      $region14: #{bottleneck_se_forward.5} parent=11 // pred_check_branch
        %170 = sbr.rel (%p168) target = $region16
      $region15: #{bottleneck_se_forward.5} parent=11 // pred_region
        _
      $region16: #{bottleneck_se_forward.5} parent=11 // pred_fallthru
        _
      // Predicated region
      $region17: #{bottleneck_se_forward.5} parent=11 // pred_check
        %p171 = pneg %p80
      $region18: #{bottleneck_se_forward.5} parent=11 // pred_check_branch
        %173 = sbr.rel (%p171) target = $region20
      $region19: #{bottleneck_se_forward.5} parent=11 // pred_region
        _
      $region20: #{bottleneck_se_forward.5} parent=11 // pred_fallthru
        _
      // Predicated region
      $region21: #{bottleneck_se_forward.5} parent=11 // pred_check
        %p174 = pneg %p101
      $region22: #{bottleneck_se_forward.5} parent=11 // pred_check_branch
        %176 = sbr.rel (%p174) target = $region24
      $region23: #{bottleneck_se_forward.5} parent=11 // pred_region
        _
      $region24: #{bottleneck_se_forward.5} parent=11 // pred_fallthru
        _
    $region12: #{bottleneck_se_forward.5} parent=5 // pred_fallthru
      _
    %p177 = scmp.lt.s32.totalorder %s12, 2
    // Predicated region
    $region25: #{bottleneck_se_forward.5} parent=5 // pred_check
      %p178 = pneg %p177
    $region26: #{bottleneck_se_forward.5} parent=5 // pred_check_branch
      %180 = sbr.rel (%p178) target = $region28
    $region27: #{bottleneck_se_forward.5} parent=5 // pred_region
      // Predicated region
      $region29: #{bottleneck_se_forward.5} parent=27 // pred_check
        %p181 = pneg %p32
      $region30: #{bottleneck_se_forward.5} parent=27 // pred_check_branch
        %183 = sbr.rel (%p181) target = $region32
      $region31: #{bottleneck_se_forward.5} parent=27 // pred_region
        %p184 = scmp.lt.s32.totalorder %s12, 1
        %s185 = scalar_select %p184, %s12, 1
        %s186 = smul.addr %s185, 8
        %s187 = smul.addr %s186, 4
        %s188 = scalar_lea.vmem %s0, %s187
      $region32: #{bottleneck_se_forward.5} parent=27 // pred_fallthru
        _
    $region28: #{bottleneck_se_forward.5} parent=5 // pred_fallthru
      _
    %p189 = scmp.le.s32.totalorder 1, %s12
    %p190 = scmp.lt.s32.totalorder %s12, 3
    %p191 = pnand %p189, %p190
    %p192 = pneg %p191
    // Predicated region
    $region33: #{bottleneck_se_forward.5} parent=5 // pred_check
      _
    $region34: #{bottleneck_se_forward.5} parent=5 // pred_check_branch
      %194 = sbr.rel (%p191) target = $region36
    $region35: #{bottleneck_se_forward.5} parent=5 // pred_region
      %s195 = ssub.s32 %s12, 1
      %p196 = scmp.lt.s32.totalorder %s17, 1
      %s197 = scalar_select %p196, %s17, 1
      %s198 = smul.addr %s197, 8
      %s199 = smul.addr %s198, 4
      %s200 = scalar_lea.vmem %s0, %s199
      %p201 = pneg %p38
      %p202 = pneg %p35
      %p203 = pneg %p59
      %p204 = pneg %p56
      %p205 = pneg %p80
      %p206 = pneg %p77
      %p207 = pneg %p101
      %p208 = pneg %p98
      %p209 = pneg %p127
      %p210 = pneg %p124
      %p211 = scmp.lt.s32.totalorder %s17, 1
      %s212 = scalar_select %p211, %s17, 1
      %s213 = smul.addr %s212, 8
      %s214 = smul.addr %s213, 4
      %s215 = scalar_lea.vmem %s4, %s214
      %p216 = pneg %p153
      %p217 = pneg %p150
      %p218 = scmp.lt.s32.totalorder %s17, 1
      %s219 = scalar_select %p218, %s17, 1
      %s220 = smul.addr %s219, 2
      %s221 = scalar_lea.vmem %s5, %s220
      %p222 = scmp.lt.s32.totalorder %s17, 1
      %s223 = scalar_select %p222, %s17, 1
      %s224 = smul.addr %s223, 8
      %s225 = smul.addr %s224, 4
      %s226 = scalar_lea.vmem %s0, %s225
      %p227 = scmp.lt.s32.totalorder %s17, 1
      %s228 = scalar_select %p227, %s17, 1
      %s229 = smul.addr %s228, 8
      %s230 = smul.addr %s229, 4
      %s231 = scalar_lea.vmem %s4, %s230
      %p232 = scmp.lt.s32.totalorder %s17, 1
      %s233 = scalar_select %p232, %s17, 1
      %s234 = smul.addr %s233, 2
      %s235 = scalar_lea.vmem %s5, %s234
      %237 = vst [vmem:[#allocation2] sm:$0xff] 0.0
      %238 = vst [vmem:[#allocation2 + $0x8] sm:$0x3] 0.0
      %239 = vst [vmem:[#allocation2 + $0x10] sm:$0xff] 0.0
      %240 = vst [vmem:[#allocation2 + $0x18] sm:$0x3] 0.0
      %241 = vst [vmem:[#allocation2 + $0x20] sm:$0xff] 0.0
      %242 = vst [vmem:[#allocation2 + $0x28] sm:$0x3] 0.0
      %243 = vst [vmem:[#allocation2 + $0x30] sm:$0xff] 0.0
      %244 = vst [vmem:[#allocation2 + $0x38] sm:$0x3] 0.0
      %245 = vst [vmem:[#allocation2 + $0x40] sm:$0xff] 0.0
      %246 = vst [vmem:[#allocation2 + $0x48] sm:$0x3] 0.0
      %247 = vst [vmem:[#allocation2 + $0x50] sm:$0xff] 0.0
      %248 = vst [vmem:[#allocation2 + $0x58] sm:$0x3] 0.0
      %249 = vst [vmem:[#allocation2 + $0x60] sm:$0xff] 0.0
      %250 = vst [vmem:[#allocation2 + $0x68] sm:$0x3] 0.0
      %251 = vst [vmem:[#allocation2 + $0x70] sm:$0xff] 0.0
      %252 = vst [vmem:[#allocation2 + $0x78] sm:$0x3] 0.0
      %253 = vst [vmem:[#allocation2 + $0x80] sm:$0xff] 0.0
      %254 = vst [vmem:[#allocation2 + $0x88] sm:$0x3] 0.0
      %255 = vst [vmem:[#allocation2 + $0x90] sm:$0xff] 0.0
      %256 = vst [vmem:[#allocation2 + $0x98] sm:$0x3] 0.0
      %v257 = vld [vmem:[%s1] sm:$0x1]
      %v258 = vld [vmem:[%s2] sm:$0x1]
      %v259 = vld [vmem:[%s226] sm:$0xf]
      %v260 = vld [vmem:[%s226 + $0x4] sm:$0xf]
      %v261 = vld [vmem:[%s226 + $0x8] sm:$0xf]
      %v262 = vld [vmem:[%s226 + $0xc] sm:$0xf]
      %v263 = vld [vmem:[%s226 + $0x10] sm:$0xf]
      %v264 = vld [vmem:[%s226 + $0x14] sm:$0xf]
      %v265 = vld [vmem:[%s226 + $0x18] sm:$0xf]
      %v266 = vld [vmem:[%s226 + $0x1c] sm:$0xf]
      %v267 = vunpack.c.l.bf16 %v259
      %v268 = vunpack.c.l.bf16 %v260
      %v269 = vunpack.c.l.bf16 %v261
      %v270 = vunpack.c.l.bf16 %v262
      %v271 = vunpack.c.l.bf16 %v263
      %v272 = vunpack.c.l.bf16 %v264
      %v273 = vunpack.c.l.bf16 %v265
      %v274 = vunpack.c.l.bf16 %v266
      %v276 = vlaneseq
      %v277 = vshrl.u32 %v276, 7
      %v278 = vsub.s32 0, %v277
      %v279 = vrot.slane %v257, %v278
      %v281 = vmul.f32 %v267, %v279
      %v282 = vmul.f32 %v268, %v279
      %v283 = vmul.f32 %v269, %v279
      %v284 = vmul.f32 %v270, %v279
      %v285 = vmul.f32 %v271, %v279
      %v286 = vmul.f32 %v272, %v279
      %v287 = vmul.f32 %v273, %v279
      %v288 = vmul.f32 %v274, %v279
      %v290 = vlaneseq
      %v291 = vshrl.u32 %v290, 7
      %v292 = vsub.s32 0, %v291
      %v293 = vrot.slane %v258, %v292
      %v295 = vadd.f32 %v281, %v293
      %v296 = vadd.f32 %v282, %v293
      %v297 = vadd.f32 %v283, %v293
      %v298 = vadd.f32 %v284, %v293
      %v299 = vadd.f32 %v285, %v293
      %v300 = vadd.f32 %v286, %v293
      %v301 = vadd.f32 %v287, %v293
      %v302 = vadd.f32 %v288, %v293
      %v303 = vmax.f32 %v295, 0.0
      %v304 = vmax.f32 %v296, 0.0
      %v305 = vmax.f32 %v297, 0.0
      %v306 = vmax.f32 %v298, 0.0
      %v307 = vmax.f32 %v299, 0.0
      %v308 = vmax.f32 %v300, 0.0
      %v309 = vmax.f32 %v301, 0.0
      %v310 = vmax.f32 %v302, 0.0
      %s311 = scalar_lea.vmem [#allocation2], 16
      %312 = vst [vmem:[%s311 + $0x1] sm:$0xff] %v303
      %313 = vst [vmem:[%s311 + $0x11] sm:$0xff] %v304
      %314 = vst [vmem:[%s311 + $0x21] sm:$0xff] %v305
      %315 = vst [vmem:[%s311 + $0x31] sm:$0xff] %v306
      %316 = vst [vmem:[%s311 + $0x41] sm:$0xff] %v307
      %317 = vst [vmem:[%s311 + $0x51] sm:$0xff] %v308
      %318 = vst [vmem:[%s311 + $0x61] sm:$0xff] %v309
      %319 = vst [vmem:[%s311 + $0x71] sm:$0xff] %v310
      %320 = vst [vmem:[#allocation3] sm:$0xff] 0.0
      %321 = vst [vmem:[#allocation3 + $0x8] sm:$0xff] 0.0
      %322 = vst [vmem:[#allocation3 + $0x10] sm:$0xff] 0.0
      %323 = vst [vmem:[#allocation3 + $0x18] sm:$0xff] 0.0
      %324 = vst [vmem:[#allocation3 + $0x20] sm:$0xff] 0.0
      %325 = vst [vmem:[#allocation3 + $0x28] sm:$0xff] 0.0
      %326 = vst [vmem:[#allocation3 + $0x30] sm:$0xff] 0.0
      %327 = vst [vmem:[#allocation3 + $0x38] sm:$0xff] 0.0
      %v328 = vld [vmem:[#allocation2] sm:$0xff]
      %v329 = vld [vmem:[#allocation2 + $0x8] sm:$0x3]
      %v330 = vld [vmem:[#allocation2 + $0x10] sm:$0xff]
      %v331 = vld [vmem:[#allocation2 + $0x18] sm:$0x3]
      %v332 = vld [vmem:[#allocation2 + $0x20] sm:$0xff]
      %v333 = vld [vmem:[#allocation2 + $0x28] sm:$0x3]
      %v334 = vld [vmem:[#allocation2 + $0x30] sm:$0xff]
      %v335 = vld [vmem:[#allocation2 + $0x38] sm:$0x3]
      %v336 = vld [vmem:[#allocation2 + $0x40] sm:$0xff]
      %v337 = vld [vmem:[#allocation2 + $0x48] sm:$0x3]
      %v338 = vld [vmem:[#allocation2 + $0x50] sm:$0xff]
      %v339 = vld [vmem:[#allocation2 + $0x58] sm:$0x3]
      %v340 = vld [vmem:[#allocation2 + $0x60] sm:$0xff]
      %v341 = vld [vmem:[#allocation2 + $0x68] sm:$0x3]
      %v342 = vld [vmem:[#allocation2 + $0x70] sm:$0xff]
      %v343 = vld [vmem:[#allocation2 + $0x78] sm:$0x3]
      %vm360 = vcmask 1046528
      %v361 = vrot.slane %v328, 1
      %v362 = vrot.slane %v329, 1
      %v363 = vsel %vm360, %v361, %v362
      %v364 = vrot.slane %v330, 1
      %v365 = vrot.slane %v331, 1
      %v366 = vsel %vm360, %v364, %v365
      %v367 = vrot.slane %v332, 1
      %v368 = vrot.slane %v333, 1
      %v369 = vsel %vm360, %v367, %v368
      %v370 = vrot.slane %v334, 1
      %v371 = vrot.slane %v335, 1
      %v372 = vsel %vm360, %v370, %v371
      %v373 = vrot.slane %v336, 1
      %v374 = vrot.slane %v337, 1
      %v375 = vsel %vm360, %v373, %v374
      %v376 = vrot.slane %v338, 1
      %v377 = vrot.slane %v339, 1
      %v378 = vsel %vm360, %v376, %v377
      %v379 = vrot.slane %v340, 1
      %v380 = vrot.slane %v341, 1
      %v381 = vsel %vm360, %v379, %v380
      %v382 = vrot.slane %v342, 1
      %v383 = vrot.slane %v343, 1
      %v384 = vsel %vm360, %v382, %v383
      %vm393 = vcmask 1045504
      %v394 = vrot.slane %v328, 2
      %v395 = vrot.slane %v329, 2
      %v396 = vsel %vm393, %v394, %v395
      %v397 = vrot.slane %v330, 2
      %v398 = vrot.slane %v331, 2
      %v399 = vsel %vm393, %v397, %v398
      %v400 = vrot.slane %v332, 2
      %v401 = vrot.slane %v333, 2
      %v402 = vsel %vm393, %v400, %v401
      %v403 = vrot.slane %v334, 2
      %v404 = vrot.slane %v335, 2
      %v405 = vsel %vm393, %v403, %v404
      %v406 = vrot.slane %v336, 2
      %v407 = vrot.slane %v337, 2
      %v408 = vsel %vm393, %v406, %v407
      %v409 = vrot.slane %v338, 2
      %v410 = vrot.slane %v339, 2
      %v411 = vsel %vm393, %v409, %v410
      %v412 = vrot.slane %v340, 2
      %v413 = vrot.slane %v341, 2
      %v414 = vsel %vm393, %v412, %v413
      %v415 = vrot.slane %v342, 2
      %v416 = vrot.slane %v343, 2
      %v417 = vsel %vm393, %v415, %v416
      %v426 = vpack.c.bf16 %v328, %v328
      %v427 = vpack.c.bf16 %v363, %v363
      %v428 = vpack.c.bf16 %v396, %v396
      %v429 = vpack.c.bf16 %v330, %v330
      %v430 = vpack.c.bf16 %v366, %v366
      %v431 = vpack.c.bf16 %v399, %v399
      %v432 = vpack.c.bf16 %v332, %v332
      %v433 = vpack.c.bf16 %v369, %v369
      %v434 = vpack.c.bf16 %v402, %v402
      %v435 = vpack.c.bf16 %v334, %v334
      %v436 = vpack.c.bf16 %v372, %v372
      %v437 = vpack.c.bf16 %v405, %v405
      %v438 = vpack.c.bf16 %v336, %v336
      %v439 = vpack.c.bf16 %v375, %v375
      %v440 = vpack.c.bf16 %v408, %v408
      %v441 = vpack.c.bf16 %v338, %v338
      %v442 = vpack.c.bf16 %v378, %v378
      %v443 = vpack.c.bf16 %v411, %v411
      %v444 = vpack.c.bf16 %v340, %v340
      %v445 = vpack.c.bf16 %v381, %v381
      %v446 = vpack.c.bf16 %v414, %v414
      %v447 = vpack.c.bf16 %v342, %v342
      %v448 = vpack.c.bf16 %v384, %v384
      %v449 = vpack.c.bf16 %v417, %v417
      %v474 = vunpack.c.l.b16 %v426
      %v475 = vunpack.c.l.b16 %v427
      %v476 = vunpack.c.l.b16 %v428
      %v477 = vunpack.c.l.b16 %v429
      %v478 = vunpack.c.l.b16 %v430
      %v479 = vunpack.c.l.b16 %v431
      %v480 = vunpack.c.l.b16 %v432
      %v481 = vunpack.c.l.b16 %v433
      %v482 = vunpack.c.l.b16 %v434
      %v483 = vunpack.c.l.b16 %v435
      %v484 = vunpack.c.l.b16 %v436
      %v485 = vunpack.c.l.b16 %v437
      %v486 = vunpack.c.l.b16 %v438
      %v487 = vunpack.c.l.b16 %v439
      %v488 = vunpack.c.l.b16 %v440
      %v489 = vunpack.c.l.b16 %v441
      %v490 = vunpack.c.l.b16 %v442
      %v491 = vunpack.c.l.b16 %v443
      %v492 = vunpack.c.l.b16 %v444
      %v493 = vunpack.c.l.b16 %v445
      %v494 = vunpack.c.l.b16 %v446
      %v495 = vunpack.c.l.b16 %v447
      %v496 = vunpack.c.l.b16 %v448
      %v497 = vunpack.c.l.b16 %v449
      %v498 = vld [vmem:[#allocation3] sm:$0xff]
      %v499 = vld [vmem:[#allocation3 + $0x8] sm:$0xff]
      %v500 = vld [vmem:[#allocation3 + $0x10] sm:$0xff]
      %v501 = vld [vmem:[#allocation3 + $0x18] sm:$0xff]
      %v502 = vld [vmem:[#allocation3 + $0x20] sm:$0xff]
      %v503 = vld [vmem:[#allocation3 + $0x28] sm:$0xff]
      %v504 = vld [vmem:[#allocation3 + $0x30] sm:$0xff]
      %v505 = vld [vmem:[#allocation3 + $0x38] sm:$0xff]
      %v506 = vld [vmem:[%s3] sm:$0xf]
      %v507 = vld [vmem:[%s3 + $0x4] sm:$0xf]
      %v508 = vld [vmem:[%s3 + $0x8] sm:$0xf]
      %v509 = vld [vmem:[%s3 + $0xc] sm:$0xf]
      %v510 = vld [vmem:[%s3 + $0x10] sm:$0xf]
      %v511 = vld [vmem:[%s3 + $0x14] sm:$0xf]
      %v512 = vld [vmem:[%s3 + $0x18] sm:$0xf]
      %v513 = vld [vmem:[%s3 + $0x1c] sm:$0xf]
      %v514 = vld [vmem:[%s3 + $0x20] sm:$0xf]
      %v515 = vld [vmem:[%s3 + $0x24] sm:$0xf]
      %v516 = vld [vmem:[%s3 + $0x28] sm:$0xf]
      %v517 = vld [vmem:[%s3 + $0x2c] sm:$0xf]
      %v518 = vld [vmem:[%s3 + $0x30] sm:$0xf]
      %v519 = vld [vmem:[%s3 + $0x34] sm:$0xf]
      %v520 = vld [vmem:[%s3 + $0x38] sm:$0xf]
      %v521 = vld [vmem:[%s3 + $0x3c] sm:$0xf]
      %v522 = vld [vmem:[%s3 + $0x40] sm:$0xf]
      %v523 = vld [vmem:[%s3 + $0x44] sm:$0xf]
      %v524 = vld [vmem:[%s3 + $0x48] sm:$0xf]
      %v525 = vld [vmem:[%s3 + $0x4c] sm:$0xf]
      %v526 = vld [vmem:[%s3 + $0x50] sm:$0xf]
      %v527 = vld [vmem:[%s3 + $0x54] sm:$0xf]
      %v528 = vld [vmem:[%s3 + $0x58] sm:$0xf]
      %v529 = vld [vmem:[%s3 + $0x5c] sm:$0xf]
      %v530 = vld [vmem:[%s3 + $0x60] sm:$0xf]
      %v531 = vld [vmem:[%s3 + $0x64] sm:$0xf]
      %v532 = vld [vmem:[%s3 + $0x68] sm:$0xf]
      %v533 = vld [vmem:[%s3 + $0x6c] sm:$0xf]
      %v534 = vld [vmem:[%s3 + $0x70] sm:$0xf]
      %v535 = vld [vmem:[%s3 + $0x74] sm:$0xf]
      %v536 = vld [vmem:[%s3 + $0x78] sm:$0xf]
      %v537 = vld [vmem:[%s3 + $0x7c] sm:$0xf]
      %v538 = vld [vmem:[%s3 + $0x80] sm:$0xf]
      %v539 = vld [vmem:[%s3 + $0x84] sm:$0xf]
      %v540 = vld [vmem:[%s3 + $0x88] sm:$0xf]
      %v541 = vld [vmem:[%s3 + $0x8c] sm:$0xf]
      %v542 = vld [vmem:[%s3 + $0x90] sm:$0xf]
      %v543 = vld [vmem:[%s3 + $0x94] sm:$0xf]
      %v544 = vld [vmem:[%s3 + $0x98] sm:$0xf]
      %v545 = vld [vmem:[%s3 + $0x9c] sm:$0xf]
      %v546 = vld [vmem:[%s3 + $0xa0] sm:$0xf]
      %v547 = vld [vmem:[%s3 + $0xa4] sm:$0xf]
      %v548 = vld [vmem:[%s3 + $0xa8] sm:$0xf]
      %v549 = vld [vmem:[%s3 + $0xac] sm:$0xf]
      %v550 = vld [vmem:[%s3 + $0xb0] sm:$0xf]
      %v551 = vld [vmem:[%s3 + $0xb4] sm:$0xf]
      %v552 = vld [vmem:[%s3 + $0xb8] sm:$0xf]
      %v553 = vld [vmem:[%s3 + $0xbc] sm:$0xf]
      %v554 = vpack.c.b16 %v477, %v474
      %v555 = vpack.c.b16 %v478, %v475
      %v556 = vpack.c.b16 %v479, %v476
      %v557 = vpack.c.b16 %v483, %v480
      %v558 = vpack.c.b16 %v484, %v481
      %v559 = vpack.c.b16 %v485, %v482
      %v560 = vpack.c.b16 %v489, %v486
      %v561 = vpack.c.b16 %v490, %v487
      %v562 = vpack.c.b16 %v491, %v488
      %v563 = vpack.c.b16 %v495, %v492
      %v564 = vpack.c.b16 %v496, %v493
      %v565 = vpack.c.b16 %v497, %v494
      %v626 = vunpack.c.l.b16 %v506
      %v627 = vunpack.c.l.b16 %v507
      %v628 = vunpack.c.l.b16 %v508
      %v629 = vunpack.c.l.b16 %v509
      %v630 = vunpack.c.l.b16 %v510
      %v631 = vunpack.c.l.b16 %v511
      %v632 = vunpack.c.l.b16 %v512
      %v633 = vunpack.c.l.b16 %v513
      %v634 = vunpack.c.l.b16 %v514
      %v635 = vunpack.c.l.b16 %v515
      %v636 = vunpack.c.l.b16 %v516
      %v637 = vunpack.c.l.b16 %v517
      %v638 = vunpack.c.l.b16 %v518
      %v639 = vunpack.c.l.b16 %v519
      %v640 = vunpack.c.l.b16 %v520
      %v641 = vunpack.c.l.b16 %v521
      %v642 = vunpack.c.l.b16 %v522
      %v643 = vunpack.c.l.b16 %v523
      %v644 = vunpack.c.l.b16 %v524
      %v645 = vunpack.c.l.b16 %v525
      %v646 = vunpack.c.l.b16 %v526
      %v647 = vunpack.c.l.b16 %v527
      %v648 = vunpack.c.l.b16 %v528
      %v649 = vunpack.c.l.b16 %v529
      %v650 = vunpack.c.l.b16 %v530
      %v651 = vunpack.c.l.b16 %v531
      %v652 = vunpack.c.l.b16 %v532
      %v653 = vunpack.c.l.b16 %v533
      %v654 = vunpack.c.l.b16 %v534
      %v655 = vunpack.c.l.b16 %v535
      %v656 = vunpack.c.l.b16 %v536
      %v657 = vunpack.c.l.b16 %v537
      %v658 = vunpack.c.l.b16 %v538
      %v659 = vunpack.c.l.b16 %v539
      %v660 = vunpack.c.l.b16 %v540
      %v661 = vunpack.c.l.b16 %v541
      %v662 = vunpack.c.l.b16 %v542
      %v663 = vunpack.c.l.b16 %v543
      %v664 = vunpack.c.l.b16 %v544
      %v665 = vunpack.c.l.b16 %v545
      %v666 = vunpack.c.l.b16 %v546
      %v667 = vunpack.c.l.b16 %v547
      %v668 = vunpack.c.l.b16 %v548
      %v669 = vunpack.c.l.b16 %v549
      %v670 = vunpack.c.l.b16 %v550
      %v671 = vunpack.c.l.b16 %v551
      %v672 = vunpack.c.l.b16 %v552
      %v673 = vunpack.c.l.b16 %v553
      %v674 = vpack.c.b16 %v627, %v626
      %v675 = vpack.c.b16 %v629, %v628
      %v676 = vpack.c.b16 %v631, %v630
      %v677 = vpack.c.b16 %v633, %v632
      %v678 = vpack.c.b16 %v635, %v634
      %v679 = vpack.c.b16 %v637, %v636
      %v680 = vpack.c.b16 %v639, %v638
      %v681 = vpack.c.b16 %v641, %v640
      %v682 = vpack.c.b16 %v643, %v642
      %v683 = vpack.c.b16 %v645, %v644
      %v684 = vpack.c.b16 %v647, %v646
      %v685 = vpack.c.b16 %v649, %v648
      %v686 = vpack.c.b16 %v651, %v650
      %v687 = vpack.c.b16 %v653, %v652
      %v688 = vpack.c.b16 %v655, %v654
      %v689 = vpack.c.b16 %v657, %v656
      %v690 = vpack.c.b16 %v659, %v658
      %v691 = vpack.c.b16 %v661, %v660
      %v692 = vpack.c.b16 %v663, %v662
      %v693 = vpack.c.b16 %v665, %v664
      %v694 = vpack.c.b16 %v667, %v666
      %v695 = vpack.c.b16 %v669, %v668
      %v696 = vpack.c.b16 %v671, %v670
      %v697 = vpack.c.b16 %v673, %v672
      %722 = vmatprep.subr.bf16.mxu0 0
      %723 = vmatpush1.bf16.msra.mxu0 %v674
      %724 = vmatprep.subr.bf16.mxu0 0
      %725 = vmatpush1.bf16.msra.mxu0 %v675
      %726 = vmatprep.subr.bf16.mxu0 0
      %727 = vmatpush1.bf16.msra.mxu0 %v676
      %728 = vmatprep.subr.bf16.mxu0 0
      %729 = vmatpush1.bf16.msra.mxu0 %v677
      %730 = vmatprep.subr.bf16.mxu0 0
      %731 = vmatpush1.bf16.msra.mxu0 %v678
      %732 = vmatprep.subr.bf16.mxu0 0
      %733 = vmatpush1.bf16.msra.mxu0 %v679
      %734 = vmatprep.subr.bf16.mxu0 0
      %735 = vmatpush1.bf16.msra.mxu0 %v680
      %736 = vmatprep.subr.bf16.mxu0 0
      %737 = vmatpush1.bf16.msra.mxu0 %v681
      %738 = vmatprep.subr.bf16.mxu0 0
      %739 = vmatpush1.bf16.msra.mxu0 %v682
      %740 = vmatprep.subr.bf16.mxu0 0
      %741 = vmatpush1.bf16.msra.mxu0 %v683
      %742 = vmatprep.subr.bf16.mxu0 0
      %743 = vmatpush1.bf16.msra.mxu0 %v684
      %744 = vmatprep.subr.bf16.mxu0 0
      %745 = vmatpush1.bf16.msra.mxu0 %v685
      %746 = vmatprep.subr.bf16.mxu0 0
      %747 = vmatpush1.bf16.msra.mxu0 %v686
      %748 = vmatprep.subr.bf16.mxu0 0
      %749 = vmatpush1.bf16.msra.mxu0 %v687
      %750 = vmatprep.subr.bf16.mxu0 0
      %751 = vmatpush1.bf16.msra.mxu0 %v688
      %752 = vmatprep.subr.bf16.mxu0 0
      %753 = vmatpush1.bf16.msra.mxu0 %v689
      %754 = vmatprep.mubr.bf16.mxu0 %v555
      %755 = vmatmul.mubr.bf16.gmra.mrb[0].mxu0 %v554
      %v756 = vpop.f32.mrb[0].mxu0
      %v757 = vadd.f32 0.0, %v756
      %v758 = vpop.f32.mrb[0].mxu0
      %v759 = vpop.f32.mrb[0].mxu0
      %v760 = vadd.f32 0.0, %v759
      %v761 = vpop.f32.mrb[0].mxu0
      %762 = vmatprep.mubr.bf16.mxu0 %v558
      %763 = vmatmul.mubr.bf16.gmra.mrb[0].mxu0 %v557
      %v764 = vpop.f32.mrb[0].mxu0
      %v765 = vadd.f32 0.0, %v764
      %v766 = vpop.f32.mrb[0].mxu0
      %v767 = vpop.f32.mrb[0].mxu0
      %v768 = vadd.f32 0.0, %v767
      %v769 = vpop.f32.mrb[0].mxu0
      %770 = vmatprep.mubr.bf16.mxu0 %v561
      %771 = vmatmul.mubr.bf16.gmra.mrb[0].mxu0 %v560
      %v772 = vpop.f32.mrb[0].mxu0
      %v773 = vadd.f32 0.0, %v772
      %v774 = vpop.f32.mrb[0].mxu0
      %v775 = vpop.f32.mrb[0].mxu0
      %v776 = vadd.f32 0.0, %v775
      %v777 = vpop.f32.mrb[0].mxu0
      %778 = vmatprep.mubr.bf16.mxu0 %v564
      %779 = vmatmul.mubr.bf16.gmra.mrb[0].mxu0 %v563
      %v780 = vpop.f32.mrb[0].mxu0
      %v781 = vadd.f32 0.0, %v780
      %v782 = vpop.f32.mrb[0].mxu0
      %v783 = vpop.f32.mrb[0].mxu0
      %v784 = vadd.f32 0.0, %v783
      %v785 = vpop.f32.mrb[0].mxu0
      %786 = vdwg.mxu0
      %787 = vmatprep.subr.bf16.mxu0 0
      %788 = vmatpush1.bf16.msra.mxu0 %v690
      %789 = vmatprep.subr.bf16.mxu0 0
      %790 = vmatpush1.bf16.msra.mxu0 %v691
      %791 = vmatprep.subr.bf16.mxu0 0
      %792 = vmatpush1.bf16.msra.mxu0 %v692
      %793 = vmatprep.subr.bf16.mxu0 0
      %794 = vmatpush1.bf16.msra.mxu0 %v693
      %795 = vmatprep.subr.bf16.mxu0 0
      %796 = vmatpush1.bf16.msra.mxu0 %v694
      %797 = vmatprep.subr.bf16.mxu0 0
      %798 = vmatpush1.bf16.msra.mxu0 %v695
      %799 = vmatprep.subr.bf16.mxu0 0
      %800 = vmatpush1.bf16.msra.mxu0 %v696
      %801 = vmatprep.subr.bf16.mxu0 0
      %802 = vmatpush1.bf16.msra.mxu0 %v697
      %803 = vmatprep.subr.bf16.mxu0 0
      %804 = vmatpush1.bf16.msra.mxu0 0
      %805 = vmatprep.subr.bf16.mxu0 0
      %806 = vmatpush1.bf16.msra.mxu0 0
      %807 = vmatprep.subr.bf16.mxu0 0
      %808 = vmatpush1.bf16.msra.mxu0 0
      %809 = vmatprep.subr.bf16.mxu0 0
      %810 = vmatpush1.bf16.msra.mxu0 0
      %811 = vmatprep.subr.bf16.mxu0 0
      %812 = vmatpush1.bf16.msra.mxu0 0
      %813 = vmatprep.subr.bf16.mxu0 0
      %814 = vmatpush1.bf16.msra.mxu0 0
      %815 = vmatprep.subr.bf16.mxu0 0
      %816 = vmatpush1.bf16.msra.mxu0 0
      %817 = vmatprep.subr.bf16.mxu0 0
      %818 = vmatpush1.bf16.msra.mxu0 0
      %819 = vmatprep.mubr.bf16.mxu0 0
      %820 = vmatmul.mubr.bf16.gmra.mrb[0].mxu0 %v556
      %v821 = vpop.f32.mrb[0].mxu0
      %v822 = vadd.f32 %v757, %v821
      %v823 = vpop.f32.mrb[0].mxu0
      %v824 = vpop.f32.mrb[0].mxu0
      %v825 = vadd.f32 %v760, %v824
      %v826 = vpop.f32.mrb[0].mxu0
      %827 = vmatprep.mubr.bf16.mxu0 0
      %828 = vmatmul.mubr.bf16.gmra.mrb[0].mxu0 %v559
      %v829 = vpop.f32.mrb[0].mxu0
      %v830 = vadd.f32 %v765, %v829
      %v831 = vpop.f32.mrb[0].mxu0
      %v832 = vpop.f32.mrb[0].mxu0
      %v833 = vadd.f32 %v768, %v832
      %v834 = vpop.f32.mrb[0].mxu0
      %835 = vmatprep.mubr.bf16.mxu0 0
      %836 = vmatmul.mubr.bf16.gmra.mrb[0].mxu0 %v562
      %v837 = vpop.f32.mrb[0].mxu0
      %v838 = vadd.f32 %v773, %v837
      %v839 = vpop.f32.mrb[0].mxu0
      %v840 = vpop.f32.mrb[0].mxu0
      %v841 = vadd.f32 %v776, %v840
      %v842 = vpop.f32.mrb[0].mxu0
      %843 = vmatprep.mubr.bf16.mxu0 0
      %844 = vmatmul.mubr.bf16.gmra.mrb[0].mxu0 %v565
      %v845 = vpop.f32.mrb[0].mxu0
      %v846 = vadd.f32 %v781, %v845
      %v847 = vpop.f32.mrb[0].mxu0
      %v848 = vpop.f32.mrb[0].mxu0
      %v849 = vadd.f32 %v784, %v848
      %v850 = vpop.f32.mrb[0].mxu0
      %851 = vdwg.mxu0
      %v852 = vadd.f32 %v498, %v822
      %v853 = vadd.f32 %v499, %v825
      %v854 = vadd.f32 %v500, %v830
      %v855 = vadd.f32 %v501, %v833
      %v856 = vadd.f32 %v502, %v838
      %v857 = vadd.f32 %v503, %v841
      %v858 = vadd.f32 %v504, %v846
      %v859 = vadd.f32 %v505, %v849
      %860 = vst [vmem:[#allocation3] sm:$0xff] %v852
      %861 = vst [vmem:[#allocation3 + $0x8] sm:$0xff] %v853
      %862 = vst [vmem:[#allocation3 + $0x10] sm:$0xff] %v854
      %863 = vst [vmem:[#allocation3 + $0x18] sm:$0xff] %v855
      %864 = vst [vmem:[#allocation3 + $0x20] sm:$0xff] %v856
      %865 = vst [vmem:[#allocation3 + $0x28] sm:$0xff] %v857
      %866 = vst [vmem:[#allocation3 + $0x30] sm:$0xff] %v858
      %867 = vst [vmem:[#allocation3 + $0x38] sm:$0xff] %v859
      %v868 = vld [vmem:[%s311] sm:$0xff]
      %v869 = vld [vmem:[%s311 + $0x8] sm:$0x3]
      %v870 = vld [vmem:[%s311 + $0x10] sm:$0xff]
      %v871 = vld [vmem:[%s311 + $0x18] sm:$0x3]
      %v872 = vld [vmem:[%s311 + $0x20] sm:$0xff]
      %v873 = vld [vmem:[%s311 + $0x28] sm:$0x3]
      %v874 = vld [vmem:[%s311 + $0x30] sm:$0xff]
      %v875 = vld [vmem:[%s311 + $0x38] sm:$0x3]
      %v876 = vld [vmem:[%s311 + $0x40] sm:$0xff]
      %v877 = vld [vmem:[%s311 + $0x48] sm:$0x3]
      %v878 = vld [vmem:[%s311 + $0x50] sm:$0xff]
      %v879 = vld [vmem:[%s311 + $0x58] sm:$0x3]
      %v880 = vld [vmem:[%s311 + $0x60] sm:$0xff]
      %v881 = vld [vmem:[%s311 + $0x68] sm:$0x3]
      %v882 = vld [vmem:[%s311 + $0x70] sm:$0xff]
      %v883 = vld [vmem:[%s311 + $0x78] sm:$0x3]
      %v900 = vrot.slane %v868, 1
      %v901 = vrot.slane %v869, 1
      %v902 = vsel %vm360, %v900, %v901
      %v903 = vrot.slane %v870, 1
      %v904 = vrot.slane %v871, 1
      %v905 = vsel %vm360, %v903, %v904
      %v906 = vrot.slane %v872, 1
      %v907 = vrot.slane %v873, 1
      %v908 = vsel %vm360, %v906, %v907
      %v909 = vrot.slane %v874, 1
      %v910 = vrot.slane %v875, 1
      %v911 = vsel %vm360, %v909, %v910
      %v912 = vrot.slane %v876, 1
      %v913 = vrot.slane %v877, 1
      %v914 = vsel %vm360, %v912, %v913
      %v915 = vrot.slane %v878, 1
      %v916 = vrot.slane %v879, 1
      %v917 = vsel %vm360, %v915, %v916
      %v918 = vrot.slane %v880, 1
      %v919 = vrot.slane %v881, 1
      %v920 = vsel %vm360, %v918, %v919
      %v921 = vrot.slane %v882, 1
      %v922 = vrot.slane %v883, 1
      %v923 = vsel %vm360, %v921, %v922
      %v932 = vrot.slane %v868, 2
      %v933 = vrot.slane %v869, 2
      %v934 = vsel %vm393, %v932, %v933
      %v935 = vrot.slane %v870, 2
      %v936 = vrot.slane %v871, 2
      %v937 = vsel %vm393, %v935, %v936
      %v938 = vrot.slane %v872, 2
      %v939 = vrot.slane %v873, 2
      %v940 = vsel %vm393, %v938, %v939
      %v941 = vrot.slane %v874, 2
      %v942 = vrot.slane %v875, 2
      %v943 = vsel %vm393, %v941, %v942
      %v944 = vrot.slane %v876, 2
      %v945 = vrot.slane %v877, 2
      %v946 = vsel %vm393, %v944, %v945
      %v947 = vrot.slane %v878, 2
      %v948 = vrot.slane %v879, 2
      %v949 = vsel %vm393, %v947, %v948
      %v950 = vrot.slane %v880, 2
      %v951 = vrot.slane %v881, 2
      %v952 = vsel %vm393, %v950, %v951
      %v953 = vrot.slane %v882, 2
      %v954 = vrot.slane %v883, 2
      %v955 = vsel %vm393, %v953, %v954
      %v964 = vpack.c.bf16 %v868, %v868
      %v965 = vpack.c.bf16 %v902, %v902
      %v966 = vpack.c.bf16 %v934, %v934
      %v967 = vpack.c.bf16 %v870, %v870
      %v968 = vpack.c.bf16 %v905, %v905
      %v969 = vpack.c.bf16 %v937, %v937
      %v970 = vpack.c.bf16 %v872, %v872
      %v971 = vpack.c.bf16 %v908, %v908
      %v972 = vpack.c.bf16 %v940, %v940
      %v973 = vpack.c.bf16 %v874, %v874
      %v974 = vpack.c.bf16 %v911, %v911
      %v975 = vpack.c.bf16 %v943, %v943
      %v976 = vpack.c.bf16 %v876, %v876
      %v977 = vpack.c.bf16 %v914, %v914
      %v978 = vpack.c.bf16 %v946, %v946
      %v979 = vpack.c.bf16 %v878, %v878
      %v980 = vpack.c.bf16 %v917, %v917
      %v981 = vpack.c.bf16 %v949, %v949
      %v982 = vpack.c.bf16 %v880, %v880
      %v983 = vpack.c.bf16 %v920, %v920
      %v984 = vpack.c.bf16 %v952, %v952
      %v985 = vpack.c.bf16 %v882, %v882
      %v986 = vpack.c.bf16 %v923, %v923
      %v987 = vpack.c.bf16 %v955, %v955
      %v1012 = vunpack.c.l.b16 %v964
      %v1013 = vunpack.c.l.b16 %v965
      %v1014 = vunpack.c.l.b16 %v966
      %v1015 = vunpack.c.l.b16 %v967
      %v1016 = vunpack.c.l.b16 %v968
      %v1017 = vunpack.c.l.b16 %v969
      %v1018 = vunpack.c.l.b16 %v970
      %v1019 = vunpack.c.l.b16 %v971
      %v1020 = vunpack.c.l.b16 %v972
      %v1021 = vunpack.c.l.b16 %v973
      %v1022 = vunpack.c.l.b16 %v974
      %v1023 = vunpack.c.l.b16 %v975
      %v1024 = vunpack.c.l.b16 %v976
      %v1025 = vunpack.c.l.b16 %v977
      %v1026 = vunpack.c.l.b16 %v978
      %v1027 = vunpack.c.l.b16 %v979
      %v1028 = vunpack.c.l.b16 %v980
      %v1029 = vunpack.c.l.b16 %v981
      %v1030 = vunpack.c.l.b16 %v982
      %v1031 = vunpack.c.l.b16 %v983
      %v1032 = vunpack.c.l.b16 %v984
      %v1033 = vunpack.c.l.b16 %v985
      %v1034 = vunpack.c.l.b16 %v986
      %v1035 = vunpack.c.l.b16 %v987
      %v1036 = vld [vmem:[#allocation3] sm:$0xff]
      %v1037 = vld [vmem:[#allocation3 + $0x8] sm:$0xff]
      %v1038 = vld [vmem:[#allocation3 + $0x10] sm:$0xff]
      %v1039 = vld [vmem:[#allocation3 + $0x18] sm:$0xff]
      %v1040 = vld [vmem:[#allocation3 + $0x20] sm:$0xff]
      %v1041 = vld [vmem:[#allocation3 + $0x28] sm:$0xff]
      %v1042 = vld [vmem:[#allocation3 + $0x30] sm:$0xff]
      %v1043 = vld [vmem:[#allocation3 + $0x38] sm:$0xff]
      %s1044 = scalar_lea.vmem %s3, 192
      %v1045 = vld [vmem:[%s1044] sm:$0xf]
      %v1046 = vld [vmem:[%s1044 + $0x4] sm:$0xf]
      %v1047 = vld [vmem:[%s1044 + $0x8] sm:$0xf]
      %v1048 = vld [vmem:[%s1044 + $0xc] sm:$0xf]
      %v1049 = vld [vmem:[%s1044 + $0x10] sm:$0xf]
      %v1050 = vld [vmem:[%s1044 + $0x14] sm:$0xf]
      %v1051 = vld [vmem:[%s1044 + $0x18] sm:$0xf]
      %v1052 = vld [vmem:[%s1044 + $0x1c] sm:$0xf]
      %v1053 = vld [vmem:[%s1044 + $0x20] sm:$0xf]
      %v1054 = vld [vmem:[%s1044 + $0x24] sm:$0xf]
      %v1055 = vld [vmem:[%s1044 + $0x28] sm:$0xf]
      %v1056 = vld [vmem:[%s1044 + $0x2c] sm:$0xf]
      %v1057 = vld [vmem:[%s1044 + $0x30] sm:$0xf]
      %v1058 = vld [vmem:[%s1044 + $0x34] sm:$0xf]
      %v1059 = vld [vmem:[%s1044 + $0x38] sm:$0xf]
      %v1060 = vld [vmem:[%s1044 + $0x3c] sm:$0xf]
      %v1061 = vld [vmem:[%s1044 + $0x40] sm:$0xf]
      %v1062 = vld [vmem:[%s1044 + $0x44] sm:$0xf]
      %v1063 = vld [vmem:[%s1044 + $0x48] sm:$0xf]
      %v1064 = vld [vmem:[%s1044 + $0x4c] sm:$0xf]
      %v1065 = vld [vmem:[%s1044 + $0x50] sm:$0xf]
      %v1066 = vld [vmem:[%s1044 + $0x54] sm:$0xf]
      %v1067 = vld [vmem:[%s1044 + $0x58] sm:$0xf]
      %v1068 = vld [vmem:[%s1044 + $0x5c] sm:$0xf]
      %v1069 = vld [vmem:[%s1044 + $0x60] sm:$0xf]
      %v1070 = vld [vmem:[%s1044 + $0x64] sm:$0xf]
      %v1071 = vld [vmem:[%s1044 + $0x68] sm:$0xf]
      %v1072 = vld [vmem:[%s1044 + $0x6c] sm:$0xf]
      %v1073 = vld [vmem:[%s1044 + $0x70] sm:$0xf]
      %v1074 = vld [vmem:[%s1044 + $0x74] sm:$0xf]
      %v1075 = vld [vmem:[%s1044 + $0x78] sm:$0xf]
      %v1076 = vld [vmem:[%s1044 + $0x7c] sm:$0xf]
      %v1077 = vld [vmem:[%s1044 + $0x80] sm:$0xf]
      %v1078 = vld [vmem:[%s1044 + $0x84] sm:$0xf]
      %v1079 = vld [vmem:[%s1044 + $0x88] sm:$0xf]
      %v1080 = vld [vmem:[%s1044 + $0x8c] sm:$0xf]
      %v1081 = vld [vmem:[%s1044 + $0x90] sm:$0xf]
      %v1082 = vld [vmem:[%s1044 + $0x94] sm:$0xf]
      %v1083 = vld [vmem:[%s1044 + $0x98] sm:$0xf]
      %v1084 = vld [vmem:[%s1044 + $0x9c] sm:$0xf]
      %v1085 = vld [vmem:[%s1044 + $0xa0] sm:$0xf]
      %v1086 = vld [vmem:[%s1044 + $0xa4] sm:$0xf]
      %v1087 = vld [vmem:[%s1044 + $0xa8] sm:$0xf]
      %v1088 = vld [vmem:[%s1044 + $0xac] sm:$0xf]
      %v1089 = vld [vmem:[%s1044 + $0xb0] sm:$0xf]
      %v1090 = vld [vmem:[%s1044 + $0xb4] sm:$0xf]
      %v1091 = vld [vmem:[%s1044 + $0xb8] sm:$0xf]
      %v1092 = vld [vmem:[%s1044 + $0xbc] sm:$0xf]
      %v1093 = vpack.c.b16 %v1015, %v1012
      %v1094 = vpack.c.b16 %v1016, %v1013
      %v1095 = vpack.c.b16 %v1017, %v1014
      %v1096 = vpack.c.b16 %v1021, %v1018
      %v1097 = vpack.c.b16 %v1022, %v1019
      %v1098 = vpack.c.b16 %v1023, %v1020
      %v1099 = vpack.c.b16 %v1027, %v1024
      %v1100 = vpack.c.b16 %v1028, %v1025
      %v1101 = vpack.c.b16 %v1029, %v1026
      %v1102 = vpack.c.b16 %v1033, %v1030
      %v1103 = vpack.c.b16 %v1034, %v1031
      %v1104 = vpack.c.b16 %v1035, %v1032
      %v1165 = vunpack.c.l.b16 %v1045
      %v1166 = vunpack.c.l.b16 %v1046
      %v1167 = vunpack.c.l.b16 %v1047
      %v1168 = vunpack.c.l.b16 %v1048
      %v1169 = vunpack.c.l.b16 %v1049
      %v1170 = vunpack.c.l.b16 %v1050
      %v1171 = vunpack.c.l.b16 %v1051
      %v1172 = vunpack.c.l.b16 %v1052
      %v1173 = vunpack.c.l.b16 %v1053
      %v1174 = vunpack.c.l.b16 %v1054
      %v1175 = vunpack.c.l.b16 %v1055
      %v1176 = vunpack.c.l.b16 %v1056
      %v1177 = vunpack.c.l.b16 %v1057
      %v1178 = vunpack.c.l.b16 %v1058
      %v1179 = vunpack.c.l.b16 %v1059
      %v1180 = vunpack.c.l.b16 %v1060
      %v1181 = vunpack.c.l.b16 %v1061
      %v1182 = vunpack.c.l.b16 %v1062
      %v1183 = vunpack.c.l.b16 %v1063
      %v1184 = vunpack.c.l.b16 %v1064
      %v1185 = vunpack.c.l.b16 %v1065
      %v1186 = vunpack.c.l.b16 %v1066
      %v1187 = vunpack.c.l.b16 %v1067
      %v1188 = vunpack.c.l.b16 %v1068
      %v1189 = vunpack.c.l.b16 %v1069
      %v1190 = vunpack.c.l.b16 %v1070
      %v1191 = vunpack.c.l.b16 %v1071
      %v1192 = vunpack.c.l.b16 %v1072
      %v1193 = vunpack.c.l.b16 %v1073
      %v1194 = vunpack.c.l.b16 %v1074
      %v1195 = vunpack.c.l.b16 %v1075
      %v1196 = vunpack.c.l.b16 %v1076
      %v1197 = vunpack.c.l.b16 %v1077
      %v1198 = vunpack.c.l.b16 %v1078
      %v1199 = vunpack.c.l.b16 %v1079
      %v1200 = vunpack.c.l.b16 %v1080
      %v1201 = vunpack.c.l.b16 %v1081
      %v1202 = vunpack.c.l.b16 %v1082
      %v1203 = vunpack.c.l.b16 %v1083
      %v1204 = vunpack.c.l.b16 %v1084
      %v1205 = vunpack.c.l.b16 %v1085
      %v1206 = vunpack.c.l.b16 %v1086
      %v1207 = vunpack.c.l.b16 %v1087
      %v1208 = vunpack.c.l.b16 %v1088
      %v1209 = vunpack.c.l.b16 %v1089
      %v1210 = vunpack.c.l.b16 %v1090
      %v1211 = vunpack.c.l.b16 %v1091
      %v1212 = vunpack.c.l.b16 %v1092
      %v1213 = vpack.c.b16 %v1166, %v1165
      %v1214 = vpack.c.b16 %v1168, %v1167
      %v1215 = vpack.c.b16 %v1170, %v1169
      %v1216 = vpack.c.b16 %v1172, %v1171
      %v1217 = vpack.c.b16 %v1174, %v1173
      %v1218 = vpack.c.b16 %v1176, %v1175
      %v1219 = vpack.c.b16 %v1178, %v1177
      %v1220 = vpack.c.b16 %v1180, %v1179
      %v1221 = vpack.c.b16 %v1182, %v1181
      %v1222 = vpack.c.b16 %v1184, %v1183
      %v1223 = vpack.c.b16 %v1186, %v1185
      %v1224 = vpack.c.b16 %v1188, %v1187
      %v1225 = vpack.c.b16 %v1190, %v1189
      %v1226 = vpack.c.b16 %v1192, %v1191
      %v1227 = vpack.c.b16 %v1194, %v1193
      %v1228 = vpack.c.b16 %v1196, %v1195
      %v1229 = vpack.c.b16 %v1198, %v1197
      %v1230 = vpack.c.b16 %v1200, %v1199
      %v1231 = vpack.c.b16 %v1202, %v1201
      %v1232 = vpack.c.b16 %v1204, %v1203
      %v1233 = vpack.c.b16 %v1206, %v1205
      %v1234 = vpack.c.b16 %v1208, %v1207
      %v1235 = vpack.c.b16 %v1210, %v1209
      %v1236 = vpack.c.b16 %v1212, %v1211
      %1261 = vmatprep.subr.bf16.mxu0 0
      %1262 = vmatpush1.bf16.msra.mxu0 %v1213
      %1263 = vmatprep.subr.bf16.mxu0 0
      %1264 = vmatpush1.bf16.msra.mxu0 %v1214
      %1265 = vmatprep.subr.bf16.mxu0 0
      %1266 = vmatpush1.bf16.msra.mxu0 %v1215
      %1267 = vmatprep.subr.bf16.mxu0 0
      %1268 = vmatpush1.bf16.msra.mxu0 %v1216
      %1269 = vmatprep.subr.bf16.mxu0 0
      %1270 = vmatpush1.bf16.msra.mxu0 %v1217
      %1271 = vmatprep.subr.bf16.mxu0 0
      %1272 = vmatpush1.bf16.msra.mxu0 %v1218
      %1273 = vmatprep.subr.bf16.mxu0 0
      %1274 = vmatpush1.bf16.msra.mxu0 %v1219
      %1275 = vmatprep.subr.bf16.mxu0 0
      %1276 = vmatpush1.bf16.msra.mxu0 %v1220
      %1277 = vmatprep.subr.bf16.mxu0 0
      %1278 = vmatpush1.bf16.msra.mxu0 %v1221
      %1279 = vmatprep.subr.bf16.mxu0 0
      %1280 = vmatpush1.bf16.msra.mxu0 %v1222
      %1281 = vmatprep.subr.bf16.mxu0 0
      %1282 = vmatpush1.bf16.msra.mxu0 %v1223
      %1283 = vmatprep.subr.bf16.mxu0 0
      %1284 = vmatpush1.bf16.msra.mxu0 %v1224
      %1285 = vmatprep.subr.bf16.mxu0 0
      %1286 = vmatpush1.bf16.msra.mxu0 %v1225
      %1287 = vmatprep.subr.bf16.mxu0 0
      %1288 = vmatpush1.bf16.msra.mxu0 %v1226
      %1289 = vmatprep.subr.bf16.mxu0 0
      %1290 = vmatpush1.bf16.msra.mxu0 %v1227
      %1291 = vmatprep.subr.bf16.mxu0 0
      %1292 = vmatpush1.bf16.msra.mxu0 %v1228
      %1293 = vmatprep.mubr.bf16.mxu0 %v1094
      %1294 = vmatmul.mubr.bf16.gmra.mrb[0].mxu0 %v1093
      %v1295 = vpop.f32.mrb[0].mxu0
      %v1296 = vadd.f32 0.0, %v1295
      %v1297 = vpop.f32.mrb[0].mxu0
      %v1298 = vpop.f32.mrb[0].mxu0
      %v1299 = vadd.f32 0.0, %v1298
      %v1300 = vpop.f32.mrb[0].mxu0
      %1301 = vmatprep.mubr.bf16.mxu0 %v1097
      %1302 = vmatmul.mubr.bf16.gmra.mrb[0].mxu0 %v1096
      %v1303 = vpop.f32.mrb[0].mxu0
      %v1304 = vadd.f32 0.0, %v1303
      %v1305 = vpop.f32.mrb[0].mxu0
      %v1306 = vpop.f32.mrb[0].mxu0
      %v1307 = vadd.f32 0.0, %v1306
      %v1308 = vpop.f32.mrb[0].mxu0
      %1309 = vmatprep.mubr.bf16.mxu0 %v1100
      %1310 = vmatmul.mubr.bf16.gmra.mrb[0].mxu0 %v1099
      %v1311 = vpop.f32.mrb[0].mxu0
      %v1312 = vadd.f32 0.0, %v1311
      %v1313 = vpop.f32.mrb[0].mxu0
      %v1314 = vpop.f32.mrb[0].mxu0
      %v1315 = vadd.f32 0.0, %v1314
      %v1316 = vpop.f32.mrb[0].mxu0
      %1317 = vmatprep.mubr.bf16.mxu0 %v1103
      %1318 = vmatmul.mubr.bf16.gmra.mrb[0].mxu0 %v1102
      %v1319 = vpop.f32.mrb[0].mxu0
      %v1320 = vadd.f32 0.0, %v1319
      %v1321 = vpop.f32.mrb[0].mxu0
      %v1322 = vpop.f32.mrb[0].mxu0
      %v1323 = vadd.f32 0.0, %v1322
      %v1324 = vpop.f32.mrb[0].mxu0
      %1325 = vdwg.mxu0
      %1326 = vmatprep.subr.bf16.mxu0 0
      %1327 = vmatpush1.bf16.msra.mxu0 %v1229
      %1328 = vmatprep.subr.bf16.mxu0 0
      %1329 = vmatpush1.bf16.msra.mxu0 %v1230
      %1330 = vmatprep.subr.bf16.mxu0 0
      %1331 = vmatpush1.bf16.msra.mxu0 %v1231
      %1332 = vmatprep.subr.bf16.mxu0 0
      %1333 = vmatpush1.bf16.msra.mxu0 %v1232
      %1334 = vmatprep.subr.bf16.mxu0 0
      %1335 = vmatpush1.bf16.msra.mxu0 %v1233
      %1336 = vmatprep.subr.bf16.mxu0 0
      %1337 = vmatpush1.bf16.msra.mxu0 %v1234
      %1338 = vmatprep.subr.bf16.mxu0 0
      %1339 = vmatpush1.bf16.msra.mxu0 %v1235
      %1340 = vmatprep.subr.bf16.mxu0 0
      %1341 = vmatpush1.bf16.msra.mxu0 %v1236
      %1342 = vmatprep.subr.bf16.mxu0 0
      %1343 = vmatpush1.bf16.msra.mxu0 0
      %1344 = vmatprep.subr.bf16.mxu0 0
      %1345 = vmatpush1.bf16.msra.mxu0 0
      %1346 = vmatprep.subr.bf16.mxu0 0
      %1347 = vmatpush1.bf16.msra.mxu0 0
      %1348 = vmatprep.subr.bf16.mxu0 0
      %1349 = vmatpush1.bf16.msra.mxu0 0
      %1350 = vmatprep.subr.bf16.mxu0 0
      %1351 = vmatpush1.bf16.msra.mxu0 0
      %1352 = vmatprep.subr.bf16.mxu0 0
      %1353 = vmatpush1.bf16.msra.mxu0 0
      %1354 = vmatprep.subr.bf16.mxu0 0
      %1355 = vmatpush1.bf16.msra.mxu0 0
      %1356 = vmatprep.subr.bf16.mxu0 0
      %1357 = vmatpush1.bf16.msra.mxu0 0
      %1358 = vmatprep.mubr.bf16.mxu0 0
      %1359 = vmatmul.mubr.bf16.gmra.mrb[0].mxu0 %v1095
      %v1360 = vpop.f32.mrb[0].mxu0
      %v1361 = vadd.f32 %v1296, %v1360
      %v1362 = vpop.f32.mrb[0].mxu0
      %v1363 = vpop.f32.mrb[0].mxu0
      %v1364 = vadd.f32 %v1299, %v1363
      %v1365 = vpop.f32.mrb[0].mxu0
      %1366 = vmatprep.mubr.bf16.mxu0 0
      %1367 = vmatmul.mubr.bf16.gmra.mrb[0].mxu0 %v1098
      %v1368 = vpop.f32.mrb[0].mxu0
      %v1369 = vadd.f32 %v1304, %v1368
      %v1370 = vpop.f32.mrb[0].mxu0
      %v1371 = vpop.f32.mrb[0].mxu0
      %v1372 = vadd.f32 %v1307, %v1371
      %v1373 = vpop.f32.mrb[0].mxu0
      %1374 = vmatprep.mubr.bf16.mxu0 0
      %1375 = vmatmul.mubr.bf16.gmra.mrb[0].mxu0 %v1101
      %v1376 = vpop.f32.mrb[0].mxu0
      %v1377 = vadd.f32 %v1312, %v1376
      %v1378 = vpop.f32.mrb[0].mxu0
      %v1379 = vpop.f32.mrb[0].mxu0
      %v1380 = vadd.f32 %v1315, %v1379
      %v1381 = vpop.f32.mrb[0].mxu0
      %1382 = vmatprep.mubr.bf16.mxu0 0
      %1383 = vmatmul.mubr.bf16.gmra.mrb[0].mxu0 %v1104
      %v1384 = vpop.f32.mrb[0].mxu0
      %v1385 = vadd.f32 %v1320, %v1384
      %v1386 = vpop.f32.mrb[0].mxu0
      %v1387 = vpop.f32.mrb[0].mxu0
      %v1388 = vadd.f32 %v1323, %v1387
      %v1389 = vpop.f32.mrb[0].mxu0
      %1390 = vdwg.mxu0
      %v1391 = vadd.f32 %v1036, %v1361
      %v1392 = vadd.f32 %v1037, %v1364
      %v1393 = vadd.f32 %v1038, %v1369
      %v1394 = vadd.f32 %v1039, %v1372
      %v1395 = vadd.f32 %v1040, %v1377
      %v1396 = vadd.f32 %v1041, %v1380
      %v1397 = vadd.f32 %v1042, %v1385
      %v1398 = vadd.f32 %v1043, %v1388
      %1399 = vst [vmem:[#allocation3] sm:$0xff] %v1391
      %1400 = vst [vmem:[#allocation3 + $0x8] sm:$0xff] %v1392
      %1401 = vst [vmem:[#allocation3 + $0x10] sm:$0xff] %v1393
      %1402 = vst [vmem:[#allocation3 + $0x18] sm:$0xff] %v1394
      %1403 = vst [vmem:[#allocation3 + $0x20] sm:$0xff] %v1395
      %1404 = vst [vmem:[#allocation3 + $0x28] sm:$0xff] %v1396
      %1405 = vst [vmem:[#allocation3 + $0x30] sm:$0xff] %v1397
      %1406 = vst [vmem:[#allocation3 + $0x38] sm:$0xff] %v1398
      %s1407 = scalar_lea.vmem [#allocation2], 32
      %v1408 = vld [vmem:[%s1407] sm:$0xff]
      %v1409 = vld [vmem:[%s1407 + $0x8] sm:$0x3]
      %v1410 = vld [vmem:[%s1407 + $0x10] sm:$0xff]
      %v1411 = vld [vmem:[%s1407 + $0x18] sm:$0x3]
      %v1412 = vld [vmem:[%s1407 + $0x20] sm:$0xff]
      %v1413 = vld [vmem:[%s1407 + $0x28] sm:$0x3]
      %v1414 = vld [vmem:[%s1407 + $0x30] sm:$0xff]
      %v1415 = vld [vmem:[%s1407 + $0x38] sm:$0x3]
      %v1416 = vld [vmem:[%s1407 + $0x40] sm:$0xff]
      %v1417 = vld [vmem:[%s1407 + $0x48] sm:$0x3]
      %v1418 = vld [vmem:[%s1407 + $0x50] sm:$0xff]
      %v1419 = vld [vmem:[%s1407 + $0x58] sm:$0x3]
      %v1420 = vld [vmem:[%s1407 + $0x60] sm:$0xff]
      %v1421 = vld [vmem:[%s1407 + $0x68] sm:$0x3]
      %v1422 = vld [vmem:[%s1407 + $0x70] sm:$0xff]
      %v1423 = vld [vmem:[%s1407 + $0x78] sm:$0x3]
      %v1440 = vrot.slane %v1408, 1
      %v1441 = vrot.slane %v1409, 1
      %v1442 = vsel %vm360, %v1440, %v1441
      %v1443 = vrot.slane %v1410, 1
      %v1444 = vrot.slane %v1411, 1
      %v1445 = vsel %vm360, %v1443, %v1444
      %v1446 = vrot.slane %v1412, 1
      %v1447 = vrot.slane %v1413, 1
      %v1448 = vsel %vm360, %v1446, %v1447
      %v1449 = vrot.slane %v1414, 1
      %v1450 = vrot.slane %v1415, 1
      %v1451 = vsel %vm360, %v1449, %v1450
      %v1452 = vrot.slane %v1416, 1
      %v1453 = vrot.slane %v1417, 1
      %v1454 = vsel %vm360, %v1452, %v1453
      %v1455 = vrot.slane %v1418, 1
      %v1456 = vrot.slane %v1419, 1
      %v1457 = vsel %vm360, %v1455, %v1456
      %v1458 = vrot.slane %v1420, 1
      %v1459 = vrot.slane %v1421, 1
      %v1460 = vsel %vm360, %v1458, %v1459
      %v1461 = vrot.slane %v1422, 1
      %v1462 = vrot.slane %v1423, 1
      %v1463 = vsel %vm360, %v1461, %v1462
      %v1472 = vrot.slane %v1408, 2
      %v1473 = vrot.slane %v1409, 2
      %v1474 = vsel %vm393, %v1472, %v1473
      %v1475 = vrot.slane %v1410, 2
      %v1476 = vrot.slane %v1411, 2
      %v1477 = vsel %vm393, %v1475, %v1476
      %v1478 = vrot.slane %v1412, 2
      %v1479 = vrot.slane %v1413, 2
      %v1480 = vsel %vm393, %v1478, %v1479
      %v1481 = vrot.slane %v1414, 2
      %v1482 = vrot.slane %v1415, 2
      %v1483 = vsel %vm393, %v1481, %v1482
      %v1484 = vrot.slane %v1416, 2
      %v1485 = vrot.slane %v1417, 2
      %v1486 = vsel %vm393, %v1484, %v1485
      %v1487 = vrot.slane %v1418, 2
      %v1488 = vrot.slane %v1419, 2
      %v1489 = vsel %vm393, %v1487, %v1488
      %v1490 = vrot.slane %v1420, 2
      %v1491 = vrot.slane %v1421, 2
      %v1492 = vsel %vm393, %v1490, %v1491
      %v1493 = vrot.slane %v1422, 2
      %v1494 = vrot.slane %v1423, 2
      %v1495 = vsel %vm393, %v1493, %v1494
      %v1504 = vpack.c.bf16 %v1408, %v1408
      %v1505 = vpack.c.bf16 %v1442, %v1442
      %v1506 = vpack.c.bf16 %v1474, %v1474
      %v1507 = vpack.c.bf16 %v1410, %v1410
      %v1508 = vpack.c.bf16 %v1445, %v1445
      %v1509 = vpack.c.bf16 %v1477, %v1477
      %v1510 = vpack.c.bf16 %v1412, %v1412
      %v1511 = vpack.c.bf16 %v1448, %v1448
      %v1512 = vpack.c.bf16 %v1480, %v1480
      %v1513 = vpack.c.bf16 %v1414, %v1414
      %v1514 = vpack.c.bf16 %v1451, %v1451
      %v1515 = vpack.c.bf16 %v1483, %v1483
      %v1516 = vpack.c.bf16 %v1416, %v1416
      %v1517 = vpack.c.bf16 %v1454, %v1454
      %v1518 = vpack.c.bf16 %v1486, %v1486
      %v1519 = vpack.c.bf16 %v1418, %v1418
      %v1520 = vpack.c.bf16 %v1457, %v1457
      %v1521 = vpack.c.bf16 %v1489, %v1489
      %v1522 = vpack.c.bf16 %v1420, %v1420
      %v1523 = vpack.c.bf16 %v1460, %v1460
      %v1524 = vpack.c.bf16 %v1492, %v1492
      %v1525 = vpack.c.bf16 %v1422, %v1422
      %v1526 = vpack.c.bf16 %v1463, %v1463
      %v1527 = vpack.c.bf16 %v1495, %v1495
      %v1552 = vunpack.c.l.b16 %v1504
      %v1553 = vunpack.c.l.b16 %v1505
      %v1554 = vunpack.c.l.b16 %v1506
      %v1555 = vunpack.c.l.b16 %v1507
      %v1556 = vunpack.c.l.b16 %v1508
      %v1557 = vunpack.c.l.b16 %v1509
      %v1558 = vunpack.c.l.b16 %v1510
      %v1559 = vunpack.c.l.b16 %v1511
      %v1560 = vunpack.c.l.b16 %v1512
      %v1561 = vunpack.c.l.b16 %v1513
      %v1562 = vunpack.c.l.b16 %v1514
      %v1563 = vunpack.c.l.b16 %v1515
      %v1564 = vunpack.c.l.b16 %v1516
      %v1565 = vunpack.c.l.b16 %v1517
      %v1566 = vunpack.c.l.b16 %v1518
      %v1567 = vunpack.c.l.b16 %v1519
      %v1568 = vunpack.c.l.b16 %v1520
      %v1569 = vunpack.c.l.b16 %v1521
      %v1570 = vunpack.c.l.b16 %v1522
      %v1571 = vunpack.c.l.b16 %v1523
      %v1572 = vunpack.c.l.b16 %v1524
      %v1573 = vunpack.c.l.b16 %v1525
      %v1574 = vunpack.c.l.b16 %v1526
      %v1575 = vunpack.c.l.b16 %v1527
      %v1576 = vld [vmem:[#allocation3] sm:$0xff]
      %v1577 = vld [vmem:[#allocation3 + $0x8] sm:$0xff]
      %v1578 = vld [vmem:[#allocation3 + $0x10] sm:$0xff]
      %v1579 = vld [vmem:[#allocation3 + $0x18] sm:$0xff]
      %v1580 = vld [vmem:[#allocation3 + $0x20] sm:$0xff]
      %v1581 = vld [vmem:[#allocation3 + $0x28] sm:$0xff]
      %v1582 = vld [vmem:[#allocation3 + $0x30] sm:$0xff]
      %v1583 = vld [vmem:[#allocation3 + $0x38] sm:$0xff]
      %s1584 = scalar_lea.vmem %s3, 384
      %v1585 = vld [vmem:[%s1584] sm:$0xf]
      %v1586 = vld [vmem:[%s1584 + $0x4] sm:$0xf]
      %v1587 = vld [vmem:[%s1584 + $0x8] sm:$0xf]
      %v1588 = vld [vmem:[%s1584 + $0xc] sm:$0xf]
      %v1589 = vld [vmem:[%s1584 + $0x10] sm:$0xf]
      %v1590 = vld [vmem:[%s1584 + $0x14] sm:$0xf]
      %v1591 = vld [vmem:[%s1584 + $0x18] sm:$0xf]
      %v1592 = vld [vmem:[%s1584 + $0x1c] sm:$0xf]
      %v1593 = vld [vmem:[%s1584 + $0x20] sm:$0xf]
      %v1594 = vld [vmem:[%s1584 + $0x24] sm:$0xf]
      %v1595 = vld [vmem:[%s1584 + $0x28] sm:$0xf]
      %v1596 = vld [vmem:[%s1584 + $0x2c] sm:$0xf]
      %v1597 = vld [vmem:[%s1584 + $0x30] sm:$0xf]
      %v1598 = vld [vmem:[%s1584 + $0x34] sm:$0xf]
      %v1599 = vld [vmem:[%s1584 + $0x38] sm:$0xf]
      %v1600 = vld [vmem:[%s1584 + $0x3c] sm:$0xf]
      %v1601 = vld [vmem:[%s1584 + $0x40] sm:$0xf]
      %v1602 = vld [vmem:[%s1584 + $0x44] sm:$0xf]
      %v1603 = vld [vmem:[%s1584 + $0x48] sm:$0xf]
      %v1604 = vld [vmem:[%s1584 + $0x4c] sm:$0xf]
      %v1605 = vld [vmem:[%s1584 + $0x50] sm:$0xf]
      %v1606 = vld [vmem:[%s1584 + $0x54] sm:$0xf]
      %v1607 = vld [vmem:[%s1584 + $0x58] sm:$0xf]
      %v1608 = vld [vmem:[%s1584 + $0x5c] sm:$0xf]
      %v1609 = vld [vmem:[%s1584 + $0x60] sm:$0xf]
      %v1610 = vld [vmem:[%s1584 + $0x64] sm:$0xf]
      %v1611 = vld [vmem:[%s1584 + $0x68] sm:$0xf]
      %v1612 = vld [vmem:[%s1584 + $0x6c] sm:$0xf]
      %v1613 = vld [vmem:[%s1584 + $0x70] sm:$0xf]
      %v1614 = vld [vmem:[%s1584 + $0x74] sm:$0xf]
      %v1615 = vld [vmem:[%s1584 + $0x78] sm:$0xf]
      %v1616 = vld [vmem:[%s1584 + $0x7c] sm:$0xf]
      %v1617 = vld [vmem:[%s1584 + $0x80] sm:$0xf]
      %v1618 = vld [vmem:[%s1584 + $0x84] sm:$0xf]
      %v1619 = vld [vmem:[%s1584 + $0x88] sm:$0xf]
      %v1620 = vld [vmem:[%s1584 + $0x8c] sm:$0xf]
      %v1621 = vld [vmem:[%s1584 + $0x90] sm:$0xf]
      %v1622 = vld [vmem:[%s1584 + $0x94] sm:$0xf]
      %v1623 = vld [vmem:[%s1584 + $0x98] sm:$0xf]
      %v1624 = vld [vmem:[%s1584 + $0x9c] sm:$0xf]
      %v1625 = vld [vmem:[%s1584 + $0xa0] sm:$0xf]
      %v1626 = vld [vmem:[%s1584 + $0xa4] sm:$0xf]
      %v1627 = vld [vmem:[%s1584 + $0xa8] sm:$0xf]
      %v1628 = vld [vmem:[%s1584 + $0xac] sm:$0xf]
      %v1629 = vld [vmem:[%s1584 + $0xb0] sm:$0xf]
      %v1630 = vld [vmem:[%s1584 + $0xb4] sm:$0xf]
      %v1631 = vld [vmem:[%s1584 + $0xb8] sm:$0xf]
      %v1632 = vld [vmem:[%s1584 + $0xbc] sm:$0xf]
      %v1633 = vpack.c.b16 %v1555, %v1552
      %v1634 = vpack.c.b16 %v1556, %v1553
      %v1635 = vpack.c.b16 %v1557, %v1554
      %v1636 = vpack.c.b16 %v1561, %v1558
      %v1637 = vpack.c.b16 %v1562, %v1559
      %v1638 = vpack.c.b16 %v1563, %v1560
      %v1639 = vpack.c.b16 %v1567, %v1564
      %v1640 = vpack.c.b16 %v1568, %v1565
      %v1641 = vpack.c.b16 %v1569, %v1566
      %v1642 = vpack.c.b16 %v1573, %v1570
      %v1643 = vpack.c.b16 %v1574, %v1571
      %v1644 = vpack.c.b16 %v1575, %v1572
      %v1705 = vunpack.c.l.b16 %v1585
      %v1706 = vunpack.c.l.b16 %v1586
      %v1707 = vunpack.c.l.b16 %v1587
      %v1708 = vunpack.c.l.b16 %v1588
      %v1709 = vunpack.c.l.b16 %v1589
      %v1710 = vunpack.c.l.b16 %v1590
      %v1711 = vunpack.c.l.b16 %v1591
      %v1712 = vunpack.c.l.b16 %v1592
      %v1713 = vunpack.c.l.b16 %v1593
      %v1714 = vunpack.c.l.b16 %v1594
      %v1715 = vunpack.c.l.b16 %v1595
      %v1716 = vunpack.c.l.b16 %v1596
      %v1717 = vunpack.c.l.b16 %v1597
      %v1718 = vunpack.c.l.b16 %v1598
      %v1719 = vunpack.c.l.b16 %v1599
      %v1720 = vunpack.c.l.b16 %v1600
      %v1721 = vunpack.c.l.b16 %v1601
      %v1722 = vunpack.c.l.b16 %v1602
      %v1723 = vunpack.c.l.b16 %v1603
      %v1724 = vunpack.c.l.b16 %v1604
      %v1725 = vunpack.c.l.b16 %v1605
      %v1726 = vunpack.c.l.b16 %v1606
      %v1727 = vunpack.c.l.b16 %v1607
      %v1728 = vunpack.c.l.b16 %v1608
      %v1729 = vunpack.c.l.b16 %v1609
      %v1730 = vunpack.c.l.b16 %v1610
      %v1731 = vunpack.c.l.b16 %v1611
      %v1732 = vunpack.c.l.b16 %v1612
      %v1733 = vunpack.c.l.b16 %v1613
      %v1734 = vunpack.c.l.b16 %v1614
      %v1735 = vunpack.c.l.b16 %v1615
      %v1736 = vunpack.c.l.b16 %v1616
      %v1737 = vunpack.c.l.b16 %v1617
      %v1738 = vunpack.c.l.b16 %v1618
      %v1739 = vunpack.c.l.b16 %v1619
      %v1740 = vunpack.c.l.b16 %v1620
      %v1741 = vunpack.c.l.b16 %v1621
      %v1742 = vunpack.c.l.b16 %v1622
      %v1743 = vunpack.c.l.b16 %v1623
      %v1744 = vunpack.c.l.b16 %v1624
      %v1745 = vunpack.c.l.b16 %v1625
      %v1746 = vunpack.c.l.b16 %v1626
      %v1747 = vunpack.c.l.b16 %v1627
      %v1748 = vunpack.c.l.b16 %v1628
      %v1749 = vunpack.c.l.b16 %v1629
      %v1750 = vunpack.c.l.b16 %v1630
      %v1751 = vunpack.c.l.b16 %v1631
      %v1752 = vunpack.c.l.b16 %v1632
      %v1753 = vpack.c.b16 %v1706, %v1705
      %v1754 = vpack.c.b16 %v1708, %v1707
      %v1755 = vpack.c.b16 %v1710, %v1709
      %v1756 = vpack.c.b16 %v1712, %v1711
      %v1757 = vpack.c.b16 %v1714, %v1713
      %v1758 = vpack.c.b16 %v1716, %v1715
      %v1759 = vpack.c.b16 %v1718, %v1717
      %v1760 = vpack.c.b16 %v1720, %v1719
      %v1761 = vpack.c.b16 %v1722, %v1721
      %v1762 = vpack.c.b16 %v1724, %v1723
      %v1763 = vpack.c.b16 %v1726, %v1725
      %v1764 = vpack.c.b16 %v1728, %v1727
      %v1765 = vpack.c.b16 %v1730, %v1729
      %v1766 = vpack.c.b16 %v1732, %v1731
      %v1767 = vpack.c.b16 %v1734, %v1733
      %v1768 = vpack.c.b16 %v1736, %v1735
      %v1769 = vpack.c.b16 %v1738, %v1737
      %v1770 = vpack.c.b16 %v1740, %v1739
      %v1771 = vpack.c.b16 %v1742, %v1741
      %v1772 = vpack.c.b16 %v1744, %v1743
      %v1773 = vpack.c.b16 %v1746, %v1745
      %v1774 = vpack.c.b16 %v1748, %v1747
      %v1775 = vpack.c.b16 %v1750, %v1749
      %v1776 = vpack.c.b16 %v1752, %v1751
      %1801 = vmatprep.subr.bf16.mxu0 0
      %1802 = vmatpush1.bf16.msra.mxu0 %v1753
      %1803 = vmatprep.subr.bf16.mxu0 0
      %1804 = vmatpush1.bf16.msra.mxu0 %v1754
      %1805 = vmatprep.subr.bf16.mxu0 0
      %1806 = vmatpush1.bf16.msra.mxu0 %v1755
      %1807 = vmatprep.subr.bf16.mxu0 0
      %1808 = vmatpush1.bf16.msra.mxu0 %v1756
      %1809 = vmatprep.subr.bf16.mxu0 0
      %1810 = vmatpush1.bf16.msra.mxu0 %v1757
      %1811 = vmatprep.subr.bf16.mxu0 0
      %1812 = vmatpush1.bf16.msra.mxu0 %v1758
      %1813 = vmatprep.subr.bf16.mxu0 0
      %1814 = vmatpush1.bf16.msra.mxu0 %v1759
      %1815 = vmatprep.subr.bf16.mxu0 0
      %1816 = vmatpush1.bf16.msra.mxu0 %v1760
      %1817 = vmatprep.subr.bf16.mxu0 0
      %1818 = vmatpush1.bf16.msra.mxu0 %v1761
      %1819 = vmatprep.subr.bf16.mxu0 0
      %1820 = vmatpush1.bf16.msra.mxu0 %v1762
      %1821 = vmatprep.subr.bf16.mxu0 0
      %1822 = vmatpush1.bf16.msra.mxu0 %v1763
      %1823 = vmatprep.subr.bf16.mxu0 0
      %1824 = vmatpush1.bf16.msra.mxu0 %v1764
      %1825 = vmatprep.subr.bf16.mxu0 0
      %1826 = vmatpush1.bf16.msra.mxu0 %v1765
      %1827 = vmatprep.subr.bf16.mxu0 0
      %1828 = vmatpush1.bf16.msra.mxu0 %v1766
      %1829 = vmatprep.subr.bf16.mxu0 0
      %1830 = vmatpush1.bf16.msra.mxu0 %v1767
      %1831 = vmatprep.subr.bf16.mxu0 0
      %1832 = vmatpush1.bf16.msra.mxu0 %v1768
      %1833 = vmatprep.mubr.bf16.mxu0 %v1634
      %1834 = vmatmul.mubr.bf16.gmra.mrb[0].mxu0 %v1633
      %v1835 = vpop.f32.mrb[0].mxu0
      %v1836 = vadd.f32 0.0, %v1835
      %v1837 = vpop.f32.mrb[0].mxu0
      %v1838 = vpop.f32.mrb[0].mxu0
      %v1839 = vadd.f32 0.0, %v1838
      %v1840 = vpop.f32.mrb[0].mxu0
      %1841 = vmatprep.mubr.bf16.mxu0 %v1637
      %1842 = vmatmul.mubr.bf16.gmra.mrb[0].mxu0 %v1636
      %v1843 = vpop.f32.mrb[0].mxu0
      %v1844 = vadd.f32 0.0, %v1843
      %v1845 = vpop.f32.mrb[0].mxu0
      %v1846 = vpop.f32.mrb[0].mxu0
      %v1847 = vadd.f32 0.0, %v1846
      %v1848 = vpop.f32.mrb[0].mxu0
      %1849 = vmatprep.mubr.bf16.mxu0 %v1640
      %1850 = vmatmul.mubr.bf16.gmra.mrb[0].mxu0 %v1639
      %v1851 = vpop.f32.mrb[0].mxu0
      %v1852 = vadd.f32 0.0, %v1851
      %v1853 = vpop.f32.mrb[0].mxu0
      %v1854 = vpop.f32.mrb[0].mxu0
      %v1855 = vadd.f32 0.0, %v1854
      %v1856 = vpop.f32.mrb[0].mxu0
      %1857 = vmatprep.mubr.bf16.mxu0 %v1643
      %1858 = vmatmul.mubr.bf16.gmra.mrb[0].mxu0 %v1642
      %v1859 = vpop.f32.mrb[0].mxu0
      %v1860 = vadd.f32 0.0, %v1859
      %v1861 = vpop.f32.mrb[0].mxu0
      %v1862 = vpop.f32.mrb[0].mxu0
      %v1863 = vadd.f32 0.0, %v1862
      %v1864 = vpop.f32.mrb[0].mxu0
      %1865 = vdwg.mxu0
      %1866 = vmatprep.subr.bf16.mxu0 0
      %1867 = vmatpush1.bf16.msra.mxu0 %v1769
      %1868 = vmatprep.subr.bf16.mxu0 0
      %1869 = vmatpush1.bf16.msra.mxu0 %v1770
      %1870 = vmatprep.subr.bf16.mxu0 0
      %1871 = vmatpush1.bf16.msra.mxu0 %v1771
      %1872 = vmatprep.subr.bf16.mxu0 0
      %1873 = vmatpush1.bf16.msra.mxu0 %v1772
      %1874 = vmatprep.subr.bf16.mxu0 0
      %1875 = vmatpush1.bf16.msra.mxu0 %v1773
      %1876 = vmatprep.subr.bf16.mxu0 0
      %1877 = vmatpush1.bf16.msra.mxu0 %v1774
      %1878 = vmatprep.subr.bf16.mxu0 0
      %1879 = vmatpush1.bf16.msra.mxu0 %v1775
      %1880 = vmatprep.subr.bf16.mxu0 0
      %1881 = vmatpush1.bf16.msra.mxu0 %v1776
      %1882 = vmatprep.subr.bf16.mxu0 0
      %1883 = vmatpush1.bf16.msra.mxu0 0
      %1884 = vmatprep.subr.bf16.mxu0 0
      %1885 = vmatpush1.bf16.msra.mxu0 0
      %1886 = vmatprep.subr.bf16.mxu0 0
      %1887 = vmatpush1.bf16.msra.mxu0 0
      %1888 = vmatprep.subr.bf16.mxu0 0
      %1889 = vmatpush1.bf16.msra.mxu0 0
      %1890 = vmatprep.subr.bf16.mxu0 0
      %1891 = vmatpush1.bf16.msra.mxu0 0
      %1892 = vmatprep.subr.bf16.mxu0 0
      %1893 = vmatpush1.bf16.msra.mxu0 0
      %1894 = vmatprep.subr.bf16.mxu0 0
      %1895 = vmatpush1.bf16.msra.mxu0 0
      %1896 = vmatprep.subr.bf16.mxu0 0
      %1897 = vmatpush1.bf16.msra.mxu0 0
      %1898 = vmatprep.mubr.bf16.mxu0 0
      %1899 = vmatmul.mubr.bf16.gmra.mrb[0].mxu0 %v1635
      %v1900 = vpop.f32.mrb[0].mxu0
      %v1901 = vadd.f32 %v1836, %v1900
      %v1902 = vpop.f32.mrb[0].mxu0
      %v1903 = vpop.f32.mrb[0].mxu0
      %v1904 = vadd.f32 %v1839, %v1903
      %v1905 = vpop.f32.mrb[0].mxu0
      %1906 = vmatprep.mubr.bf16.mxu0 0
      %1907 = vmatmul.mubr.bf16.gmra.mrb[0].mxu0 %v1638
      %v1908 = vpop.f32.mrb[0].mxu0
      %v1909 = vadd.f32 %v1844, %v1908
      %v1910 = vpop.f32.mrb[0].mxu0
      %v1911 = vpop.f32.mrb[0].mxu0
      %v1912 = vadd.f32 %v1847, %v1911
      %v1913 = vpop.f32.mrb[0].mxu0
      %1914 = vmatprep.mubr.bf16.mxu0 0
      %1915 = vmatmul.mubr.bf16.gmra.mrb[0].mxu0 %v1641
      %v1916 = vpop.f32.mrb[0].mxu0
      %v1917 = vadd.f32 %v1852, %v1916
      %v1918 = vpop.f32.mrb[0].mxu0
      %v1919 = vpop.f32.mrb[0].mxu0
      %v1920 = vadd.f32 %v1855, %v1919
      %v1921 = vpop.f32.mrb[0].mxu0
      %1922 = vmatprep.mubr.bf16.mxu0 0
      %1923 = vmatmul.mubr.bf16.gmra.mrb[0].mxu0 %v1644
      %v1924 = vpop.f32.mrb[0].mxu0
      %v1925 = vadd.f32 %v1860, %v1924
      %v1926 = vpop.f32.mrb[0].mxu0
      %v1927 = vpop.f32.mrb[0].mxu0
      %v1928 = vadd.f32 %v1863, %v1927
      %v1929 = vpop.f32.mrb[0].mxu0
      %1930 = vdwg.mxu0
      %v1931 = vadd.f32 %v1576, %v1901
      %v1932 = vadd.f32 %v1577, %v1904
      %v1933 = vadd.f32 %v1578, %v1909
      %v1934 = vadd.f32 %v1579, %v1912
      %v1935 = vadd.f32 %v1580, %v1917
      %v1936 = vadd.f32 %v1581, %v1920
      %v1937 = vadd.f32 %v1582, %v1925
      %v1938 = vadd.f32 %v1583, %v1928
      %1939 = vst [vmem:[#allocation3] sm:$0xff] %v1931
      %1940 = vst [vmem:[#allocation3 + $0x8] sm:$0xff] %v1932
      %1941 = vst [vmem:[#allocation3 + $0x10] sm:$0xff] %v1933
      %1942 = vst [vmem:[#allocation3 + $0x18] sm:$0xff] %v1934
      %1943 = vst [vmem:[#allocation3 + $0x20] sm:$0xff] %v1935
      %1944 = vst [vmem:[#allocation3 + $0x28] sm:$0xff] %v1936
      %1945 = vst [vmem:[#allocation3 + $0x30] sm:$0xff] %v1937
      %1946 = vst [vmem:[#allocation3 + $0x38] sm:$0xff] %v1938
      %v1947 = vld [vmem:[#allocation3] sm:$0xff]
      %v1948 = vld [vmem:[#allocation3 + $0x8] sm:$0xff]
      %v1949 = vld [vmem:[#allocation3 + $0x10] sm:$0xff]
      %v1950 = vld [vmem:[#allocation3 + $0x18] sm:$0xff]
      %v1951 = vld [vmem:[#allocation3 + $0x20] sm:$0xff]
      %v1952 = vld [vmem:[#allocation3 + $0x28] sm:$0xff]
      %v1953 = vld [vmem:[#allocation3 + $0x30] sm:$0xff]
      %v1954 = vld [vmem:[#allocation3 + $0x38] sm:$0xff]
      %v1955 = vpack.c.bf16 %v1948, %v1947
      %v1956 = vpack.c.bf16 %v1950, %v1949
      %v1957 = vpack.c.bf16 %v1952, %v1951
      %v1958 = vpack.c.bf16 %v1954, %v1953
      %v1963 = vunpack.c.l.b16 %v1955
      %v1964 = vunpack.c.h.b16 %v1955
      %v1965 = vunpack.c.l.b16 %v1956
      %v1966 = vunpack.c.h.b16 %v1956
      %v1967 = vunpack.c.l.b16 %v1957
      %v1968 = vunpack.c.h.b16 %v1957
      %v1969 = vunpack.c.l.b16 %v1958
      %v1970 = vunpack.c.h.b16 %v1958
      %v1971 = vpack.c.b16 %v1963, %v1963
      %v1972 = vpack.c.b16 %v1964, %v1964
      %v1973 = vpack.c.b16 %v1965, %v1965
      %v1974 = vpack.c.b16 %v1966, %v1966
      %v1975 = vpack.c.b16 %v1967, %v1967
      %v1976 = vpack.c.b16 %v1968, %v1968
      %v1977 = vpack.c.b16 %v1969, %v1969
      %v1978 = vpack.c.b16 %v1970, %v1970
      %1987 = vst [vmem:[%s231] sm:$0xf] %v1971
      %1988 = vst [vmem:[%s231 + $0x4] sm:$0xf] %v1972
      %1989 = vst [vmem:[%s231 + $0x8] sm:$0xf] %v1973
      %1990 = vst [vmem:[%s231 + $0xc] sm:$0xf] %v1974
      %1991 = vst [vmem:[%s231 + $0x10] sm:$0xf] %v1975
      %1992 = vst [vmem:[%s231 + $0x14] sm:$0xf] %v1976
      %1993 = vst [vmem:[%s231 + $0x18] sm:$0xf] %v1977
      %1994 = vst [vmem:[%s231 + $0x1c] sm:$0xf] %v1978
      %v1995 = vadd.f32 %v1947, %v1948
      %v1996 = vadd.f32 %v1995, %v1949
      %v1997 = vadd.f32 %v1996, %v1950
      %v1998 = vadd.f32 %v1997, %v1951
      %v1999 = vadd.f32 %v1998, %v1952
      %v2000 = vadd.f32 %v1999, %v1953
      %v2001 = vadd.f32 %v2000, %v1954
      %v2002 = vrot.slane %v2001, 4
      %v2003 = vadd.f32 %v2001, %v2002
      %v2004 = vrot.slane %v2003, 2
      %v2005 = vadd.f32 %v2003, %v2004
      %v2006 = vrot.slane %v2005, 1
      %v2007 = vadd.f32 %v2005, %v2006
      %2008 = vst [vmem:[%s235] sm:$0x1] %v2007
      %v2009 = vmul.f32 %v1947, %v1947
      %v2010 = vmul.f32 %v1948, %v1948
      %v2011 = vmul.f32 %v1949, %v1949
      %v2012 = vmul.f32 %v1950, %v1950
      %v2013 = vmul.f32 %v1951, %v1951
      %v2014 = vmul.f32 %v1952, %v1952
      %v2015 = vmul.f32 %v1953, %v1953
      %v2016 = vmul.f32 %v1954, %v1954
      %v2017 = vadd.f32 %v2009, %v2010
      %v2018 = vadd.f32 %v2017, %v2011
      %v2019 = vadd.f32 %v2018, %v2012
      %v2020 = vadd.f32 %v2019, %v2013
      %v2021 = vadd.f32 %v2020, %v2014
      %v2022 = vadd.f32 %v2021, %v2015
      %v2023 = vadd.f32 %v2022, %v2016
      %v2024 = vrot.slane %v2023, 4
      %v2025 = vadd.f32 %v2023, %v2024
      %v2026 = vrot.slane %v2025, 2
      %v2027 = vadd.f32 %v2025, %v2026
      %v2028 = vrot.slane %v2027, 1
      %v2029 = vadd.f32 %v2027, %v2028
      %2030 = vst [vmem:[%s235 + $0x1] sm:$0x1] %v2029
      %p2031 = scmp.lt.s32.totalorder %s17, 1
      %s2032 = scalar_select %p2031, %s17, 1
      %s2033 = smul.addr %s2032, 8
      %s2034 = smul.addr %s2033, 4
      %s2035 = scalar_lea.vmem %s4, %s2034
      %p2036 = scmp.lt.s32.totalorder %s17, 1
      %s2037 = scalar_select %p2036, %s17, 1
      %s2038 = smul.addr %s2037, 2
      %s2039 = scalar_lea.vmem %s5, %s2038
      // Predicated region
      $region37: #{bottleneck_se_forward.5} parent=35 // pred_check
        %p2040 = pneg %p124
      $region38: #{bottleneck_se_forward.5} parent=35 // pred_check_branch
        %2042 = sbr.rel (%p2040) target = $region40
      $region39: #{bottleneck_se_forward.5} parent=35 // pred_region
        _
      $region40: #{bottleneck_se_forward.5} parent=35 // pred_fallthru
        _
      // Predicated region
      $region41: #{bottleneck_se_forward.5} parent=35 // pred_check
        %p2043 = pneg %p150
      $region42: #{bottleneck_se_forward.5} parent=35 // pred_check_branch
        %2045 = sbr.rel (%p2043) target = $region44
      $region43: #{bottleneck_se_forward.5} parent=35 // pred_region
        _
      $region44: #{bottleneck_se_forward.5} parent=35 // pred_fallthru
        _
    $region36: #{bottleneck_se_forward.5} parent=5 // pred_fallthru
      _
    %p2046 = scmp.le.s32.totalorder 2, %s12
    // Predicated region
    $region45: #{bottleneck_se_forward.5} parent=5 // pred_check
      %p2047 = pneg %p2046
    $region46: #{bottleneck_se_forward.5} parent=5 // pred_check_branch
      %2049 = sbr.rel (%p2047) target = $region48
    $region47: #{bottleneck_se_forward.5} parent=5 // pred_region
      %s2050 = ssub.s32 %s12, 2
      // Predicated region
      $region49: #{bottleneck_se_forward.5} parent=47 // pred_check
        %p2051 = pneg %p130
      $region50: #{bottleneck_se_forward.5} parent=47 // pred_check_branch
        %2053 = sbr.rel (%p2051) target = $region52
      $region51: #{bottleneck_se_forward.5} parent=47 // pred_region
        %p2054 = scmp.lt.s32.totalorder %s18, 1
        %s2055 = scalar_select %p2054, %s18, 1
        %s2056 = smul.addr %s2055, 8
        %s2057 = smul.addr %s2056, 4
        %s2058 = scalar_lea.vmem %s4, %s2057
      $region52: #{bottleneck_se_forward.5} parent=47 // pred_fallthru
        _
      // Predicated region
      $region53: #{bottleneck_se_forward.5} parent=47 // pred_check
        %p2059 = pneg %p156
      $region54: #{bottleneck_se_forward.5} parent=47 // pred_check_branch
        %2061 = sbr.rel (%p2059) target = $region56
      $region55: #{bottleneck_se_forward.5} parent=47 // pred_region
        %p2062 = scmp.lt.s32.totalorder %s18, 1
        %s2063 = scalar_select %p2062, %s18, 1
        %s2064 = smul.addr %s2063, 2
        %s2065 = scalar_lea.vmem %s5, %s2064
      $region56: #{bottleneck_se_forward.5} parent=47 // pred_fallthru
        _
    $region48: #{bottleneck_se_forward.5} parent=5 // pred_fallthru
      _
  $region6: #{bottleneck_se_forward.5} parent=0 // loop_footer
    %s16 = sadd.s32 1, %s12
  $region7: #{bottleneck_se_forward.5} parent=0 // loop_footer_branch
    %11 = sbr.rel target = $region3
  $region8: #{bottleneck_se_forward.5} parent=0 // loop_exit
    _

</llo_original>
